<compile_context>
chip_gen: v7x
topology: tpu7x:2x2x1
jax: 0.10.0
libtpu: 0.0.40
codegen_flags: <defaults>
</compile_context>

<pallas_src>
import jax
import jax.numpy as jnp
from jax import lax
from jax.experimental import pallas as pl
from jax.experimental.pallas import tpu as pltpu


# --------------------------------------------------------------------------
# Pallas kernel: fused (concat + 4x[Linear+ReLU] + Linear) forward,
# batch on the lane axis.
# --------------------------------------------------------------------------
def _make_mlp_kernel(n_features: int, n_layers: int):
    """Kernel args: n_features feature refs (1, tile_n), then 2*n_layers
    param refs (W_i, b_i) with W_i (out, in) and b_i (out, 1), then o_ref."""

    def kernel(*args):
        feat_refs = args[:n_features]
        param_refs = args[n_features:-1]
        o_ref = args[-1]

        # ---- layer 0: fused "concat + Linear + ReLU" -----------------------
        # Instead of materializing the (F, tile_n) concat, accumulate the
        # per-feature rank-1 contributions on the VPU (F is tiny, e.g. 3).
        w0 = param_refs[0][...].astype(jnp.float32)               # (H, F)
        b0 = param_refs[1][...].astype(jnp.float32)               # (H, 1)
        z = w0[:, 0:1] * feat_refs[0][...].astype(jnp.float32)    # (H, T)
        for i in range(1, n_features):
            z = z + w0[:, i:i + 1] * feat_refs[i][...].astype(jnp.float32)
        h = jnp.maximum(z + b0, 0.0)                               # (H, T)

        # ---- hidden layers: ReLU(W @ h + b) on the MXU, lane-dense ---------
        for layer in range(1, n_layers - 1):
            w = param_refs[2 * layer][...].astype(jnp.float32)         # (H, H)
            b = param_refs[2 * layer + 1][...].astype(jnp.float32)     # (H, 1)
            h = jnp.maximum(
                jnp.dot(w, h,
                        preferred_element_type=jnp.float32,
                        precision=lax.Precision.HIGHEST) + b, 0.0)

        # ---- output layer: Linear -> Identity, lane-dense (OUT, tile_n) ----
        w_out = param_refs[2 * (n_layers - 1)][...].astype(jnp.float32)      # (OUT, H)
        b_out = param_refs[2 * (n_layers - 1) + 1][...].astype(jnp.float32)  # (OUT, 1)
        out = jnp.dot(w_out, h,
                      preferred_element_type=jnp.float32,
                      precision=lax.Precision.HIGHEST) + b_out
        o_ref[...] = out.astype(o_ref.dtype)

    return kernel


# --------------------------------------------------------------------------
# Wrapper: ModuleOutput.get(time_step) with the concat fused into the kernel.
# --------------------------------------------------------------------------
def module_output_forward(features, params, *, tile_n=None, max_tile=8192,
                          vmem_limit_bytes=32 * 1024 * 1024):
    """Run the wrapped MLP on a list of per-feature (N, 1) arrays -> (N, OUT).

    `params` is a list of (W, b) with W of shape (out, in) and b of shape
    (out, 1) (i.e. already transposed relative to torch.nn.Linear storage).
    """
    n_features = len(features)
    n_layers = len(params)
    assert n_layers >= 2, "expects at least one hidden layer + output layer"
    N = features[0].shape[0]
    dtype = features[0].dtype
    out_features = params[-1][0].shape[0]

    LANE = 128
    if tile_n is None:
        # Large tiles amortize the ~0.35us per-grid-step overhead; keep >= 2
        # grid steps when the batch allows it so both v7x TensorCores get work.
        tile_n = max(LANE, min(max_tile, pl.next_power_of_2(max(N, 1)) // 2))
    assert tile_n % LANE == 0, "tile_n must be a multiple of 128 (lane width)"
    n_steps = pl.cdiv(N, tile_n)
    n_pad = n_steps * tile_n

    # Present each (N, 1) feature as a lane-major (1, N) row (same row-major
    # linearization -> free), pad the ragged tail if any.
    rows = []
    for f in features:
        assert f.shape == (N, 1)
        r = f.reshape(1, N)
        if n_pad != N:
            r = jnp.pad(r, ((0, 0), (0, n_pad - N)))
        rows.append(r)

    flat_params = []
    for w, b in params:
        flat_params.append(w)
        flat_params.append(b.reshape(b.shape[0], 1))

    feat_spec = pl.BlockSpec((1, tile_n), lambda j: (0, j))
    resident = pl.BlockSpec(memory_space=pltpu.MemorySpace.VMEM)

    out_full = pl.pallas_call(
        _make_mlp_kernel(n_features, n_layers),
        out_shape=jax.ShapeDtypeStruct((out_features, n_pad), dtype),
        grid_spec=pltpu.PrefetchScalarGridSpec(
            num_scalar_prefetch=0,
            grid=(n_steps,),
            in_specs=[feat_spec] * n_features + [resident] * (2 * n_layers),
            out_specs=pl.BlockSpec((out_features, tile_n), lambda j: (0, j)),
        ),
        compiler_params=pltpu.CompilerParams(
            dimension_semantics=("parallel",),
            vmem_limit_bytes=vmem_limit_bytes,
        ),
    )(*rows, *flat_params)

    # (OUT, N_pad) -> (N, OUT); for OUT == 1 this is a free relayout.
    return out_full[:, :N].T


# --------------------------------------------------------------------------
# Deterministic parameters for the wrapped MLP and a pure-JAX reference
# implementing the literal PyTorch semantics (concat -> Linear/ReLU stack).
# --------------------------------------------------------------------------
def init_mlp_params(key, in_features, hidden=32, n_hidden_layers=4,
                    out_features=1, dtype=jnp.float32):
    """Weights stored (out, in), biases (out, 1) — the batch-on-lane layout."""
    sizes = [in_features] + [hidden] * n_hidden_layers + [out_features]
    params = []
    for fan_in, fan_out in zip(sizes[:-1], sizes[1:]):
        key, kw, kb = jax.random.split(key, 3)
        bound = 1.0 / (fan_in ** 0.5)
        w = jax.random.uniform(kw, (fan_out, fan_in), dtype, -bound, bound)
        b = jax.random.uniform(kb, (fan_out, 1), dtype, -bound, bound)
        params.append((w, b))
    return params


def reference_forward(features, params):
    # FeatureList.get: concat along dim=-1; then torch Linear: x @ W.T + b.
    h = jnp.concatenate(features, axis=-1)            # (N, F)
    for i, (w, b) in enumerate(params):
        h = jnp.dot(h, w.T, precision=lax.Precision.HIGHEST) + b.reshape(1, -1)
        if i < len(params) - 1:
            h = jnp.maximum(h, 0.0)
    return h                                          # (N, OUT)


# TODO(synk): Feature bookkeeping (of(), is_state_dependent(), repr plumbing)
# is pure Python/object wiring with no compute; only get()/forward() is kernelized.

if __name__ == "__main__":
    key = jax.random.PRNGKey(0)

    N = 1024          # Monte-Carlo paths -> 2 lane-dense grid steps of 512
    n_features = 3    # e.g. ["log_moneyness", "time_to_maturity", "volatility"]

    # Synthetic per-feature (N, 1) tensors, as Feature.get(time_step) returns.
    k_feat, k_params = jax.random.split(key)
    feat_keys = jax.random.split(k_feat, n_features)
    features = [jax.random.normal(k, (N, 1), dtype=jnp.float32)
                for k in feat_keys]

    # Deterministic MLP parameters (the wrapped module of ModuleOutput):
    # pfhedge default MultiLayerPerceptron: 4 hidden layers of 32, out=1.
    params = init_mlp_params(k_params, in_features=n_features)

    # ModuleOutput.get(time_step) == module(inputs.get(time_step)),
    # with FeatureList.get (the concat) fused into the kernel.
    out = module_output_forward(features, params)
    out = jax.block_until_ready(out)

    ref = reference_forward(features, params)
    assert out.shape == (N, 1)
    max_err = float(jnp.max(jnp.abs(out - ref)))
    assert jnp.allclose(out, ref, atol=1e-4, rtol=1e-4), max_err

    print("KERNEL_OK")
</pallas_src>

<mosaic_0001>
module attributes {stable_mosaic.version = 11 : i64} {
  func.func @kernel(%arg0: i32, %arg1: memref<1x512xf32, #tpu.memory_space<vmem>>, %arg2: memref<1x512xf32, #tpu.memory_space<vmem>>, %arg3: memref<1x512xf32, #tpu.memory_space<vmem>>, %arg4: memref<32x3xf32, #tpu.memory_space<vmem>>, %arg5: memref<32x1xf32, #tpu.memory_space<vmem>>, %arg6: memref<32x32xf32, #tpu.memory_space<vmem>>, %arg7: memref<32x1xf32, #tpu.memory_space<vmem>>, %arg8: memref<32x32xf32, #tpu.memory_space<vmem>>, %arg9: memref<32x1xf32, #tpu.memory_space<vmem>>, %arg10: memref<32x32xf32, #tpu.memory_space<vmem>>, %arg11: memref<32x1xf32, #tpu.memory_space<vmem>>, %arg12: memref<1x32xf32, #tpu.memory_space<vmem>>, %arg13: memref<1x1xf32, #tpu.memory_space<vmem>>, %arg14: memref<1x512xf32, #tpu.memory_space<vmem>>) attributes {dimension_semantics = [#tpu.dimension_semantics<parallel>], iteration_bounds = array<i64: 2>, scalar_prefetch = 0 : i64, scratch_operands = 0 : i64, tpu.core_type = #tpu.core_type<tc>, window_params = [{transform_indices = @transform_0, window_bounds = array<i64: 1, 512>}, {transform_indices = @transform_1, window_bounds = array<i64: 1, 512>}, {transform_indices = @transform_2, window_bounds = array<i64: 1, 512>}, {pipeline_mode = #tpu.pipeline_mode<synchronous>, transform_indices = @transform_3, window_bounds = array<i64: 32, 3>}, {pipeline_mode = #tpu.pipeline_mode<synchronous>, transform_indices = @transform_4, window_bounds = array<i64: 32, 1>}, {pipeline_mode = #tpu.pipeline_mode<synchronous>, transform_indices = @transform_5, window_bounds = array<i64: 32, 32>}, {pipeline_mode = #tpu.pipeline_mode<synchronous>, transform_indices = @transform_6, window_bounds = array<i64: 32, 1>}, {pipeline_mode = #tpu.pipeline_mode<synchronous>, transform_indices = @transform_7, window_bounds = array<i64: 32, 32>}, {pipeline_mode = #tpu.pipeline_mode<synchronous>, transform_indices = @transform_8, window_bounds = array<i64: 32, 1>}, {pipeline_mode = #tpu.pipeline_mode<synchronous>, transform_indices = @transform_9, window_bounds = array<i64: 32, 32>}, {pipeline_mode = #tpu.pipeline_mode<synchronous>, transform_indices = @transform_10, window_bounds = array<i64: 32, 1>}, {pipeline_mode = #tpu.pipeline_mode<synchronous>, transform_indices = @transform_11, window_bounds = array<i64: 1, 32>}, {pipeline_mode = #tpu.pipeline_mode<synchronous>, transform_indices = @transform_12, window_bounds = array<i64: 1, 1>}, {transform_indices = @transform_13, window_bounds = array<i64: 1, 512>}]} {
    %c0 = arith.constant 0 : index
    %c0_0 = arith.constant 0 : index
    %0 = vector.load %arg4[%c0, %c0_0] : memref<32x3xf32, #tpu.memory_space<vmem>>, vector<32x3xf32>
    %c0_1 = arith.constant 0 : index
    %c0_2 = arith.constant 0 : index
    %1 = vector.load %arg5[%c0_1, %c0_2] : memref<32x1xf32, #tpu.memory_space<vmem>>, vector<32x1xf32>
    %2 = vector.extract_strided_slice %0 {offsets = [0, 0], sizes = [32, 1], strides = [1, 1]} : vector<32x3xf32> to vector<32x1xf32>
    %c0_3 = arith.constant 0 : index
    %c0_4 = arith.constant 0 : index
    %3 = vector.load %arg1[%c0_3, %c0_4] : memref<1x512xf32, #tpu.memory_space<vmem>>, vector<1x512xf32>
    %4 = vector.broadcast %2 : vector<32x1xf32> to vector<32x512xf32>
    %5 = vector.broadcast %3 : vector<1x512xf32> to vector<32x512xf32>
    %6 = arith.mulf %4, %5 : vector<32x512xf32>
    %7 = vector.extract_strided_slice %0 {offsets = [0, 1], sizes = [32, 1], strides = [1, 1]} : vector<32x3xf32> to vector<32x1xf32>
    %c0_5 = arith.constant 0 : index
    %c0_6 = arith.constant 0 : index
    %8 = vector.load %arg2[%c0_5, %c0_6] : memref<1x512xf32, #tpu.memory_space<vmem>>, vector<1x512xf32>
    %9 = vector.broadcast %7 : vector<32x1xf32> to vector<32x512xf32>
    %10 = vector.broadcast %8 : vector<1x512xf32> to vector<32x512xf32>
    %11 = arith.mulf %9, %10 : vector<32x512xf32>
    %12 = arith.addf %6, %11 : vector<32x512xf32>
    %13 = vector.extract_strided_slice %0 {offsets = [0, 2], sizes = [32, 1], strides = [1, 1]} : vector<32x3xf32> to vector<32x1xf32>
    %c0_7 = arith.constant 0 : index
    %c0_8 = arith.constant 0 : index
    %14 = vector.load %arg3[%c0_7, %c0_8] : memref<1x512xf32, #tpu.memory_space<vmem>>, vector<1x512xf32>
    %15 = vector.broadcast %13 : vector<32x1xf32> to vector<32x512xf32>
    %16 = vector.broadcast %14 : vector<1x512xf32> to vector<32x512xf32>
    %17 = arith.mulf %15, %16 : vector<32x512xf32>
    %18 = arith.addf %12, %17 : vector<32x512xf32>
    %19 = vector.broadcast %1 : vector<32x1xf32> to vector<32x512xf32>
    %20 = arith.addf %18, %19 : vector<32x512xf32>
    %cst = arith.constant 0.000000e+00 : f32
    %21 = vector.broadcast %cst : f32 to vector<32x512xf32>
    %22 = arith.maximumf %20, %21 : vector<32x512xf32>
    %c0_9 = arith.constant 0 : index
    %c0_10 = arith.constant 0 : index
    %23 = vector.load %arg6[%c0_9, %c0_10] : memref<32x32xf32, #tpu.memory_space<vmem>>, vector<32x32xf32>
    %c0_11 = arith.constant 0 : index
    %c0_12 = arith.constant 0 : index
    %24 = vector.load %arg7[%c0_11, %c0_12] : memref<32x1xf32, #tpu.memory_space<vmem>>, vector<32x1xf32>
    %cst_13 = arith.constant dense<0.000000e+00> : vector<32x512xf32>
    %25 = tpu.matmul %23, %22, %cst_13 {dimension_numbers = #tpu.dot_dimension_numbers<[1], [0], [0], [1], [0, 0, 1, 1], [], []>, precision = #tpu.contract_precision<fp32>} : vector<32x32xf32>, vector<32x512xf32>, vector<32x512xf32> -> vector<32x512xf32>
    %26 = vector.broadcast %24 : vector<32x1xf32> to vector<32x512xf32>
    %27 = arith.addf %25, %26 : vector<32x512xf32>
    %cst_14 = arith.constant 0.000000e+00 : f32
    %28 = vector.broadcast %cst_14 : f32 to vector<32x512xf32>
    %29 = arith.maximumf %27, %28 : vector<32x512xf32>
    %c0_15 = arith.constant 0 : index
    %c0_16 = arith.constant 0 : index
    %30 = vector.load %arg8[%c0_15, %c0_16] : memref<32x32xf32, #tpu.memory_space<vmem>>, vector<32x32xf32>
    %c0_17 = arith.constant 0 : index
    %c0_18 = arith.constant 0 : index
    %31 = vector.load %arg9[%c0_17, %c0_18] : memref<32x1xf32, #tpu.memory_space<vmem>>, vector<32x1xf32>
    %cst_19 = arith.constant dense<0.000000e+00> : vector<32x512xf32>
    %32 = tpu.matmul %30, %29, %cst_19 {dimension_numbers = #tpu.dot_dimension_numbers<[1], [0], [0], [1], [0, 0, 1, 1], [], []>, precision = #tpu.contract_precision<fp32>} : vector<32x32xf32>, vector<32x512xf32>, vector<32x512xf32> -> vector<32x512xf32>
    %33 = vector.broadcast %31 : vector<32x1xf32> to vector<32x512xf32>
    %34 = arith.addf %32, %33 : vector<32x512xf32>
    %cst_20 = arith.constant 0.000000e+00 : f32
    %35 = vector.broadcast %cst_20 : f32 to vector<32x512xf32>
    %36 = arith.maximumf %34, %35 : vector<32x512xf32>
    %c0_21 = arith.constant 0 : index
    %c0_22 = arith.constant 0 : index
    %37 = vector.load %arg10[%c0_21, %c0_22] : memref<32x32xf32, #tpu.memory_space<vmem>>, vector<32x32xf32>
    %c0_23 = arith.constant 0 : index
    %c0_24 = arith.constant 0 : index
    %38 = vector.load %arg11[%c0_23, %c0_24] : memref<32x1xf32, #tpu.memory_space<vmem>>, vector<32x1xf32>
    %cst_25 = arith.constant dense<0.000000e+00> : vector<32x512xf32>
    %39 = tpu.matmul %37, %36, %cst_25 {dimension_numbers = #tpu.dot_dimension_numbers<[1], [0], [0], [1], [0, 0, 1, 1], [], []>, precision = #tpu.contract_precision<fp32>} : vector<32x32xf32>, vector<32x512xf32>, vector<32x512xf32> -> vector<32x512xf32>
    %40 = vector.broadcast %38 : vector<32x1xf32> to vector<32x512xf32>
    %41 = arith.addf %39, %40 : vector<32x512xf32>
    %cst_26 = arith.constant 0.000000e+00 : f32
    %42 = vector.broadcast %cst_26 : f32 to vector<32x512xf32>
    %43 = arith.maximumf %41, %42 : vector<32x512xf32>
    %c0_27 = arith.constant 0 : index
    %c0_28 = arith.constant 0 : index
    %44 = vector.load %arg12[%c0_27, %c0_28] : memref<1x32xf32, #tpu.memory_space<vmem>>, vector<1x32xf32>
    %c0_29 = arith.constant 0 : index
    %c0_30 = arith.constant 0 : index
    %45 = vector.load %arg13[%c0_29, %c0_30] : memref<1x1xf32, #tpu.memory_space<vmem>>, vector<1x1xf32>
    %cst_31 = arith.constant dense<0.000000e+00> : vector<1x512xf32>
    %46 = tpu.matmul %44, %43, %cst_31 {dimension_numbers = #tpu.dot_dimension_numbers<[1], [0], [0], [1], [0, 0, 1, 1], [], []>, precision = #tpu.contract_precision<fp32>} : vector<1x32xf32>, vector<32x512xf32>, vector<1x512xf32> -> vector<1x512xf32>
    %47 = vector.broadcast %45 : vector<1x1xf32> to vector<1x512xf32>
    %48 = arith.addf %46, %47 : vector<1x512xf32>
    %c0_32 = arith.constant 0 : index
    %c0_33 = arith.constant 0 : index
    %49 = vector.load %arg14[%c0_32, %c0_33] : memref<1x512xf32, #tpu.memory_space<vmem>>, vector<1x512xf32>
    tpu.vector_store %arg14[%c0_32, %c0_33], %48 {strides = array<i32>} : memref<1x512xf32, #tpu.memory_space<vmem>>, vector<1x512xf32>,
    return
  }
  func.func @transform_0(%arg0: i32) -> (i32, i32) {
    %c0_i32 = arith.constant 0 : i32
    %c0_i32_0 = arith.constant 0 : i32
    return %c0_i32, %arg0 : i32, i32
  }
  func.func @transform_1(%arg0: i32) -> (i32, i32) {
    %c0_i32 = arith.constant 0 : i32
    %c0_i32_0 = arith.constant 0 : i32
    return %c0_i32, %arg0 : i32, i32
  }
  func.func @transform_2(%arg0: i32) -> (i32, i32) {
    %c0_i32 = arith.constant 0 : i32
    %c0_i32_0 = arith.constant 0 : i32
    return %c0_i32, %arg0 : i32, i32
  }
  func.func @transform_3(%arg0: i32) -> (i32, i32) {
    %c0_i32 = arith.constant 0 : i32
    %c0_i32_0 = arith.constant 0 : i32
    %c0_i32_1 = arith.constant 0 : i32
    return %c0_i32, %c0_i32_0 : i32, i32
  }
  func.func @transform_4(%arg0: i32) -> (i32, i32) {
    %c0_i32 = arith.constant 0 : i32
    %c0_i32_0 = arith.constant 0 : i32
    %c0_i32_1 = arith.constant 0 : i32
    return %c0_i32, %c0_i32_0 : i32, i32
  }
  func.func @transform_5(%arg0: i32) -> (i32, i32) {
    %c0_i32 = arith.constant 0 : i32
    %c0_i32_0 = arith.constant 0 : i32
    %c0_i32_1 = arith.constant 0 : i32
    return %c0_i32, %c0_i32_0 : i32, i32
  }
  func.func @transform_6(%arg0: i32) -> (i32, i32) {
    %c0_i32 = arith.constant 0 : i32
    %c0_i32_0 = arith.constant 0 : i32
    %c0_i32_1 = arith.constant 0 : i32
    return %c0_i32, %c0_i32_0 : i32, i32
  }
  func.func @transform_7(%arg0: i32) -> (i32, i32) {
    %c0_i32 = arith.constant 0 : i32
    %c0_i32_0 = arith.constant 0 : i32
    %c0_i32_1 = arith.constant 0 : i32
    return %c0_i32, %c0_i32_0 : i32, i32
  }
  func.func @transform_8(%arg0: i32) -> (i32, i32) {
    %c0_i32 = arith.constant 0 : i32
    %c0_i32_0 = arith.constant 0 : i32
    %c0_i32_1 = arith.constant 0 : i32
    return %c0_i32, %c0_i32_0 : i32, i32
  }
  func.func @transform_9(%arg0: i32) -> (i32, i32) {
    %c0_i32 = arith.constant 0 : i32
    %c0_i32_0 = arith.constant 0 : i32
    %c0_i32_1 = arith.constant 0 : i32
    return %c0_i32, %c0_i32_0 : i32, i32
  }
  func.func @transform_10(%arg0: i32) -> (i32, i32) {
    %c0_i32 = arith.constant 0 : i32
    %c0_i32_0 = arith.constant 0 : i32
    %c0_i32_1 = arith.constant 0 : i32
    return %c0_i32, %c0_i32_0 : i32, i32
  }
  func.func @transform_11(%arg0: i32) -> (i32, i32) {
    %c0_i32 = arith.constant 0 : i32
    %c0_i32_0 = arith.constant 0 : i32
    %c0_i32_1 = arith.constant 0 : i32
    return %c0_i32, %c0_i32_0 : i32, i32
  }
  func.func @transform_12(%arg0: i32) -> (i32, i32) {
    %c0_i32 = arith.constant 0 : i32
    %c0_i32_0 = arith.constant 0 : i32
    %c0_i32_1 = arith.constant 0 : i32
    return %c0_i32, %c0_i32_0 : i32, i32
  }
  func.func @transform_13(%arg0: i32) -> (i32, i32) {
    %c0_i32 = arith.constant 0 : i32
    %c0_i32_0 = arith.constant 0 : i32
    return %c0_i32, %arg0 : i32, i32
  }
}

</mosaic_0001>

<llo_original>
// kernel: tpu_custom_call.1
$region0: #{tpu_custom_call.1}
  #allocation0 [shape = 'u32[]', space=smem, size = 0x4, offset = 0x4, fixed_abs, tag = 'smem constant byte address 0x4 - core index']
  #allocation1 [shape = 'u32[144,128]{1,0:T(1,128)}', space=vmem, size = 0x12000, scoped, tag = 'internal scratch']
  #allocation2 [shape = 'f32[1,1]{1,0:T(1,128)S(1)}', space=vmem, size = 0x200, scoped, tag = 'scoped memory for tpu_custom_call.1']
  %s0 = inlined_call_operand.vmem [shape: f32[1,1024], index: 0, kind: input, shape index: {}]
  %s1 = inlined_call_operand.vmem [shape: f32[1,1024], index: 1, kind: input, shape index: {}]
  %s2 = inlined_call_operand.vmem [shape: f32[1,1024], index: 2, kind: input, shape index: {}]
  %s3 = inlined_call_operand.vmem [shape: f32[32,3], index: 3, kind: input, shape index: {}]
  %s4 = inlined_call_operand.vmem [shape: f32[32,1], index: 4, kind: input, shape index: {}]
  %s5 = inlined_call_operand.vmem [shape: f32[32,32], index: 5, kind: input, shape index: {}]
  %s6 = inlined_call_operand.vmem [shape: f32[32,1], index: 6, kind: input, shape index: {}]
  %s7 = inlined_call_operand.vmem [shape: f32[32,32], index: 7, kind: input, shape index: {}]
  %s8 = inlined_call_operand.vmem [shape: f32[32,1], index: 8, kind: input, shape index: {}]
  %s9 = inlined_call_operand.vmem [shape: f32[32,32], index: 9, kind: input, shape index: {}]
  %s10 = inlined_call_operand.vmem [shape: f32[32,1], index: 10, kind: input, shape index: {}]
  %s11 = inlined_call_operand.vmem [shape: f32[1,32], index: 11, kind: input, shape index: {}]
  %s12 = inlined_call_operand.<no memory space> [shape: f32[1,1], index: 12, kind: input, shape index: {}]
  %s13 = inlined_call_operand.hbm [shape: f32[1,1024], index: 13, kind: output, shape index: {}]
  %s14 = sld [smem:[#allocation0]]
  $region85: #{tpu_custom_call.1} parent=0
    _
  %s16 = ssub.s32 1, %s14
  %s17 = scalar_select 0, %s16, %s14
  %v18 = vstv %s12
  %19 = vst [vmem:[#allocation2] sm:$0x1] %v18
  $region1: #{tpu_custom_call.1} parent=0
    #allocation3 [shape = 'u8[4096]{0}', space=vmem, size = 0x1000, scoped, tag = 'output window, operand 0']
    #allocation4 [shape = 's32[2]{0}', space=sflag, size = 0x8, scoped, tag = 'scoped memory for tpu_custom_call.1']
    %20 = vsyncpa [#allocation4], 0
    %s21 = scalar_lea.sflag [#allocation4], 1
    %22 = vsyncpa %s21, 0
    loop: start=0, step=1, limit=4
    $region2: #{tpu_custom_call.1} parent=1 // loop_pre_header
      _
    $region3: #{tpu_custom_call.1} parent=1 // loop_header
      %s24 = sphi 0, %s28
      %p25 = scmp.ge.s32.totalorder %s24, 4
      %s34 = sphi 0, %s36
      %s37 = sphi 0, %s34
      %s38 = sphi 0, %s37
      %s54 = sphi 0, %s38
      %s60 = sphi 0, %s62
      %s63 = sphi 0, %s60
      %s64 = sphi 0, %s63
      %s80 = sphi 0, %s64
      %s86 = sphi 0, %s88
      %s89 = sphi 0, %s86
      %s90 = sphi 0, %s89
      %s106 = sphi 0, %s90
      %s110 = sphi 0, %s110
      %s112 = sphi 0, %s110
      %s113 = sphi 0, %s112
      %s127 = sphi 0, %s113
      %s131 = sphi 0, %s131
      %s133 = sphi 0, %s131
      %s134 = sphi 0, %s133
      %s148 = sphi 0, %s134
      %s152 = sphi 0, %s152
      %s154 = sphi 0, %s152
      %s155 = sphi 0, %s154
      %s169 = sphi 0, %s155
      %s173 = sphi 0, %s173
      %s175 = sphi 0, %s173
      %s176 = sphi 0, %s175
      %s190 = sphi 0, %s176
      %s194 = sphi 0, %s194
      %s196 = sphi 0, %s194
      %s197 = sphi 0, %s196
      %s211 = sphi 0, %s197
      %s215 = sphi 0, %s215
      %s217 = sphi 0, %s215
      %s218 = sphi 0, %s217
      %s232 = sphi 0, %s218
      %s236 = sphi 0, %s236
      %s238 = sphi 0, %s236
      %s239 = sphi 0, %s238
      %s253 = sphi 0, %s239
      %s257 = sphi 0, %s257
      %s259 = sphi 0, %s257
      %s260 = sphi 0, %s259
      %s274 = sphi 0, %s260
      %s278 = sphi 0, %s278
      %s280 = sphi 0, %s278
      %s281 = sphi 0, %s280
      %s295 = sphi 0, %s281
      %s299 = sphi 0, %s299
      %s301 = sphi 0, %s299
      %s302 = sphi 0, %s301
      %s316 = sphi 0, %s302
      %s322 = sphi 0, %s324
      %s325 = sphi 0, %s322
      %s326 = sphi 0, %s325
      %s342 = sphi 0, %s326
    $region4: #{tpu_custom_call.1} parent=1 // loop_header_branch
      %27 = sbr.rel (%p25) target = $region8
    $region5: #{tpu_custom_call.1} parent=1 // loop_body
      %s29 = ssub.s32 %s24, 1
      %s30 = ssub.s32 %s24, 2
      %s31 = sadd.s32 %s24, 1
      %s32 = ssub.s32 %s24, %s31
      %p33 = scmp.eq.s32.totalorder %s32, 0
      %s35 = sadd.s32 %s34, 1
      %s36 = scalar_select %p33, %s34, %s35
      %p39 = pneg %p33
      %p40 = scmp.eq.s32.totalorder %s24, 1
      %p41 = por %p39, %p40
      %p42 = scmp.ne.s32.totalorder %s34, %s37
      %p43 = scmp.eq.s32.totalorder %s24, 0
      %p44 = por %p42, %p43
      %p45 = scmp.ne.s32.totalorder %s34, %s37
      %p46 = scmp.eq.s32.totalorder %s29, 1
      %p47 = por %p45, %p46
      %p48 = scmp.ne.s32.totalorder %s37, %s38
      %p49 = scmp.eq.s32.totalorder %s29, 0
      %p50 = por %p48, %p49
      %p51 = scmp.ne.s32.totalorder %s37, %s38
      %p52 = scmp.eq.s32.totalorder %s30, 1
      %p53 = por %p51, %p52
      %p55 = scmp.ne.s32.totalorder %s38, %s54
      %p56 = scmp.eq.s32.totalorder %s30, 0
      %p57 = por %p55, %p56
      %s58 = ssub.s32 %s24, %s31
      %p59 = scmp.eq.s32.totalorder %s58, 0
      %s61 = sadd.s32 %s60, 1
      %s62 = scalar_select %p59, %s60, %s61
      %p65 = pneg %p59
      %p66 = scmp.eq.s32.totalorder %s24, 1
      %p67 = por %p65, %p66
      %p68 = scmp.ne.s32.totalorder %s60, %s63
      %p69 = scmp.eq.s32.totalorder %s24, 0
      %p70 = por %p68, %p69
      %p71 = scmp.ne.s32.totalorder %s60, %s63
      %p72 = scmp.eq.s32.totalorder %s29, 1
      %p73 = por %p71, %p72
      %p74 = scmp.ne.s32.totalorder %s63, %s64
      %p75 = scmp.eq.s32.totalorder %s29, 0
      %p76 = por %p74, %p75
      %p77 = scmp.ne.s32.totalorder %s63, %s64
      %p78 = scmp.eq.s32.totalorder %s30, 1
      %p79 = por %p77, %p78
      %p81 = scmp.ne.s32.totalorder %s64, %s80
      %p82 = scmp.eq.s32.totalorder %s30, 0
      %p83 = por %p81, %p82
      %s84 = ssub.s32 %s24, %s31
      %p85 = scmp.eq.s32.totalorder %s84, 0
      %s87 = sadd.s32 %s86, 1
      %s88 = scalar_select %p85, %s86, %s87
      %p91 = pneg %p85
      %p92 = scmp.eq.s32.totalorder %s24, 1
      %p93 = por %p91, %p92
      %p94 = scmp.ne.s32.totalorder %s86, %s89
      %p95 = scmp.eq.s32.totalorder %s24, 0
      %p96 = por %p94, %p95
      %p97 = scmp.ne.s32.totalorder %s86, %s89
      %p98 = scmp.eq.s32.totalorder %s29, 1
      %p99 = por %p97, %p98
      %p100 = scmp.ne.s32.totalorder %s89, %s90
      %p101 = scmp.eq.s32.totalorder %s29, 0
      %p102 = por %p100, %p101
      %p103 = scmp.ne.s32.totalorder %s89, %s90
      %p104 = scmp.eq.s32.totalorder %s30, 1
      %p105 = por %p103, %p104
      %p107 = scmp.ne.s32.totalorder %s90, %s106
      %p108 = scmp.eq.s32.totalorder %s30, 0
      %p109 = por %p107, %p108
      %s111 = sadd.s32 %s110, 1
      %p114 = scmp.eq.s32.totalorder %s24, 1
      %p115 = scmp.ne.s32.totalorder %s110, %s112
      %p116 = scmp.eq.s32.totalorder %s24, 0
      %p117 = por %p115, %p116
      %p118 = scmp.ne.s32.totalorder %s110, %s112
      %p119 = scmp.eq.s32.totalorder %s29, 1
      %p120 = por %p118, %p119
      %p121 = scmp.ne.s32.totalorder %s112, %s113
      %p122 = scmp.eq.s32.totalorder %s29, 0
      %p123 = por %p121, %p122
      %p124 = scmp.ne.s32.totalorder %s112, %s113
      %p125 = scmp.eq.s32.totalorder %s30, 1
      %p126 = por %p124, %p125
      %p128 = scmp.ne.s32.totalorder %s113, %s127
      %p129 = scmp.eq.s32.totalorder %s30, 0
      %p130 = por %p128, %p129
      %s132 = sadd.s32 %s131, 1
      %p135 = scmp.eq.s32.totalorder %s24, 1
      %p136 = scmp.ne.s32.totalorder %s131, %s133
      %p137 = scmp.eq.s32.totalorder %s24, 0
      %p138 = por %p136, %p137
      %p139 = scmp.ne.s32.totalorder %s131, %s133
      %p140 = scmp.eq.s32.totalorder %s29, 1
      %p141 = por %p139, %p140
      %p142 = scmp.ne.s32.totalorder %s133, %s134
      %p143 = scmp.eq.s32.totalorder %s29, 0
      %p144 = por %p142, %p143
      %p145 = scmp.ne.s32.totalorder %s133, %s134
      %p146 = scmp.eq.s32.totalorder %s30, 1
      %p147 = por %p145, %p146
      %p149 = scmp.ne.s32.totalorder %s134, %s148
      %p150 = scmp.eq.s32.totalorder %s30, 0
      %p151 = por %p149, %p150
      %s153 = sadd.s32 %s152, 1
      %p156 = scmp.eq.s32.totalorder %s24, 1
      %p157 = scmp.ne.s32.totalorder %s152, %s154
      %p158 = scmp.eq.s32.totalorder %s24, 0
      %p159 = por %p157, %p158
      %p160 = scmp.ne.s32.totalorder %s152, %s154
      %p161 = scmp.eq.s32.totalorder %s29, 1
      %p162 = por %p160, %p161
      %p163 = scmp.ne.s32.totalorder %s154, %s155
      %p164 = scmp.eq.s32.totalorder %s29, 0
      %p165 = por %p163, %p164
      %p166 = scmp.ne.s32.totalorder %s154, %s155
      %p167 = scmp.eq.s32.totalorder %s30, 1
      %p168 = por %p166, %p167
      %p170 = scmp.ne.s32.totalorder %s155, %s169
      %p171 = scmp.eq.s32.totalorder %s30, 0
      %p172 = por %p170, %p171
      %s174 = sadd.s32 %s173, 1
      %p177 = scmp.eq.s32.totalorder %s24, 1
      %p178 = scmp.ne.s32.totalorder %s173, %s175
      %p179 = scmp.eq.s32.totalorder %s24, 0
      %p180 = por %p178, %p179
      %p181 = scmp.ne.s32.totalorder %s173, %s175
      %p182 = scmp.eq.s32.totalorder %s29, 1
      %p183 = por %p181, %p182
      %p184 = scmp.ne.s32.totalorder %s175, %s176
      %p185 = scmp.eq.s32.totalorder %s29, 0
      %p186 = por %p184, %p185
      %p187 = scmp.ne.s32.totalorder %s175, %s176
      %p188 = scmp.eq.s32.totalorder %s30, 1
      %p189 = por %p187, %p188
      %p191 = scmp.ne.s32.totalorder %s176, %s190
      %p192 = scmp.eq.s32.totalorder %s30, 0
      %p193 = por %p191, %p192
      %s195 = sadd.s32 %s194, 1
      %p198 = scmp.eq.s32.totalorder %s24, 1
      %p199 = scmp.ne.s32.totalorder %s194, %s196
      %p200 = scmp.eq.s32.totalorder %s24, 0
      %p201 = por %p199, %p200
      %p202 = scmp.ne.s32.totalorder %s194, %s196
      %p203 = scmp.eq.s32.totalorder %s29, 1
      %p204 = por %p202, %p203
      %p205 = scmp.ne.s32.totalorder %s196, %s197
      %p206 = scmp.eq.s32.totalorder %s29, 0
      %p207 = por %p205, %p206
      %p208 = scmp.ne.s32.totalorder %s196, %s197
      %p209 = scmp.eq.s32.totalorder %s30, 1
      %p210 = por %p208, %p209
      %p212 = scmp.ne.s32.totalorder %s197, %s211
      %p213 = scmp.eq.s32.totalorder %s30, 0
      %p214 = por %p212, %p213
      %s216 = sadd.s32 %s215, 1
      %p219 = scmp.eq.s32.totalorder %s24, 1
      %p220 = scmp.ne.s32.totalorder %s215, %s217
      %p221 = scmp.eq.s32.totalorder %s24, 0
      %p222 = por %p220, %p221
      %p223 = scmp.ne.s32.totalorder %s215, %s217
      %p224 = scmp.eq.s32.totalorder %s29, 1
      %p225 = por %p223, %p224
      %p226 = scmp.ne.s32.totalorder %s217, %s218
      %p227 = scmp.eq.s32.totalorder %s29, 0
      %p228 = por %p226, %p227
      %p229 = scmp.ne.s32.totalorder %s217, %s218
      %p230 = scmp.eq.s32.totalorder %s30, 1
      %p231 = por %p229, %p230
      %p233 = scmp.ne.s32.totalorder %s218, %s232
      %p234 = scmp.eq.s32.totalorder %s30, 0
      %p235 = por %p233, %p234
      %s237 = sadd.s32 %s236, 1
      %p240 = scmp.eq.s32.totalorder %s24, 1
      %p241 = scmp.ne.s32.totalorder %s236, %s238
      %p242 = scmp.eq.s32.totalorder %s24, 0
      %p243 = por %p241, %p242
      %p244 = scmp.ne.s32.totalorder %s236, %s238
      %p245 = scmp.eq.s32.totalorder %s29, 1
      %p246 = por %p244, %p245
      %p247 = scmp.ne.s32.totalorder %s238, %s239
      %p248 = scmp.eq.s32.totalorder %s29, 0
      %p249 = por %p247, %p248
      %p250 = scmp.ne.s32.totalorder %s238, %s239
      %p251 = scmp.eq.s32.totalorder %s30, 1
      %p252 = por %p250, %p251
      %p254 = scmp.ne.s32.totalorder %s239, %s253
      %p255 = scmp.eq.s32.totalorder %s30, 0
      %p256 = por %p254, %p255
      %s258 = sadd.s32 %s257, 1
      %p261 = scmp.eq.s32.totalorder %s24, 1
      %p262 = scmp.ne.s32.totalorder %s257, %s259
      %p263 = scmp.eq.s32.totalorder %s24, 0
      %p264 = por %p262, %p263
      %p265 = scmp.ne.s32.totalorder %s257, %s259
      %p266 = scmp.eq.s32.totalorder %s29, 1
      %p267 = por %p265, %p266
      %p268 = scmp.ne.s32.totalorder %s259, %s260
      %p269 = scmp.eq.s32.totalorder %s29, 0
      %p270 = por %p268, %p269
      %p271 = scmp.ne.s32.totalorder %s259, %s260
      %p272 = scmp.eq.s32.totalorder %s30, 1
      %p273 = por %p271, %p272
      %p275 = scmp.ne.s32.totalorder %s260, %s274
      %p276 = scmp.eq.s32.totalorder %s30, 0
      %p277 = por %p275, %p276
      %s279 = sadd.s32 %s278, 1
      %p282 = scmp.eq.s32.totalorder %s24, 1
      %p283 = scmp.ne.s32.totalorder %s278, %s280
      %p284 = scmp.eq.s32.totalorder %s24, 0
      %p285 = por %p283, %p284
      %p286 = scmp.ne.s32.totalorder %s278, %s280
      %p287 = scmp.eq.s32.totalorder %s29, 1
      %p288 = por %p286, %p287
      %p289 = scmp.ne.s32.totalorder %s280, %s281
      %p290 = scmp.eq.s32.totalorder %s29, 0
      %p291 = por %p289, %p290
      %p292 = scmp.ne.s32.totalorder %s280, %s281
      %p293 = scmp.eq.s32.totalorder %s30, 1
      %p294 = por %p292, %p293
      %p296 = scmp.ne.s32.totalorder %s281, %s295
      %p297 = scmp.eq.s32.totalorder %s30, 0
      %p298 = por %p296, %p297
      %s300 = sadd.s32 %s299, 1
      %p303 = scmp.eq.s32.totalorder %s24, 1
      %p304 = scmp.ne.s32.totalorder %s299, %s301
      %p305 = scmp.eq.s32.totalorder %s24, 0
      %p306 = por %p304, %p305
      %p307 = scmp.ne.s32.totalorder %s299, %s301
      %p308 = scmp.eq.s32.totalorder %s29, 1
      %p309 = por %p307, %p308
      %p310 = scmp.ne.s32.totalorder %s301, %s302
      %p311 = scmp.eq.s32.totalorder %s29, 0
      %p312 = por %p310, %p311
      %p313 = scmp.ne.s32.totalorder %s301, %s302
      %p314 = scmp.eq.s32.totalorder %s30, 1
      %p315 = por %p313, %p314
      %p317 = scmp.ne.s32.totalorder %s302, %s316
      %p318 = scmp.eq.s32.totalorder %s30, 0
      %p319 = por %p317, %p318
      %s320 = ssub.s32 %s24, %s31
      %p321 = scmp.eq.s32.totalorder %s320, 0
      %s323 = sadd.s32 %s322, 1
      %s324 = scalar_select %p321, %s322, %s323
      %p327 = pneg %p321
      %p328 = scmp.eq.s32.totalorder %s24, 1
      %p329 = por %p327, %p328
      %p330 = scmp.ne.s32.totalorder %s322, %s325
      %p331 = scmp.eq.s32.totalorder %s24, 0
      %p332 = por %p330, %p331
      %p333 = scmp.ne.s32.totalorder %s322, %s325
      %p334 = scmp.eq.s32.totalorder %s29, 1
      %p335 = por %p333, %p334
      %p336 = scmp.ne.s32.totalorder %s325, %s326
      %p337 = scmp.eq.s32.totalorder %s29, 0
      %p338 = por %p336, %p337
      %p339 = scmp.ne.s32.totalorder %s325, %s326
      %p340 = scmp.eq.s32.totalorder %s30, 1
      %p341 = por %p339, %p340
      %p343 = scmp.ne.s32.totalorder %s326, %s342
      %p344 = scmp.eq.s32.totalorder %s30, 0
      %p345 = por %p343, %p344
      %p346 = scmp.le.s32.totalorder 1, %s24
      %p347 = scmp.lt.s32.totalorder %s24, 3
      %p348 = pnand %p346, %p347
      %p349 = pneg %p348
      // Predicated region
      $region9: #{tpu_custom_call.1} parent=5 // pred_check
        _
      $region10: #{tpu_custom_call.1} parent=5 // pred_check_branch
        %351 = sbr.rel (%p348) target = $region12
      $region11: #{tpu_custom_call.1} parent=5 // pred_region
        %s352 = ssub.s32 %s24, 1
        // Predicated region
        $region13: #{tpu_custom_call.1} parent=11 // pred_check
          %p353 = pneg %p123
        $region14: #{tpu_custom_call.1} parent=11 // pred_check_branch
          %355 = sbr.rel (%p353) target = $region16
        $region15: #{tpu_custom_call.1} parent=11 // pred_region
          _
        $region16: #{tpu_custom_call.1} parent=11 // pred_fallthru
          _
        // Predicated region
        $region17: #{tpu_custom_call.1} parent=11 // pred_check
          %p356 = pneg %p144
        $region18: #{tpu_custom_call.1} parent=11 // pred_check_branch
          %358 = sbr.rel (%p356) target = $region20
        $region19: #{tpu_custom_call.1} parent=11 // pred_region
          _
        $region20: #{tpu_custom_call.1} parent=11 // pred_fallthru
          _
        // Predicated region
        $region21: #{tpu_custom_call.1} parent=11 // pred_check
          %p359 = pneg %p165
        $region22: #{tpu_custom_call.1} parent=11 // pred_check_branch
          %361 = sbr.rel (%p359) target = $region24
        $region23: #{tpu_custom_call.1} parent=11 // pred_region
          _
        $region24: #{tpu_custom_call.1} parent=11 // pred_fallthru
          _
        // Predicated region
        $region25: #{tpu_custom_call.1} parent=11 // pred_check
          %p362 = pneg %p186
        $region26: #{tpu_custom_call.1} parent=11 // pred_check_branch
          %364 = sbr.rel (%p362) target = $region28
        $region27: #{tpu_custom_call.1} parent=11 // pred_region
          _
        $region28: #{tpu_custom_call.1} parent=11 // pred_fallthru
          _
        // Predicated region
        $region29: #{tpu_custom_call.1} parent=11 // pred_check
          %p365 = pneg %p207
        $region30: #{tpu_custom_call.1} parent=11 // pred_check_branch
          %367 = sbr.rel (%p365) target = $region32
        $region31: #{tpu_custom_call.1} parent=11 // pred_region
          _
        $region32: #{tpu_custom_call.1} parent=11 // pred_fallthru
          _
        // Predicated region
        $region33: #{tpu_custom_call.1} parent=11 // pred_check
          %p368 = pneg %p228
        $region34: #{tpu_custom_call.1} parent=11 // pred_check_branch
          %370 = sbr.rel (%p368) target = $region36
        $region35: #{tpu_custom_call.1} parent=11 // pred_region
          _
        $region36: #{tpu_custom_call.1} parent=11 // pred_fallthru
          _
        // Predicated region
        $region37: #{tpu_custom_call.1} parent=11 // pred_check
          %p371 = pneg %p249
        $region38: #{tpu_custom_call.1} parent=11 // pred_check_branch
          %373 = sbr.rel (%p371) target = $region40
        $region39: #{tpu_custom_call.1} parent=11 // pred_region
          _
        $region40: #{tpu_custom_call.1} parent=11 // pred_fallthru
          _
        // Predicated region
        $region41: #{tpu_custom_call.1} parent=11 // pred_check
          %p374 = pneg %p270
        $region42: #{tpu_custom_call.1} parent=11 // pred_check_branch
          %376 = sbr.rel (%p374) target = $region44
        $region43: #{tpu_custom_call.1} parent=11 // pred_region
          _
        $region44: #{tpu_custom_call.1} parent=11 // pred_fallthru
          _
        // Predicated region
        $region45: #{tpu_custom_call.1} parent=11 // pred_check
          %p377 = pneg %p291
        $region46: #{tpu_custom_call.1} parent=11 // pred_check_branch
          %379 = sbr.rel (%p377) target = $region48
        $region47: #{tpu_custom_call.1} parent=11 // pred_region
          _
        $region48: #{tpu_custom_call.1} parent=11 // pred_fallthru
          _
        // Predicated region
        $region49: #{tpu_custom_call.1} parent=11 // pred_check
          %p380 = pneg %p312
        $region50: #{tpu_custom_call.1} parent=11 // pred_check_branch
          %382 = sbr.rel (%p380) target = $region52
        $region51: #{tpu_custom_call.1} parent=11 // pred_region
          _
        $region52: #{tpu_custom_call.1} parent=11 // pred_fallthru
          _
      $region12: #{tpu_custom_call.1} parent=5 // pred_fallthru
        _
      %p383 = scmp.lt.s32.totalorder %s24, 2
      // Predicated region
      $region53: #{tpu_custom_call.1} parent=5 // pred_check
        %p384 = pneg %p383
      $region54: #{tpu_custom_call.1} parent=5 // pred_check_branch
        %386 = sbr.rel (%p384) target = $region56
      $region55: #{tpu_custom_call.1} parent=5 // pred_region
        // Predicated region
        $region57: #{tpu_custom_call.1} parent=55 // pred_check
          %p387 = pneg %p44
        $region58: #{tpu_custom_call.1} parent=55 // pred_check_branch
          %389 = sbr.rel (%p387) target = $region60
        $region59: #{tpu_custom_call.1} parent=55 // pred_region
          %s390 = smul.u32 4, %s24
          %p391 = scmp.lt.s32.totalorder %s390, 7
          %s392 = scalar_select %p391, %s390, 7
          %s393 = scalar_lea.vmem %s0, %s392
          %s394 = smul.u32 4, %s24
        $region60: #{tpu_custom_call.1} parent=55 // pred_fallthru
          _
        // Predicated region
        $region61: #{tpu_custom_call.1} parent=55 // pred_check
          %p395 = pneg %p70
        $region62: #{tpu_custom_call.1} parent=55 // pred_check_branch
          %397 = sbr.rel (%p395) target = $region64
        $region63: #{tpu_custom_call.1} parent=55 // pred_region
          %s398 = smul.u32 4, %s24
          %p399 = scmp.lt.s32.totalorder %s398, 7
          %s400 = scalar_select %p399, %s398, 7
          %s401 = scalar_lea.vmem %s1, %s400
          %s402 = smul.u32 4, %s24
        $region64: #{tpu_custom_call.1} parent=55 // pred_fallthru
          _
        // Predicated region
        $region65: #{tpu_custom_call.1} parent=55 // pred_check
          %p403 = pneg %p96
        $region66: #{tpu_custom_call.1} parent=55 // pred_check_branch
          %405 = sbr.rel (%p403) target = $region68
        $region67: #{tpu_custom_call.1} parent=55 // pred_region
          %s406 = smul.u32 4, %s24
          %p407 = scmp.lt.s32.totalorder %s406, 7
          %s408 = scalar_select %p407, %s406, 7
          %s409 = scalar_lea.vmem %s2, %s408
          %s410 = smul.u32 4, %s24
        $region68: #{tpu_custom_call.1} parent=55 // pred_fallthru
          _
      $region56: #{tpu_custom_call.1} parent=5 // pred_fallthru
        _
      %p411 = scmp.le.s32.totalorder 1, %s24
      %p412 = scmp.lt.s32.totalorder %s24, 3
      %p413 = pnand %p411, %p412
      %p414 = pneg %p413
      // Predicated region
      $region69: #{tpu_custom_call.1} parent=5 // pred_check
        _
      $region70: #{tpu_custom_call.1} parent=5 // pred_check_branch
        %416 = sbr.rel (%p413) target = $region72
      $region71: #{tpu_custom_call.1} parent=5 // pred_region
        %s417 = ssub.s32 %s24, 1
        %s418 = smul.u32 4, %s29
        %p419 = scmp.lt.s32.totalorder %s418, 7
        %s420 = scalar_select %p419, %s418, 7
        %s421 = scalar_lea.vmem %s0, %s420
        %p422 = pneg %p50
        %p423 = pneg %p47
        %s424 = smul.u32 4, %s29
        %p425 = scmp.lt.s32.totalorder %s424, 7
        %s426 = scalar_select %p425, %s424, 7
        %s427 = scalar_lea.vmem %s1, %s426
        %p428 = pneg %p76
        %p429 = pneg %p73
        %s430 = smul.u32 4, %s29
        %p431 = scmp.lt.s32.totalorder %s430, 7
        %s432 = scalar_select %p431, %s430, 7
        %s433 = scalar_lea.vmem %s2, %s432
        %p434 = pneg %p102
        %p435 = pneg %p99
        %p436 = pneg %p123
        %p437 = pneg %p120
        %p438 = pneg %p144
        %p439 = pneg %p141
        %p440 = pneg %p165
        %p441 = pneg %p162
        %p442 = pneg %p186
        %p443 = pneg %p183
        %p444 = pneg %p207
        %p445 = pneg %p204
        %p446 = pneg %p228
        %p447 = pneg %p225
        %p448 = pneg %p249
        %p449 = pneg %p246
        %p450 = pneg %p270
        %p451 = pneg %p267
        %p452 = pneg %p291
        %p453 = pneg %p288
        %p454 = pneg %p312
        %p455 = pneg %p309
        %p456 = pneg %p338
        %p457 = pneg %p335
        %s458 = sand.u32 %s325, 1
        %s459 = scalar_lea.sflag [#allocation4], %s458
        %s460 = sand.u32 %s325, 1
        %s461 = smul.addr %s460, 4
        %s462 = scalar_lea.vmem [#allocation3], %s461
        %s463 = smul.u32 4, %s29
        %p464 = scmp.lt.s32.totalorder %s463, 7
        %s465 = scalar_select %p464, %s463, 7
        %s466 = scalar_lea.vmem %s0, %s465
        %s467 = smul.u32 4, %s29
        %s468 = smul.u32 4, %s29
        %p469 = scmp.lt.s32.totalorder %s468, 7
        %s470 = scalar_select %p469, %s468, 7
        %s471 = scalar_lea.vmem %s1, %s470
        %s472 = smul.u32 4, %s29
        %s473 = smul.u32 4, %s29
        %p474 = scmp.lt.s32.totalorder %s473, 7
        %s475 = scalar_select %p474, %s473, 7
        %s476 = scalar_lea.vmem %s2, %s475
        %s477 = smul.u32 4, %s29
        %s478 = smul.u32 4, %s29
        %v479 = vld [vmem:[%s3] sm:$0xff]
        %v480 = vld [vmem:[%s3 + $0x8] sm:$0xff]
        %v481 = vld [vmem:[%s3 + $0x10] sm:$0xff]
        %v482 = vld [vmem:[%s3 + $0x18] sm:$0xff]
        %v483 = vld [vmem:[%s4] sm:$0xff]
        %v484 = vld [vmem:[%s4 + $0x8] sm:$0xff]
        %v485 = vld [vmem:[%s4 + $0x10] sm:$0xff]
        %v486 = vld [vmem:[%s4 + $0x18] sm:$0xff]
        %v487 = vld [vmem:[%s466] sm:$0xf]
        %489 = vset.pattern.permute.xlu0 0
        %490 = vperm.xlu0 %489, %v479
        %v491 = vpop.permute.xlu0 %490
        %494 = vset.pattern.permute.xlu0 0
        %495 = vperm.xlu0 %494, %v480
        %v496 = vpop.permute.xlu0 %495
        %499 = vset.pattern.permute.xlu0 0
        %500 = vperm.xlu0 %499, %v481
        %v501 = vpop.permute.xlu0 %500
        %504 = vset.pattern.permute.xlu0 0
        %505 = vperm.xlu0 %504, %v482
        %v506 = vpop.permute.xlu0 %505
        %v509 = vlaneseq
        %v510 = vshrl.u32 %v509, 7
        %v511 = vsub.s32 0, %v510
        %v512 = vrot.slane %v487, %v511
        %v513 = vlaneseq
        %v514 = vshrl.u32 %v513, 7
        %v515 = vsub.s32 1, %v514
        %v516 = vrot.slane %v487, %v515
        %v517 = vlaneseq
        %v518 = vshrl.u32 %v517, 7
        %v519 = vsub.s32 2, %v518
        %v520 = vrot.slane %v487, %v519
        %v521 = vlaneseq
        %v522 = vshrl.u32 %v521, 7
        %v523 = vsub.s32 3, %v522
        %v524 = vrot.slane %v487, %v523
        %v529 = vmul.f32 %v491, %v512
        %v530 = vmul.f32 %v491, %v516
        %v531 = vmul.f32 %v491, %v520
        %v532 = vmul.f32 %v491, %v524
        %v533 = vmul.f32 %v496, %v512
        %v534 = vmul.f32 %v496, %v516
        %v535 = vmul.f32 %v496, %v520
        %v536 = vmul.f32 %v496, %v524
        %v537 = vmul.f32 %v501, %v512
        %v538 = vmul.f32 %v501, %v516
        %v539 = vmul.f32 %v501, %v520
        %v540 = vmul.f32 %v501, %v524
        %v541 = vmul.f32 %v506, %v512
        %v542 = vmul.f32 %v506, %v516
        %v543 = vmul.f32 %v506, %v520
        %v544 = vmul.f32 %v506, %v524
        %v545 = vld [vmem:[%s471] sm:$0xf]
        %546 = vset.pattern.permute.xlu0 1
        %547 = vperm.xlu0 %546, %v479
        %v548 = vpop.permute.xlu0 %547
        %550 = vset.pattern.permute.xlu0 1
        %551 = vperm.xlu0 %550, %v480
        %v552 = vpop.permute.xlu0 %551
        %554 = vset.pattern.permute.xlu0 1
        %555 = vperm.xlu0 %554, %v481
        %v556 = vpop.permute.xlu0 %555
        %558 = vset.pattern.permute.xlu0 1
        %559 = vperm.xlu0 %558, %v482
        %v560 = vpop.permute.xlu0 %559
        %v563 = vlaneseq
        %v564 = vshrl.u32 %v563, 7
        %v565 = vsub.s32 0, %v564
        %v566 = vrot.slane %v545, %v565
        %v567 = vlaneseq
        %v568 = vshrl.u32 %v567, 7
        %v569 = vsub.s32 1, %v568
        %v570 = vrot.slane %v545, %v569
        %v571 = vlaneseq
        %v572 = vshrl.u32 %v571, 7
        %v573 = vsub.s32 2, %v572
        %v574 = vrot.slane %v545, %v573
        %v575 = vlaneseq
        %v576 = vshrl.u32 %v575, 7
        %v577 = vsub.s32 3, %v576
        %v578 = vrot.slane %v545, %v577
        %v583 = vmul.f32 %v548, %v566
        %v584 = vmul.f32 %v548, %v570
        %v585 = vmul.f32 %v548, %v574
        %v586 = vmul.f32 %v548, %v578
        %v587 = vmul.f32 %v552, %v566
        %v588 = vmul.f32 %v552, %v570
        %v589 = vmul.f32 %v552, %v574
        %v590 = vmul.f32 %v552, %v578
        %v591 = vmul.f32 %v556, %v566
        %v592 = vmul.f32 %v556, %v570
        %v593 = vmul.f32 %v556, %v574
        %v594 = vmul.f32 %v556, %v578
        %v595 = vmul.f32 %v560, %v566
        %v596 = vmul.f32 %v560, %v570
        %v597 = vmul.f32 %v560, %v574
        %v598 = vmul.f32 %v560, %v578
        %v599 = vadd.f32 %v529, %v583
        %v600 = vadd.f32 %v530, %v584
        %v601 = vadd.f32 %v531, %v585
        %v602 = vadd.f32 %v532, %v586
        %v603 = vadd.f32 %v533, %v587
        %v604 = vadd.f32 %v534, %v588
        %v605 = vadd.f32 %v535, %v589
        %v606 = vadd.f32 %v536, %v590
        %v607 = vadd.f32 %v537, %v591
        %v608 = vadd.f32 %v538, %v592
        %v609 = vadd.f32 %v539, %v593
        %v610 = vadd.f32 %v540, %v594
        %v611 = vadd.f32 %v541, %v595
        %v612 = vadd.f32 %v542, %v596
        %v613 = vadd.f32 %v543, %v597
        %v614 = vadd.f32 %v544, %v598
        %v615 = vld [vmem:[%s476] sm:$0xf]
        %616 = vset.pattern.permute.xlu0 2
        %617 = vperm.xlu0 %616, %v479
        %v618 = vpop.permute.xlu0 %617
        %620 = vset.pattern.permute.xlu0 2
        %621 = vperm.xlu0 %620, %v480
        %v622 = vpop.permute.xlu0 %621
        %624 = vset.pattern.permute.xlu0 2
        %625 = vperm.xlu0 %624, %v481
        %v626 = vpop.permute.xlu0 %625
        %628 = vset.pattern.permute.xlu0 2
        %629 = vperm.xlu0 %628, %v482
        %v630 = vpop.permute.xlu0 %629
        %v633 = vlaneseq
        %v634 = vshrl.u32 %v633, 7
        %v635 = vsub.s32 0, %v634
        %v636 = vrot.slane %v615, %v635
        %v637 = vlaneseq
        %v638 = vshrl.u32 %v637, 7
        %v639 = vsub.s32 1, %v638
        %v640 = vrot.slane %v615, %v639
        %v641 = vlaneseq
        %v642 = vshrl.u32 %v641, 7
        %v643 = vsub.s32 2, %v642
        %v644 = vrot.slane %v615, %v643
        %v645 = vlaneseq
        %v646 = vshrl.u32 %v645, 7
        %v647 = vsub.s32 3, %v646
        %v648 = vrot.slane %v615, %v647
        %v653 = vmul.f32 %v618, %v636
        %v654 = vmul.f32 %v618, %v640
        %v655 = vmul.f32 %v618, %v644
        %v656 = vmul.f32 %v618, %v648
        %v657 = vmul.f32 %v622, %v636
        %v658 = vmul.f32 %v622, %v640
        %v659 = vmul.f32 %v622, %v644
        %v660 = vmul.f32 %v622, %v648
        %v661 = vmul.f32 %v626, %v636
        %v662 = vmul.f32 %v626, %v640
        %v663 = vmul.f32 %v626, %v644
        %v664 = vmul.f32 %v626, %v648
        %v665 = vmul.f32 %v630, %v636
        %v666 = vmul.f32 %v630, %v640
        %v667 = vmul.f32 %v630, %v644
        %v668 = vmul.f32 %v630, %v648
        %v669 = vadd.f32 %v599, %v653
        %v670 = vadd.f32 %v600, %v654
        %v671 = vadd.f32 %v601, %v655
        %v672 = vadd.f32 %v602, %v656
        %v673 = vadd.f32 %v603, %v657
        %v674 = vadd.f32 %v604, %v658
        %v675 = vadd.f32 %v605, %v659
        %v676 = vadd.f32 %v606, %v660
        %v677 = vadd.f32 %v607, %v661
        %v678 = vadd.f32 %v608, %v662
        %v679 = vadd.f32 %v609, %v663
        %v680 = vadd.f32 %v610, %v664
        %v681 = vadd.f32 %v611, %v665
        %v682 = vadd.f32 %v612, %v666
        %v683 = vadd.f32 %v613, %v667
        %v684 = vadd.f32 %v614, %v668
        %686 = vset.pattern.permute.xlu0 0
        %687 = vperm.xlu0 %686, %v483
        %v688 = vpop.permute.xlu0 %687
        %691 = vset.pattern.permute.xlu0 0
        %692 = vperm.xlu0 %691, %v484
        %v693 = vpop.permute.xlu0 %692
        %696 = vset.pattern.permute.xlu0 0
        %697 = vperm.xlu0 %696, %v485
        %v698 = vpop.permute.xlu0 %697
        %701 = vset.pattern.permute.xlu0 0
        %702 = vperm.xlu0 %701, %v486
        %v703 = vpop.permute.xlu0 %702
        %v705 = vadd.f32 %v669, %v688
        %v706 = vadd.f32 %v670, %v688
        %v707 = vadd.f32 %v671, %v688
        %v708 = vadd.f32 %v672, %v688
        %v709 = vadd.f32 %v673, %v693
        %v710 = vadd.f32 %v674, %v693
        %v711 = vadd.f32 %v675, %v693
        %v712 = vadd.f32 %v676, %v693
        %v713 = vadd.f32 %v677, %v698
        %v714 = vadd.f32 %v678, %v698
        %v715 = vadd.f32 %v679, %v698
        %v716 = vadd.f32 %v680, %v698
        %v717 = vadd.f32 %v681, %v703
        %v718 = vadd.f32 %v682, %v703
        %v719 = vadd.f32 %v683, %v703
        %v720 = vadd.f32 %v684, %v703
        %v721 = vmax.f32 %v705, 0.0
        %v722 = vmax.f32 %v706, 0.0
        %v723 = vmax.f32 %v707, 0.0
        %v724 = vmax.f32 %v708, 0.0
        %v725 = vmax.f32 %v709, 0.0
        %v726 = vmax.f32 %v710, 0.0
        %v727 = vmax.f32 %v711, 0.0
        %v728 = vmax.f32 %v712, 0.0
        %v729 = vmax.f32 %v713, 0.0
        %v730 = vmax.f32 %v714, 0.0
        %v731 = vmax.f32 %v715, 0.0
        %v732 = vmax.f32 %v716, 0.0
        %v733 = vmax.f32 %v717, 0.0
        %v734 = vmax.f32 %v718, 0.0
        %v735 = vmax.f32 %v719, 0.0
        %v736 = vmax.f32 %v720, 0.0
        %v737 = vld [vmem:[%s5] sm:$0xff]
        %v738 = vld [vmem:[%s5 + $0x8] sm:$0xff]
        %v739 = vld [vmem:[%s5 + $0x10] sm:$0xff]
        %v740 = vld [vmem:[%s5 + $0x18] sm:$0xff]
        %v741 = vld [vmem:[%s6] sm:$0xff]
        %v742 = vld [vmem:[%s6 + $0x8] sm:$0xff]
        %v743 = vld [vmem:[%s6 + $0x10] sm:$0xff]
        %v744 = vld [vmem:[%s6 + $0x18] sm:$0xff]
        %746 = vset.pattern.permute.xlu0 0
        %747 = vperm.xlu0 %746, %v741
        %v748 = vpop.permute.xlu0 %747
        %751 = vset.pattern.permute.xlu0 0
        %752 = vperm.xlu0 %751, %v742
        %v753 = vpop.permute.xlu0 %752
        %756 = vset.pattern.permute.xlu0 0
        %757 = vperm.xlu0 %756, %v743
        %v758 = vpop.permute.xlu0 %757
        %761 = vset.pattern.permute.xlu0 0
        %762 = vperm.xlu0 %761, %v744
        %v763 = vpop.permute.xlu0 %762
        %vm765 = vcmask 261120
        %v767 = vsel %vm765, %v737, 0
        %v770 = vsel %vm765, %v738, 0
        %v773 = vsel %vm765, %v739, 0
        %v776 = vsel %vm765, %v740, 0
        %v778 = vand.u32 %v722, 4294901760
        %779 = vmatprep.subr.mxu0 %v778
        %v780 = vand.u32 %v721, 4294901760
        %781 = vmatpush1.msra.mxu0 %v780
        %v782 = vand.u32 %v726, 4294901760
        %783 = vmatprep.subr.mxu0 %v782
        %v784 = vand.u32 %v725, 4294901760
        %785 = vmatpush1.msra.mxu0 %v784
        %v786 = vand.u32 %v730, 4294901760
        %787 = vmatprep.subr.mxu0 %v786
        %v788 = vand.u32 %v729, 4294901760
        %789 = vmatpush1.msra.mxu0 %v788
        %v790 = vand.u32 %v734, 4294901760
        %791 = vmatprep.subr.mxu0 %v790
        %v792 = vand.u32 %v733, 4294901760
        %793 = vmatpush1.msra.mxu0 %v792
        %794 = vmatprep.subr.mxu0 0.0
        %795 = vmatpush1.msra.mxu0 0.0
        %796 = vmatprep.subr.mxu0 0.0
        %797 = vmatpush1.msra.mxu0 0.0
        %798 = vmatprep.subr.mxu0 0.0
        %799 = vmatpush1.msra.mxu0 0.0
        %800 = vmatprep.subr.mxu0 0.0
        %801 = vmatpush1.msra.mxu0 0.0
        %802 = vmatprep.subr.mxu0 0.0
        %803 = vmatpush1.msra.mxu0 0.0
        %804 = vmatprep.subr.mxu0 0.0
        %805 = vmatpush1.msra.mxu0 0.0
        %806 = vmatprep.subr.mxu0 0.0
        %807 = vmatpush1.msra.mxu0 0.0
        %808 = vmatprep.subr.mxu0 0.0
        %809 = vmatpush1.msra.mxu0 0.0
        %810 = vmatprep.subr.mxu0 0.0
        %811 = vmatpush1.msra.mxu0 0.0
        %812 = vmatprep.subr.mxu0 0.0
        %813 = vmatpush1.msra.mxu0 0.0
        %814 = vmatprep.subr.mxu0 0.0
        %815 = vmatpush1.msra.mxu0 0.0
        %816 = vmatprep.subr.mxu0 0.0
        %817 = vmatpush1.msra.mxu0 0.0
        %818 = vmatprep.subr.mxu0 0.0
        %819 = vmatpush1.msra.mxu0 0.0
        %820 = vmatprep.subr.mxu0 0.0
        %821 = vmatpush1.msra.mxu0 0.0
        %822 = vmatprep.subr.mxu0 0.0
        %823 = vmatpush1.msra.mxu0 0.0
        %824 = vmatprep.subr.mxu0 0.0
        %825 = vmatpush1.msra.mxu0 0.0
        %826 = vmatprep.subr.mxu0 0.0
        %827 = vmatpush1.msra.mxu0 0.0
        %828 = vmatprep.subr.mxu0 0.0
        %829 = vmatpush1.msra.mxu0 0.0
        %830 = vmatprep.subr.mxu0 0.0
        %831 = vmatpush1.msra.mxu0 0.0
        %832 = vmatprep.subr.mxu0 0.0
        %833 = vmatpush1.msra.mxu0 0.0
        %834 = vmatprep.subr.mxu0 0.0
        %835 = vmatpush1.msra.mxu0 0.0
        %836 = vmatprep.subr.mxu0 0.0
        %837 = vmatpush1.msra.mxu0 0.0
        %838 = vmatprep.subr.mxu0 0.0
        %839 = vmatpush1.msra.mxu0 0.0
        %840 = vmatprep.subr.mxu0 0.0
        %841 = vmatpush1.msra.mxu0 0.0
        %842 = vmatprep.subr.mxu0 0.0
        %843 = vmatpush1.msra.mxu0 0.0
        %844 = vmatprep.subr.mxu0 0.0
        %845 = vmatpush1.msra.mxu0 0.0
        %846 = vmatprep.subr.mxu0 0.0
        %847 = vmatpush1.msra.mxu0 0.0
        %848 = vmatprep.subr.mxu0 0.0
        %849 = vmatpush1.msra.mxu0 0.0
        %850 = vmatprep.mubr.f32.mxu0 0.0
        %v851 = vand.u32 %v767, 4294901760
        %v852 = vsub.f32 %v767, %v851
        %v853 = vand.u32 %v852, 4294901760
        %v854 = vsub.f32 %v852, %v853
        %v855 = vand.u32 %v854, 4294901760
        %856 = vmatmul.mubr.f32.gmra.mrb[0].mxu0 %v855
        %v857 = vpop.f32.mrb[0].mxu0
        %v858 = vadd.f32 %v748, %v857
        %v859 = vpop.f32.mrb[0].mxu0
        %v860 = vadd.f32 %v748, %v859
        %861 = vmatprep.mubr.f32.mxu0 0.0
        %v862 = vand.u32 %v770, 4294901760
        %v863 = vsub.f32 %v770, %v862
        %v864 = vand.u32 %v863, 4294901760
        %v865 = vsub.f32 %v863, %v864
        %v866 = vand.u32 %v865, 4294901760
        %867 = vmatmul.mubr.f32.gmra.mrb[0].mxu0 %v866
        %v868 = vpop.f32.mrb[0].mxu0
        %v869 = vadd.f32 %v753, %v868
        %v870 = vpop.f32.mrb[0].mxu0
        %v871 = vadd.f32 %v753, %v870
        %872 = vmatprep.mubr.f32.mxu0 0.0
        %v873 = vand.u32 %v773, 4294901760
        %v874 = vsub.f32 %v773, %v873
        %v875 = vand.u32 %v874, 4294901760
        %v876 = vsub.f32 %v874, %v875
        %v877 = vand.u32 %v876, 4294901760
        %878 = vmatmul.mubr.f32.gmra.mrb[0].mxu0 %v877
        %v879 = vpop.f32.mrb[0].mxu0
        %v880 = vadd.f32 %v758, %v879
        %v881 = vpop.f32.mrb[0].mxu0
        %v882 = vadd.f32 %v758, %v881
        %883 = vmatprep.mubr.f32.mxu0 0.0
        %v884 = vand.u32 %v776, 4294901760
        %v885 = vsub.f32 %v776, %v884
        %v886 = vand.u32 %v885, 4294901760
        %v887 = vsub.f32 %v885, %v886
        %v888 = vand.u32 %v887, 4294901760
        %889 = vmatmul.mubr.f32.gmra.mrb[0].mxu0 %v888
        %v890 = vpop.f32.mrb[0].mxu0
        %v891 = vadd.f32 %v763, %v890
        %v892 = vpop.f32.mrb[0].mxu0
        %v893 = vadd.f32 %v763, %v892
        %894 = vdwg.mxu0
        %v895 = vand.u32 %v722, 4294901760
        %v896 = vsub.f32 %v722, %v895
        %v897 = vand.u32 %v896, 4294901760
        %v898 = vsub.f32 %v896, %v897
        %v899 = vand.u32 %v898, 4294901760
        %900 = vmatprep.subr.mxu0 %v899
        %v901 = vand.u32 %v721, 4294901760
        %v902 = vsub.f32 %v721, %v901
        %v903 = vand.u32 %v902, 4294901760
        %v904 = vsub.f32 %v902, %v903
        %v905 = vand.u32 %v904, 4294901760
        %906 = vmatpush1.msra.mxu0 %v905
        %v907 = vand.u32 %v726, 4294901760
        %v908 = vsub.f32 %v726, %v907
        %v909 = vand.u32 %v908, 4294901760
        %v910 = vsub.f32 %v908, %v909
        %v911 = vand.u32 %v910, 4294901760
        %912 = vmatprep.subr.mxu0 %v911
        %v913 = vand.u32 %v725, 4294901760
        %v914 = vsub.f32 %v725, %v913
        %v915 = vand.u32 %v914, 4294901760
        %v916 = vsub.f32 %v914, %v915
        %v917 = vand.u32 %v916, 4294901760
        %918 = vmatpush1.msra.mxu0 %v917
        %v919 = vand.u32 %v730, 4294901760
        %v920 = vsub.f32 %v730, %v919
        %v921 = vand.u32 %v920, 4294901760
        %v922 = vsub.f32 %v920, %v921
        %v923 = vand.u32 %v922, 4294901760
        %924 = vmatprep.subr.mxu0 %v923
        %v925 = vand.u32 %v729, 4294901760
        %v926 = vsub.f32 %v729, %v925
        %v927 = vand.u32 %v926, 4294901760
        %v928 = vsub.f32 %v926, %v927
        %v929 = vand.u32 %v928, 4294901760
        %930 = vmatpush1.msra.mxu0 %v929
        %v931 = vand.u32 %v734, 4294901760
        %v932 = vsub.f32 %v734, %v931
        %v933 = vand.u32 %v932, 4294901760
        %v934 = vsub.f32 %v932, %v933
        %v935 = vand.u32 %v934, 4294901760
        %936 = vmatprep.subr.mxu0 %v935
        %v937 = vand.u32 %v733, 4294901760
        %v938 = vsub.f32 %v733, %v937
        %v939 = vand.u32 %v938, 4294901760
        %v940 = vsub.f32 %v938, %v939
        %v941 = vand.u32 %v940, 4294901760
        %942 = vmatpush1.msra.mxu0 %v941
        %943 = vmatprep.subr.mxu0 0.0
        %944 = vmatpush1.msra.mxu0 0.0
        %945 = vmatprep.subr.mxu0 0.0
        %946 = vmatpush1.msra.mxu0 0.0
        %947 = vmatprep.subr.mxu0 0.0
        %948 = vmatpush1.msra.mxu0 0.0
        %949 = vmatprep.subr.mxu0 0.0
        %950 = vmatpush1.msra.mxu0 0.0
        %951 = vmatprep.subr.mxu0 0.0
        %952 = vmatpush1.msra.mxu0 0.0
        %953 = vmatprep.subr.mxu0 0.0
        %954 = vmatpush1.msra.mxu0 0.0
        %955 = vmatprep.subr.mxu0 0.0
        %956 = vmatpush1.msra.mxu0 0.0
        %957 = vmatprep.subr.mxu0 0.0
        %958 = vmatpush1.msra.mxu0 0.0
        %959 = vmatprep.subr.mxu0 0.0
        %960 = vmatpush1.msra.mxu0 0.0
        %961 = vmatprep.subr.mxu0 0.0
        %962 = vmatpush1.msra.mxu0 0.0
        %963 = vmatprep.subr.mxu0 0.0
        %964 = vmatpush1.msra.mxu0 0.0
        %965 = vmatprep.subr.mxu0 0.0
        %966 = vmatpush1.msra.mxu0 0.0
        %967 = vmatprep.subr.mxu0 0.0
        %968 = vmatpush1.msra.mxu0 0.0
        %969 = vmatprep.subr.mxu0 0.0
        %970 = vmatpush1.msra.mxu0 0.0
        %971 = vmatprep.subr.mxu0 0.0
        %972 = vmatpush1.msra.mxu0 0.0
        %973 = vmatprep.subr.mxu0 0.0
        %974 = vmatpush1.msra.mxu0 0.0
        %975 = vmatprep.subr.mxu0 0.0
        %976 = vmatpush1.msra.mxu0 0.0
        %977 = vmatprep.subr.mxu0 0.0
        %978 = vmatpush1.msra.mxu0 0.0
        %979 = vmatprep.subr.mxu0 0.0
        %980 = vmatpush1.msra.mxu0 0.0
        %981 = vmatprep.subr.mxu0 0.0
        %982 = vmatpush1.msra.mxu0 0.0
        %983 = vmatprep.subr.mxu0 0.0
        %984 = vmatpush1.msra.mxu0 0.0
        %985 = vmatprep.subr.mxu0 0.0
        %986 = vmatpush1.msra.mxu0 0.0
        %987 = vmatprep.subr.mxu0 0.0
        %988 = vmatpush1.msra.mxu0 0.0
        %989 = vmatprep.subr.mxu0 0.0
        %990 = vmatpush1.msra.mxu0 0.0
        %991 = vmatprep.subr.mxu0 0.0
        %992 = vmatpush1.msra.mxu0 0.0
        %993 = vmatprep.subr.mxu0 0.0
        %994 = vmatpush1.msra.mxu0 0.0
        %995 = vmatprep.subr.mxu0 0.0
        %996 = vmatpush1.msra.mxu0 0.0
        %997 = vmatprep.subr.mxu0 0.0
        %998 = vmatpush1.msra.mxu0 0.0
        %999 = vmatprep.mubr.f32.mxu0 0.0
        %v1000 = vand.u32 %v767, 4294901760
        %1001 = vmatmul.mubr.f32.gmra.mrb[0].mxu0 %v1000
        %v1002 = vpop.f32.mrb[0].mxu0
        %v1003 = vadd.f32 %v858, %v1002
        %v1004 = vpop.f32.mrb[0].mxu0
        %v1005 = vadd.f32 %v860, %v1004
        %1006 = vmatprep.mubr.f32.mxu0 0.0
        %v1007 = vand.u32 %v770, 4294901760
        %1008 = vmatmul.mubr.f32.gmra.mrb[0].mxu0 %v1007
        %v1009 = vpop.f32.mrb[0].mxu0
        %v1010 = vadd.f32 %v869, %v1009
        %v1011 = vpop.f32.mrb[0].mxu0
        %v1012 = vadd.f32 %v871, %v1011
        %1013 = vmatprep.mubr.f32.mxu0 0.0
        %v1014 = vand.u32 %v773, 4294901760
        %1015 = vmatmul.mubr.f32.gmra.mrb[0].mxu0 %v1014
        %v1016 = vpop.f32.mrb[0].mxu0
        %v1017 = vadd.f32 %v880, %v1016
        %v1018 = vpop.f32.mrb[0].mxu0
        %v1019 = vadd.f32 %v882, %v1018
        %1020 = vmatprep.mubr.f32.mxu0 0.0
        %v1021 = vand.u32 %v776, 4294901760
        %1022 = vmatmul.mubr.f32.gmra.mrb[0].mxu0 %v1021
        %v1023 = vpop.f32.mrb[0].mxu0
        %v1024 = vadd.f32 %v891, %v1023
        %v1025 = vpop.f32.mrb[0].mxu0
        %v1026 = vadd.f32 %v893, %v1025
        %1027 = vdwg.mxu0
        %v1028 = vand.u32 %v722, 4294901760
        %v1029 = vsub.f32 %v722, %v1028
        %1030 = vmatprep.subr.mxu0 %v1029
        %v1031 = vand.u32 %v721, 4294901760
        %v1032 = vsub.f32 %v721, %v1031
        %1033 = vmatpush1.msra.mxu0 %v1032
        %v1034 = vand.u32 %v726, 4294901760
        %v1035 = vsub.f32 %v726, %v1034
        %1036 = vmatprep.subr.mxu0 %v1035
        %v1037 = vand.u32 %v725, 4294901760
        %v1038 = vsub.f32 %v725, %v1037
        %1039 = vmatpush1.msra.mxu0 %v1038
        %v1040 = vand.u32 %v730, 4294901760
        %v1041 = vsub.f32 %v730, %v1040
        %1042 = vmatprep.subr.mxu0 %v1041
        %v1043 = vand.u32 %v729, 4294901760
        %v1044 = vsub.f32 %v729, %v1043
        %1045 = vmatpush1.msra.mxu0 %v1044
        %v1046 = vand.u32 %v734, 4294901760
        %v1047 = vsub.f32 %v734, %v1046
        %1048 = vmatprep.subr.mxu0 %v1047
        %v1049 = vand.u32 %v733, 4294901760
        %v1050 = vsub.f32 %v733, %v1049
        %1051 = vmatpush1.msra.mxu0 %v1050
        %1052 = vmatprep.subr.mxu0 0.0
        %1053 = vmatpush1.msra.mxu0 0.0
        %1054 = vmatprep.subr.mxu0 0.0
        %1055 = vmatpush1.msra.mxu0 0.0
        %1056 = vmatprep.subr.mxu0 0.0
        %1057 = vmatpush1.msra.mxu0 0.0
        %1058 = vmatprep.subr.mxu0 0.0
        %1059 = vmatpush1.msra.mxu0 0.0
        %1060 = vmatprep.subr.mxu0 0.0
        %1061 = vmatpush1.msra.mxu0 0.0
        %1062 = vmatprep.subr.mxu0 0.0
        %1063 = vmatpush1.msra.mxu0 0.0
        %1064 = vmatprep.subr.mxu0 0.0
        %1065 = vmatpush1.msra.mxu0 0.0
        %1066 = vmatprep.subr.mxu0 0.0
        %1067 = vmatpush1.msra.mxu0 0.0
        %1068 = vmatprep.subr.mxu0 0.0
        %1069 = vmatpush1.msra.mxu0 0.0
        %1070 = vmatprep.subr.mxu0 0.0
        %1071 = vmatpush1.msra.mxu0 0.0
        %1072 = vmatprep.subr.mxu0 0.0
        %1073 = vmatpush1.msra.mxu0 0.0
        %1074 = vmatprep.subr.mxu0 0.0
        %1075 = vmatpush1.msra.mxu0 0.0
        %1076 = vmatprep.subr.mxu0 0.0
        %1077 = vmatpush1.msra.mxu0 0.0
        %1078 = vmatprep.subr.mxu0 0.0
        %1079 = vmatpush1.msra.mxu0 0.0
        %1080 = vmatprep.subr.mxu0 0.0
        %1081 = vmatpush1.msra.mxu0 0.0
        %1082 = vmatprep.subr.mxu0 0.0
        %1083 = vmatpush1.msra.mxu0 0.0
        %1084 = vmatprep.subr.mxu0 0.0
        %1085 = vmatpush1.msra.mxu0 0.0
        %1086 = vmatprep.subr.mxu0 0.0
        %1087 = vmatpush1.msra.mxu0 0.0
        %1088 = vmatprep.subr.mxu0 0.0
        %1089 = vmatpush1.msra.mxu0 0.0
        %1090 = vmatprep.subr.mxu0 0.0
        %1091 = vmatpush1.msra.mxu0 0.0
        %1092 = vmatprep.subr.mxu0 0.0
        %1093 = vmatpush1.msra.mxu0 0.0
        %1094 = vmatprep.subr.mxu0 0.0
        %1095 = vmatpush1.msra.mxu0 0.0
        %1096 = vmatprep.subr.mxu0 0.0
        %1097 = vmatpush1.msra.mxu0 0.0
        %1098 = vmatprep.subr.mxu0 0.0
        %1099 = vmatpush1.msra.mxu0 0.0
        %1100 = vmatprep.subr.mxu0 0.0
        %1101 = vmatpush1.msra.mxu0 0.0
        %1102 = vmatprep.subr.mxu0 0.0
        %1103 = vmatpush1.msra.mxu0 0.0
        %1104 = vmatprep.subr.mxu0 0.0
        %1105 = vmatpush1.msra.mxu0 0.0
        %1106 = vmatprep.subr.mxu0 0.0
        %1107 = vmatpush1.msra.mxu0 0.0
        %1108 = vmatprep.mubr.f32.mxu0 0.0
        %v1109 = vand.u32 %v767, 4294901760
        %v1110 = vsub.f32 %v767, %v1109
        %1111 = vmatmul.mubr.f32.gmra.mrb[0].mxu0 %v1110
        %v1112 = vpop.f32.mrb[0].mxu0
        %v1113 = vadd.f32 %v1003, %v1112
        %v1114 = vpop.f32.mrb[0].mxu0
        %v1115 = vadd.f32 %v1005, %v1114
        %1116 = vmatprep.mubr.f32.mxu0 0.0
        %v1117 = vand.u32 %v770, 4294901760
        %v1118 = vsub.f32 %v770, %v1117
        %1119 = vmatmul.mubr.f32.gmra.mrb[0].mxu0 %v1118
        %v1120 = vpop.f32.mrb[0].mxu0
        %v1121 = vadd.f32 %v1010, %v1120
        %v1122 = vpop.f32.mrb[0].mxu0
        %v1123 = vadd.f32 %v1012, %v1122
        %1124 = vmatprep.mubr.f32.mxu0 0.0
        %v1125 = vand.u32 %v773, 4294901760
        %v1126 = vsub.f32 %v773, %v1125
        %1127 = vmatmul.mubr.f32.gmra.mrb[0].mxu0 %v1126
        %v1128 = vpop.f32.mrb[0].mxu0
        %v1129 = vadd.f32 %v1017, %v1128
        %v1130 = vpop.f32.mrb[0].mxu0
        %v1131 = vadd.f32 %v1019, %v1130
        %1132 = vmatprep.mubr.f32.mxu0 0.0
        %v1133 = vand.u32 %v776, 4294901760
        %v1134 = vsub.f32 %v776, %v1133
        %1135 = vmatmul.mubr.f32.gmra.mrb[0].mxu0 %v1134
        %v1136 = vpop.f32.mrb[0].mxu0
        %v1137 = vadd.f32 %v1024, %v1136
        %v1138 = vpop.f32.mrb[0].mxu0
        %v1139 = vadd.f32 %v1026, %v1138
        %1140 = vdwg.mxu0
        %v1141 = vand.u32 %v722, 4294901760
        %1142 = vmatprep.subr.mxu0 %v1141
        %v1143 = vand.u32 %v721, 4294901760
        %1144 = vmatpush1.msra.mxu0 %v1143
        %v1145 = vand.u32 %v726, 4294901760
        %1146 = vmatprep.subr.mxu0 %v1145
        %v1147 = vand.u32 %v725, 4294901760
        %1148 = vmatpush1.msra.mxu0 %v1147
        %v1149 = vand.u32 %v730, 4294901760
        %1150 = vmatprep.subr.mxu0 %v1149
        %v1151 = vand.u32 %v729, 4294901760
        %1152 = vmatpush1.msra.mxu0 %v1151
        %v1153 = vand.u32 %v734, 4294901760
        %1154 = vmatprep.subr.mxu0 %v1153
        %v1155 = vand.u32 %v733, 4294901760
        %1156 = vmatpush1.msra.mxu0 %v1155
        %1157 = vmatprep.subr.mxu0 0.0
        %1158 = vmatpush1.msra.mxu0 0.0
        %1159 = vmatprep.subr.mxu0 0.0
        %1160 = vmatpush1.msra.mxu0 0.0
        %1161 = vmatprep.subr.mxu0 0.0
        %1162 = vmatpush1.msra.mxu0 0.0
        %1163 = vmatprep.subr.mxu0 0.0
        %1164 = vmatpush1.msra.mxu0 0.0
        %1165 = vmatprep.subr.mxu0 0.0
        %1166 = vmatpush1.msra.mxu0 0.0
        %1167 = vmatprep.subr.mxu0 0.0
        %1168 = vmatpush1.msra.mxu0 0.0
        %1169 = vmatprep.subr.mxu0 0.0
        %1170 = vmatpush1.msra.mxu0 0.0
        %1171 = vmatprep.subr.mxu0 0.0
        %1172 = vmatpush1.msra.mxu0 0.0
        %1173 = vmatprep.subr.mxu0 0.0
        %1174 = vmatpush1.msra.mxu0 0.0
        %1175 = vmatprep.subr.mxu0 0.0
        %1176 = vmatpush1.msra.mxu0 0.0
        %1177 = vmatprep.subr.mxu0 0.0
        %1178 = vmatpush1.msra.mxu0 0.0
        %1179 = vmatprep.subr.mxu0 0.0
        %1180 = vmatpush1.msra.mxu0 0.0
        %1181 = vmatprep.subr.mxu0 0.0
        %1182 = vmatpush1.msra.mxu0 0.0
        %1183 = vmatprep.subr.mxu0 0.0
        %1184 = vmatpush1.msra.mxu0 0.0
        %1185 = vmatprep.subr.mxu0 0.0
        %1186 = vmatpush1.msra.mxu0 0.0
        %1187 = vmatprep.subr.mxu0 0.0
        %1188 = vmatpush1.msra.mxu0 0.0
        %1189 = vmatprep.subr.mxu0 0.0
        %1190 = vmatpush1.msra.mxu0 0.0
        %1191 = vmatprep.subr.mxu0 0.0
        %1192 = vmatpush1.msra.mxu0 0.0
        %1193 = vmatprep.subr.mxu0 0.0
        %1194 = vmatpush1.msra.mxu0 0.0
        %1195 = vmatprep.subr.mxu0 0.0
        %1196 = vmatpush1.msra.mxu0 0.0
        %1197 = vmatprep.subr.mxu0 0.0
        %1198 = vmatpush1.msra.mxu0 0.0
        %1199 = vmatprep.subr.mxu0 0.0
        %1200 = vmatpush1.msra.mxu0 0.0
        %1201 = vmatprep.subr.mxu0 0.0
        %1202 = vmatpush1.msra.mxu0 0.0
        %1203 = vmatprep.subr.mxu0 0.0
        %1204 = vmatpush1.msra.mxu0 0.0
        %1205 = vmatprep.subr.mxu0 0.0
        %1206 = vmatpush1.msra.mxu0 0.0
        %1207 = vmatprep.subr.mxu0 0.0
        %1208 = vmatpush1.msra.mxu0 0.0
        %1209 = vmatprep.subr.mxu0 0.0
        %1210 = vmatpush1.msra.mxu0 0.0
        %1211 = vmatprep.subr.mxu0 0.0
        %1212 = vmatpush1.msra.mxu0 0.0
        %1213 = vmatprep.mubr.f32.mxu0 0.0
        %v1214 = vand.u32 %v767, 4294901760
        %v1215 = vsub.f32 %v767, %v1214
        %v1216 = vand.u32 %v1215, 4294901760
        %1217 = vmatmul.mubr.f32.gmra.mrb[0].mxu0 %v1216
        %v1218 = vpop.f32.mrb[0].mxu0
        %v1219 = vadd.f32 %v1113, %v1218
        %v1220 = vpop.f32.mrb[0].mxu0
        %v1221 = vadd.f32 %v1115, %v1220
        %1222 = vmatprep.mubr.f32.mxu0 0.0
        %v1223 = vand.u32 %v770, 4294901760
        %v1224 = vsub.f32 %v770, %v1223
        %v1225 = vand.u32 %v1224, 4294901760
        %1226 = vmatmul.mubr.f32.gmra.mrb[0].mxu0 %v1225
        %v1227 = vpop.f32.mrb[0].mxu0
        %v1228 = vadd.f32 %v1121, %v1227
        %v1229 = vpop.f32.mrb[0].mxu0
        %v1230 = vadd.f32 %v1123, %v1229
        %1231 = vmatprep.mubr.f32.mxu0 0.0
        %v1232 = vand.u32 %v773, 4294901760
        %v1233 = vsub.f32 %v773, %v1232
        %v1234 = vand.u32 %v1233, 4294901760
        %1235 = vmatmul.mubr.f32.gmra.mrb[0].mxu0 %v1234
        %v1236 = vpop.f32.mrb[0].mxu0
        %v1237 = vadd.f32 %v1129, %v1236
        %v1238 = vpop.f32.mrb[0].mxu0
        %v1239 = vadd.f32 %v1131, %v1238
        %1240 = vmatprep.mubr.f32.mxu0 0.0
        %v1241 = vand.u32 %v776, 4294901760
        %v1242 = vsub.f32 %v776, %v1241
        %v1243 = vand.u32 %v1242, 4294901760
        %1244 = vmatmul.mubr.f32.gmra.mrb[0].mxu0 %v1243
        %v1245 = vpop.f32.mrb[0].mxu0
        %v1246 = vadd.f32 %v1137, %v1245
        %v1247 = vpop.f32.mrb[0].mxu0
        %v1248 = vadd.f32 %v1139, %v1247
        %1249 = vdwg.mxu0
        %v1250 = vand.u32 %v722, 4294901760
        %v1251 = vsub.f32 %v722, %v1250
        %v1252 = vand.u32 %v1251, 4294901760
        %1253 = vmatprep.subr.mxu0 %v1252
        %v1254 = vand.u32 %v721, 4294901760
        %v1255 = vsub.f32 %v721, %v1254
        %v1256 = vand.u32 %v1255, 4294901760
        %1257 = vmatpush1.msra.mxu0 %v1256
        %v1258 = vand.u32 %v726, 4294901760
        %v1259 = vsub.f32 %v726, %v1258
        %v1260 = vand.u32 %v1259, 4294901760
        %1261 = vmatprep.subr.mxu0 %v1260
        %v1262 = vand.u32 %v725, 4294901760
        %v1263 = vsub.f32 %v725, %v1262
        %v1264 = vand.u32 %v1263, 4294901760
        %1265 = vmatpush1.msra.mxu0 %v1264
        %v1266 = vand.u32 %v730, 4294901760
        %v1267 = vsub.f32 %v730, %v1266
        %v1268 = vand.u32 %v1267, 4294901760
        %1269 = vmatprep.subr.mxu0 %v1268
        %v1270 = vand.u32 %v729, 4294901760
        %v1271 = vsub.f32 %v729, %v1270
        %v1272 = vand.u32 %v1271, 4294901760
        %1273 = vmatpush1.msra.mxu0 %v1272
        %v1274 = vand.u32 %v734, 4294901760
        %v1275 = vsub.f32 %v734, %v1274
        %v1276 = vand.u32 %v1275, 4294901760
        %1277 = vmatprep.subr.mxu0 %v1276
        %v1278 = vand.u32 %v733, 4294901760
        %v1279 = vsub.f32 %v733, %v1278
        %v1280 = vand.u32 %v1279, 4294901760
        %1281 = vmatpush1.msra.mxu0 %v1280
        %1282 = vmatprep.subr.mxu0 0.0
        %1283 = vmatpush1.msra.mxu0 0.0
        %1284 = vmatprep.subr.mxu0 0.0
        %1285 = vmatpush1.msra.mxu0 0.0
        %1286 = vmatprep.subr.mxu0 0.0
        %1287 = vmatpush1.msra.mxu0 0.0
        %1288 = vmatprep.subr.mxu0 0.0
        %1289 = vmatpush1.msra.mxu0 0.0
        %1290 = vmatprep.subr.mxu0 0.0
        %1291 = vmatpush1.msra.mxu0 0.0
        %1292 = vmatprep.subr.mxu0 0.0
        %1293 = vmatpush1.msra.mxu0 0.0
        %1294 = vmatprep.subr.mxu0 0.0
        %1295 = vmatpush1.msra.mxu0 0.0
        %1296 = vmatprep.subr.mxu0 0.0
        %1297 = vmatpush1.msra.mxu0 0.0
        %1298 = vmatprep.subr.mxu0 0.0
        %1299 = vmatpush1.msra.mxu0 0.0
        %1300 = vmatprep.subr.mxu0 0.0
        %1301 = vmatpush1.msra.mxu0 0.0
        %1302 = vmatprep.subr.mxu0 0.0
        %1303 = vmatpush1.msra.mxu0 0.0
        %1304 = vmatprep.subr.mxu0 0.0
        %1305 = vmatpush1.msra.mxu0 0.0
        %1306 = vmatprep.subr.mxu0 0.0
        %1307 = vmatpush1.msra.mxu0 0.0
        %1308 = vmatprep.subr.mxu0 0.0
        %1309 = vmatpush1.msra.mxu0 0.0
        %1310 = vmatprep.subr.mxu0 0.0
        %1311 = vmatpush1.msra.mxu0 0.0
        %1312 = vmatprep.subr.mxu0 0.0
        %1313 = vmatpush1.msra.mxu0 0.0
        %1314 = vmatprep.subr.mxu0 0.0
        %1315 = vmatpush1.msra.mxu0 0.0
        %1316 = vmatprep.subr.mxu0 0.0
        %1317 = vmatpush1.msra.mxu0 0.0
        %1318 = vmatprep.subr.mxu0 0.0
        %1319 = vmatpush1.msra.mxu0 0.0
        %1320 = vmatprep.subr.mxu0 0.0
        %1321 = vmatpush1.msra.mxu0 0.0
        %1322 = vmatprep.subr.mxu0 0.0
        %1323 = vmatpush1.msra.mxu0 0.0
        %1324 = vmatprep.subr.mxu0 0.0
        %1325 = vmatpush1.msra.mxu0 0.0
        %1326 = vmatprep.subr.mxu0 0.0
        %1327 = vmatpush1.msra.mxu0 0.0
        %1328 = vmatprep.subr.mxu0 0.0
        %1329 = vmatpush1.msra.mxu0 0.0
        %1330 = vmatprep.subr.mxu0 0.0
        %1331 = vmatpush1.msra.mxu0 0.0
        %1332 = vmatprep.subr.mxu0 0.0
        %1333 = vmatpush1.msra.mxu0 0.0
        %1334 = vmatprep.subr.mxu0 0.0
        %1335 = vmatpush1.msra.mxu0 0.0
        %1336 = vmatprep.subr.mxu0 0.0
        %1337 = vmatpush1.msra.mxu0 0.0
        %1338 = vmatprep.mubr.f32.mxu0 0.0
        %v1339 = vand.u32 %v767, 4294901760
        %1340 = vmatmul.mubr.f32.gmra.mrb[0].mxu0 %v1339
        %v1341 = vpop.f32.mrb[0].mxu0
        %v1342 = vadd.f32 %v1219, %v1341
        %v1343 = vpop.f32.mrb[0].mxu0
        %v1344 = vadd.f32 %v1221, %v1343
        %1345 = vmatprep.mubr.f32.mxu0 0.0
        %v1346 = vand.u32 %v770, 4294901760
        %1347 = vmatmul.mubr.f32.gmra.mrb[0].mxu0 %v1346
        %v1348 = vpop.f32.mrb[0].mxu0
        %v1349 = vadd.f32 %v1228, %v1348
        %v1350 = vpop.f32.mrb[0].mxu0
        %v1351 = vadd.f32 %v1230, %v1350
        %1352 = vmatprep.mubr.f32.mxu0 0.0
        %v1353 = vand.u32 %v773, 4294901760
        %1354 = vmatmul.mubr.f32.gmra.mrb[0].mxu0 %v1353
        %v1355 = vpop.f32.mrb[0].mxu0
        %v1356 = vadd.f32 %v1237, %v1355
        %v1357 = vpop.f32.mrb[0].mxu0
        %v1358 = vadd.f32 %v1239, %v1357
        %1359 = vmatprep.mubr.f32.mxu0 0.0
        %v1360 = vand.u32 %v776, 4294901760
        %1361 = vmatmul.mubr.f32.gmra.mrb[0].mxu0 %v1360
        %v1362 = vpop.f32.mrb[0].mxu0
        %v1363 = vadd.f32 %v1246, %v1362
        %v1364 = vpop.f32.mrb[0].mxu0
        %v1365 = vadd.f32 %v1248, %v1364
        %1366 = vdwg.mxu0
        %v1367 = vand.u32 %v722, 4294901760
        %1368 = vmatprep.subr.mxu0 %v1367
        %v1369 = vand.u32 %v721, 4294901760
        %1370 = vmatpush1.msra.mxu0 %v1369
        %v1371 = vand.u32 %v726, 4294901760
        %1372 = vmatprep.subr.mxu0 %v1371
        %v1373 = vand.u32 %v725, 4294901760
        %1374 = vmatpush1.msra.mxu0 %v1373
        %v1375 = vand.u32 %v730, 4294901760
        %1376 = vmatprep.subr.mxu0 %v1375
        %v1377 = vand.u32 %v729, 4294901760
        %1378 = vmatpush1.msra.mxu0 %v1377
        %v1379 = vand.u32 %v734, 4294901760
        %1380 = vmatprep.subr.mxu0 %v1379
        %v1381 = vand.u32 %v733, 4294901760
        %1382 = vmatpush1.msra.mxu0 %v1381
        %1383 = vmatprep.subr.mxu0 0.0
        %1384 = vmatpush1.msra.mxu0 0.0
        %1385 = vmatprep.subr.mxu0 0.0
        %1386 = vmatpush1.msra.mxu0 0.0
        %1387 = vmatprep.subr.mxu0 0.0
        %1388 = vmatpush1.msra.mxu0 0.0
        %1389 = vmatprep.subr.mxu0 0.0
        %1390 = vmatpush1.msra.mxu0 0.0
        %1391 = vmatprep.subr.mxu0 0.0
        %1392 = vmatpush1.msra.mxu0 0.0
        %1393 = vmatprep.subr.mxu0 0.0
        %1394 = vmatpush1.msra.mxu0 0.0
        %1395 = vmatprep.subr.mxu0 0.0
        %1396 = vmatpush1.msra.mxu0 0.0
        %1397 = vmatprep.subr.mxu0 0.0
        %1398 = vmatpush1.msra.mxu0 0.0
        %1399 = vmatprep.subr.mxu0 0.0
        %1400 = vmatpush1.msra.mxu0 0.0
        %1401 = vmatprep.subr.mxu0 0.0
        %1402 = vmatpush1.msra.mxu0 0.0
        %1403 = vmatprep.subr.mxu0 0.0
        %1404 = vmatpush1.msra.mxu0 0.0
        %1405 = vmatprep.subr.mxu0 0.0
        %1406 = vmatpush1.msra.mxu0 0.0
        %1407 = vmatprep.subr.mxu0 0.0
        %1408 = vmatpush1.msra.mxu0 0.0
        %1409 = vmatprep.subr.mxu0 0.0
        %1410 = vmatpush1.msra.mxu0 0.0
        %1411 = vmatprep.subr.mxu0 0.0
        %1412 = vmatpush1.msra.mxu0 0.0
        %1413 = vmatprep.subr.mxu0 0.0
        %1414 = vmatpush1.msra.mxu0 0.0
        %1415 = vmatprep.subr.mxu0 0.0
        %1416 = vmatpush1.msra.mxu0 0.0
        %1417 = vmatprep.subr.mxu0 0.0
        %1418 = vmatpush1.msra.mxu0 0.0
        %1419 = vmatprep.subr.mxu0 0.0
        %1420 = vmatpush1.msra.mxu0 0.0
        %1421 = vmatprep.subr.mxu0 0.0
        %1422 = vmatpush1.msra.mxu0 0.0
        %1423 = vmatprep.subr.mxu0 0.0
        %1424 = vmatpush1.msra.mxu0 0.0
        %1425 = vmatprep.subr.mxu0 0.0
        %1426 = vmatpush1.msra.mxu0 0.0
        %1427 = vmatprep.subr.mxu0 0.0
        %1428 = vmatpush1.msra.mxu0 0.0
        %1429 = vmatprep.subr.mxu0 0.0
        %1430 = vmatpush1.msra.mxu0 0.0
        %1431 = vmatprep.subr.mxu0 0.0
        %1432 = vmatpush1.msra.mxu0 0.0
        %1433 = vmatprep.subr.mxu0 0.0
        %1434 = vmatpush1.msra.mxu0 0.0
        %1435 = vmatprep.subr.mxu0 0.0
        %1436 = vmatpush1.msra.mxu0 0.0
        %1437 = vmatprep.subr.mxu0 0.0
        %1438 = vmatpush1.msra.mxu0 0.0
        %1439 = vmatprep.mubr.f32.mxu0 0.0
        %v1440 = vand.u32 %v767, 4294901760
        %1441 = vmatmul.mubr.f32.gmra.mrb[0].mxu0 %v1440
        %v1442 = vpop.f32.mrb[0].mxu0
        %v1443 = vadd.f32 %v1342, %v1442
        %v1444 = vpop.f32.mrb[0].mxu0
        %v1445 = vadd.f32 %v1344, %v1444
        %1446 = vmatprep.mubr.f32.mxu0 0.0
        %v1447 = vand.u32 %v770, 4294901760
        %1448 = vmatmul.mubr.f32.gmra.mrb[0].mxu0 %v1447
        %v1449 = vpop.f32.mrb[0].mxu0
        %v1450 = vadd.f32 %v1349, %v1449
        %v1451 = vpop.f32.mrb[0].mxu0
        %v1452 = vadd.f32 %v1351, %v1451
        %1453 = vmatprep.mubr.f32.mxu0 0.0
        %v1454 = vand.u32 %v773, 4294901760
        %1455 = vmatmul.mubr.f32.gmra.mrb[0].mxu0 %v1454
        %v1456 = vpop.f32.mrb[0].mxu0
        %v1457 = vadd.f32 %v1356, %v1456
        %v1458 = vpop.f32.mrb[0].mxu0
        %v1459 = vadd.f32 %v1358, %v1458
        %1460 = vmatprep.mubr.f32.mxu0 0.0
        %v1461 = vand.u32 %v776, 4294901760
        %1462 = vmatmul.mubr.f32.gmra.mrb[0].mxu0 %v1461
        %v1463 = vpop.f32.mrb[0].mxu0
        %v1464 = vadd.f32 %v1363, %v1463
        %v1465 = vpop.f32.mrb[0].mxu0
        %v1466 = vadd.f32 %v1365, %v1465
        %1467 = vdwg.mxu0
        %v1468 = vand.u32 %v724, 4294901760
        %1469 = vmatprep.subr.mxu0 %v1468
        %v1470 = vand.u32 %v723, 4294901760
        %1471 = vmatpush1.msra.mxu0 %v1470
        %v1472 = vand.u32 %v728, 4294901760
        %1473 = vmatprep.subr.mxu0 %v1472
        %v1474 = vand.u32 %v727, 4294901760
        %1475 = vmatpush1.msra.mxu0 %v1474
        %v1476 = vand.u32 %v732, 4294901760
        %1477 = vmatprep.subr.mxu0 %v1476
        %v1478 = vand.u32 %v731, 4294901760
        %1479 = vmatpush1.msra.mxu0 %v1478
        %v1480 = vand.u32 %v736, 4294901760
        %1481 = vmatprep.subr.mxu0 %v1480
        %v1482 = vand.u32 %v735, 4294901760
        %1483 = vmatpush1.msra.mxu0 %v1482
        %1484 = vmatprep.subr.mxu0 0.0
        %1485 = vmatpush1.msra.mxu0 0.0
        %1486 = vmatprep.subr.mxu0 0.0
        %1487 = vmatpush1.msra.mxu0 0.0
        %1488 = vmatprep.subr.mxu0 0.0
        %1489 = vmatpush1.msra.mxu0 0.0
        %1490 = vmatprep.subr.mxu0 0.0
        %1491 = vmatpush1.msra.mxu0 0.0
        %1492 = vmatprep.subr.mxu0 0.0
        %1493 = vmatpush1.msra.mxu0 0.0
        %1494 = vmatprep.subr.mxu0 0.0
        %1495 = vmatpush1.msra.mxu0 0.0
        %1496 = vmatprep.subr.mxu0 0.0
        %1497 = vmatpush1.msra.mxu0 0.0
        %1498 = vmatprep.subr.mxu0 0.0
        %1499 = vmatpush1.msra.mxu0 0.0
        %1500 = vmatprep.subr.mxu0 0.0
        %1501 = vmatpush1.msra.mxu0 0.0
        %1502 = vmatprep.subr.mxu0 0.0
        %1503 = vmatpush1.msra.mxu0 0.0
        %1504 = vmatprep.subr.mxu0 0.0
        %1505 = vmatpush1.msra.mxu0 0.0
        %1506 = vmatprep.subr.mxu0 0.0
        %1507 = vmatpush1.msra.mxu0 0.0
        %1508 = vmatprep.subr.mxu0 0.0
        %1509 = vmatpush1.msra.mxu0 0.0
        %1510 = vmatprep.subr.mxu0 0.0
        %1511 = vmatpush1.msra.mxu0 0.0
        %1512 = vmatprep.subr.mxu0 0.0
        %1513 = vmatpush1.msra.mxu0 0.0
        %1514 = vmatprep.subr.mxu0 0.0
        %1515 = vmatpush1.msra.mxu0 0.0
        %1516 = vmatprep.subr.mxu0 0.0
        %1517 = vmatpush1.msra.mxu0 0.0
        %1518 = vmatprep.subr.mxu0 0.0
        %1519 = vmatpush1.msra.mxu0 0.0
        %1520 = vmatprep.subr.mxu0 0.0
        %1521 = vmatpush1.msra.mxu0 0.0
        %1522 = vmatprep.subr.mxu0 0.0
        %1523 = vmatpush1.msra.mxu0 0.0
        %1524 = vmatprep.subr.mxu0 0.0
        %1525 = vmatpush1.msra.mxu0 0.0
        %1526 = vmatprep.subr.mxu0 0.0
        %1527 = vmatpush1.msra.mxu0 0.0
        %1528 = vmatprep.subr.mxu0 0.0
        %1529 = vmatpush1.msra.mxu0 0.0
        %1530 = vmatprep.subr.mxu0 0.0
        %1531 = vmatpush1.msra.mxu0 0.0
        %1532 = vmatprep.subr.mxu0 0.0
        %1533 = vmatpush1.msra.mxu0 0.0
        %1534 = vmatprep.subr.mxu0 0.0
        %1535 = vmatpush1.msra.mxu0 0.0
        %1536 = vmatprep.subr.mxu0 0.0
        %1537 = vmatpush1.msra.mxu0 0.0
        %1538 = vmatprep.subr.mxu0 0.0
        %1539 = vmatpush1.msra.mxu0 0.0
        %1540 = vmatprep.mubr.f32.mxu0 0.0
        %v1541 = vand.u32 %v767, 4294901760
        %v1542 = vsub.f32 %v767, %v1541
        %v1543 = vand.u32 %v1542, 4294901760
        %v1544 = vsub.f32 %v1542, %v1543
        %v1545 = vand.u32 %v1544, 4294901760
        %1546 = vmatmul.mubr.f32.gmra.mrb[0].mxu0 %v1545
        %v1547 = vpop.f32.mrb[0].mxu0
        %v1548 = vadd.f32 %v748, %v1547
        %v1549 = vpop.f32.mrb[0].mxu0
        %v1550 = vadd.f32 %v748, %v1549
        %1551 = vmatprep.mubr.f32.mxu0 0.0
        %v1552 = vand.u32 %v770, 4294901760
        %v1553 = vsub.f32 %v770, %v1552
        %v1554 = vand.u32 %v1553, 4294901760
        %v1555 = vsub.f32 %v1553, %v1554
        %v1556 = vand.u32 %v1555, 4294901760
        %1557 = vmatmul.mubr.f32.gmra.mrb[0].mxu0 %v1556
        %v1558 = vpop.f32.mrb[0].mxu0
        %v1559 = vadd.f32 %v753, %v1558
        %v1560 = vpop.f32.mrb[0].mxu0
        %v1561 = vadd.f32 %v753, %v1560
        %1562 = vmatprep.mubr.f32.mxu0 0.0
        %v1563 = vand.u32 %v773, 4294901760
        %v1564 = vsub.f32 %v773, %v1563
        %v1565 = vand.u32 %v1564, 4294901760
        %v1566 = vsub.f32 %v1564, %v1565
        %v1567 = vand.u32 %v1566, 4294901760
        %1568 = vmatmul.mubr.f32.gmra.mrb[0].mxu0 %v1567
        %v1569 = vpop.f32.mrb[0].mxu0
        %v1570 = vadd.f32 %v758, %v1569
        %v1571 = vpop.f32.mrb[0].mxu0
        %v1572 = vadd.f32 %v758, %v1571
        %1573 = vmatprep.mubr.f32.mxu0 0.0
        %v1574 = vand.u32 %v776, 4294901760
        %v1575 = vsub.f32 %v776, %v1574
        %v1576 = vand.u32 %v1575, 4294901760
        %v1577 = vsub.f32 %v1575, %v1576
        %v1578 = vand.u32 %v1577, 4294901760
        %1579 = vmatmul.mubr.f32.gmra.mrb[0].mxu0 %v1578
        %v1580 = vpop.f32.mrb[0].mxu0
        %v1581 = vadd.f32 %v763, %v1580
        %v1582 = vpop.f32.mrb[0].mxu0
        %v1583 = vadd.f32 %v763, %v1582
        %1584 = vdwg.mxu0
        %v1585 = vand.u32 %v724, 4294901760
        %v1586 = vsub.f32 %v724, %v1585
        %v1587 = vand.u32 %v1586, 4294901760
        %v1588 = vsub.f32 %v1586, %v1587
        %v1589 = vand.u32 %v1588, 4294901760
        %1590 = vmatprep.subr.mxu0 %v1589
        %v1591 = vand.u32 %v723, 4294901760
        %v1592 = vsub.f32 %v723, %v1591
        %v1593 = vand.u32 %v1592, 4294901760
        %v1594 = vsub.f32 %v1592, %v1593
        %v1595 = vand.u32 %v1594, 4294901760
        %1596 = vmatpush1.msra.mxu0 %v1595
        %v1597 = vand.u32 %v728, 4294901760
        %v1598 = vsub.f32 %v728, %v1597
        %v1599 = vand.u32 %v1598, 4294901760
        %v1600 = vsub.f32 %v1598, %v1599
        %v1601 = vand.u32 %v1600, 4294901760
        %1602 = vmatprep.subr.mxu0 %v1601
        %v1603 = vand.u32 %v727, 4294901760
        %v1604 = vsub.f32 %v727, %v1603
        %v1605 = vand.u32 %v1604, 4294901760
        %v1606 = vsub.f32 %v1604, %v1605
        %v1607 = vand.u32 %v1606, 4294901760
        %1608 = vmatpush1.msra.mxu0 %v1607
        %v1609 = vand.u32 %v732, 4294901760
        %v1610 = vsub.f32 %v732, %v1609
        %v1611 = vand.u32 %v1610, 4294901760
        %v1612 = vsub.f32 %v1610, %v1611
        %v1613 = vand.u32 %v1612, 4294901760
        %1614 = vmatprep.subr.mxu0 %v1613
        %v1615 = vand.u32 %v731, 4294901760
        %v1616 = vsub.f32 %v731, %v1615
        %v1617 = vand.u32 %v1616, 4294901760
        %v1618 = vsub.f32 %v1616, %v1617
        %v1619 = vand.u32 %v1618, 4294901760
        %1620 = vmatpush1.msra.mxu0 %v1619
        %v1621 = vand.u32 %v736, 4294901760
        %v1622 = vsub.f32 %v736, %v1621
        %v1623 = vand.u32 %v1622, 4294901760
        %v1624 = vsub.f32 %v1622, %v1623
        %v1625 = vand.u32 %v1624, 4294901760
        %1626 = vmatprep.subr.mxu0 %v1625
        %v1627 = vand.u32 %v735, 4294901760
        %v1628 = vsub.f32 %v735, %v1627
        %v1629 = vand.u32 %v1628, 4294901760
        %v1630 = vsub.f32 %v1628, %v1629
        %v1631 = vand.u32 %v1630, 4294901760
        %1632 = vmatpush1.msra.mxu0 %v1631
        %1633 = vmatprep.subr.mxu0 0.0
        %1634 = vmatpush1.msra.mxu0 0.0
        %1635 = vmatprep.subr.mxu0 0.0
        %1636 = vmatpush1.msra.mxu0 0.0
        %1637 = vmatprep.subr.mxu0 0.0
        %1638 = vmatpush1.msra.mxu0 0.0
        %1639 = vmatprep.subr.mxu0 0.0
        %1640 = vmatpush1.msra.mxu0 0.0
        %1641 = vmatprep.subr.mxu0 0.0
        %1642 = vmatpush1.msra.mxu0 0.0
        %1643 = vmatprep.subr.mxu0 0.0
        %1644 = vmatpush1.msra.mxu0 0.0
        %1645 = vmatprep.subr.mxu0 0.0
        %1646 = vmatpush1.msra.mxu0 0.0
        %1647 = vmatprep.subr.mxu0 0.0
        %1648 = vmatpush1.msra.mxu0 0.0
        %1649 = vmatprep.subr.mxu0 0.0
        %1650 = vmatpush1.msra.mxu0 0.0
        %1651 = vmatprep.subr.mxu0 0.0
        %1652 = vmatpush1.msra.mxu0 0.0
        %1653 = vmatprep.subr.mxu0 0.0
        %1654 = vmatpush1.msra.mxu0 0.0
        %1655 = vmatprep.subr.mxu0 0.0
        %1656 = vmatpush1.msra.mxu0 0.0
        %1657 = vmatprep.subr.mxu0 0.0
        %1658 = vmatpush1.msra.mxu0 0.0
        %1659 = vmatprep.subr.mxu0 0.0
        %1660 = vmatpush1.msra.mxu0 0.0
        %1661 = vmatprep.subr.mxu0 0.0
        %1662 = vmatpush1.msra.mxu0 0.0
        %1663 = vmatprep.subr.mxu0 0.0
        %1664 = vmatpush1.msra.mxu0 0.0
        %1665 = vmatprep.subr.mxu0 0.0
        %1666 = vmatpush1.msra.mxu0 0.0
        %1667 = vmatprep.subr.mxu0 0.0
        %1668 = vmatpush1.msra.mxu0 0.0
        %1669 = vmatprep.subr.mxu0 0.0
        %1670 = vmatpush1.msra.mxu0 0.0
        %1671 = vmatprep.subr.mxu0 0.0
        %1672 = vmatpush1.msra.mxu0 0.0
        %1673 = vmatprep.subr.mxu0 0.0
        %1674 = vmatpush1.msra.mxu0 0.0
        %1675 = vmatprep.subr.mxu0 0.0
        %1676 = vmatpush1.msra.mxu0 0.0
        %1677 = vmatprep.subr.mxu0 0.0
        %1678 = vmatpush1.msra.mxu0 0.0
        %1679 = vmatprep.subr.mxu0 0.0
        %1680 = vmatpush1.msra.mxu0 0.0
        %1681 = vmatprep.subr.mxu0 0.0
        %1682 = vmatpush1.msra.mxu0 0.0
        %1683 = vmatprep.subr.mxu0 0.0
        %1684 = vmatpush1.msra.mxu0 0.0
        %1685 = vmatprep.subr.mxu0 0.0
        %1686 = vmatpush1.msra.mxu0 0.0
        %1687 = vmatprep.subr.mxu0 0.0
        %1688 = vmatpush1.msra.mxu0 0.0
        %1689 = vmatprep.mubr.f32.mxu0 0.0
        %v1690 = vand.u32 %v767, 4294901760
        %1691 = vmatmul.mubr.f32.gmra.mrb[0].mxu0 %v1690
        %v1692 = vpop.f32.mrb[0].mxu0
        %v1693 = vadd.f32 %v1548, %v1692
        %v1694 = vpop.f32.mrb[0].mxu0
        %v1695 = vadd.f32 %v1550, %v1694
        %1696 = vmatprep.mubr.f32.mxu0 0.0
        %v1697 = vand.u32 %v770, 4294901760
        %1698 = vmatmul.mubr.f32.gmra.mrb[0].mxu0 %v1697
        %v1699 = vpop.f32.mrb[0].mxu0
        %v1700 = vadd.f32 %v1559, %v1699
        %v1701 = vpop.f32.mrb[0].mxu0
        %v1702 = vadd.f32 %v1561, %v1701
        %1703 = vmatprep.mubr.f32.mxu0 0.0
        %v1704 = vand.u32 %v773, 4294901760
        %1705 = vmatmul.mubr.f32.gmra.mrb[0].mxu0 %v1704
        %v1706 = vpop.f32.mrb[0].mxu0
        %v1707 = vadd.f32 %v1570, %v1706
        %v1708 = vpop.f32.mrb[0].mxu0
        %v1709 = vadd.f32 %v1572, %v1708
        %1710 = vmatprep.mubr.f32.mxu0 0.0
        %v1711 = vand.u32 %v776, 4294901760
        %1712 = vmatmul.mubr.f32.gmra.mrb[0].mxu0 %v1711
        %v1713 = vpop.f32.mrb[0].mxu0
        %v1714 = vadd.f32 %v1581, %v1713
        %v1715 = vpop.f32.mrb[0].mxu0
        %v1716 = vadd.f32 %v1583, %v1715
        %1717 = vdwg.mxu0
        %v1718 = vand.u32 %v724, 4294901760
        %v1719 = vsub.f32 %v724, %v1718
        %1720 = vmatprep.subr.mxu0 %v1719
        %v1721 = vand.u32 %v723, 4294901760
        %v1722 = vsub.f32 %v723, %v1721
        %1723 = vmatpush1.msra.mxu0 %v1722
        %v1724 = vand.u32 %v728, 4294901760
        %v1725 = vsub.f32 %v728, %v1724
        %1726 = vmatprep.subr.mxu0 %v1725
        %v1727 = vand.u32 %v727, 4294901760
        %v1728 = vsub.f32 %v727, %v1727
        %1729 = vmatpush1.msra.mxu0 %v1728
        %v1730 = vand.u32 %v732, 4294901760
        %v1731 = vsub.f32 %v732, %v1730
        %1732 = vmatprep.subr.mxu0 %v1731
        %v1733 = vand.u32 %v731, 4294901760
        %v1734 = vsub.f32 %v731, %v1733
        %1735 = vmatpush1.msra.mxu0 %v1734
        %v1736 = vand.u32 %v736, 4294901760
        %v1737 = vsub.f32 %v736, %v1736
        %1738 = vmatprep.subr.mxu0 %v1737
        %v1739 = vand.u32 %v735, 4294901760
        %v1740 = vsub.f32 %v735, %v1739
        %1741 = vmatpush1.msra.mxu0 %v1740
        %1742 = vmatprep.subr.mxu0 0.0
        %1743 = vmatpush1.msra.mxu0 0.0
        %1744 = vmatprep.subr.mxu0 0.0
        %1745 = vmatpush1.msra.mxu0 0.0
        %1746 = vmatprep.subr.mxu0 0.0
        %1747 = vmatpush1.msra.mxu0 0.0
        %1748 = vmatprep.subr.mxu0 0.0
        %1749 = vmatpush1.msra.mxu0 0.0
        %1750 = vmatprep.subr.mxu0 0.0
        %1751 = vmatpush1.msra.mxu0 0.0
        %1752 = vmatprep.subr.mxu0 0.0
        %1753 = vmatpush1.msra.mxu0 0.0
        %1754 = vmatprep.subr.mxu0 0.0
        %1755 = vmatpush1.msra.mxu0 0.0
        %1756 = vmatprep.subr.mxu0 0.0
        %1757 = vmatpush1.msra.mxu0 0.0
        %1758 = vmatprep.subr.mxu0 0.0
        %1759 = vmatpush1.msra.mxu0 0.0
        %1760 = vmatprep.subr.mxu0 0.0
        %1761 = vmatpush1.msra.mxu0 0.0
        %1762 = vmatprep.subr.mxu0 0.0
        %1763 = vmatpush1.msra.mxu0 0.0
        %1764 = vmatprep.subr.mxu0 0.0
        %1765 = vmatpush1.msra.mxu0 0.0
        %1766 = vmatprep.subr.mxu0 0.0
        %1767 = vmatpush1.msra.mxu0 0.0
        %1768 = vmatprep.subr.mxu0 0.0
        %1769 = vmatpush1.msra.mxu0 0.0
        %1770 = vmatprep.subr.mxu0 0.0
        %1771 = vmatpush1.msra.mxu0 0.0
        %1772 = vmatprep.subr.mxu0 0.0
        %1773 = vmatpush1.msra.mxu0 0.0
        %1774 = vmatprep.subr.mxu0 0.0
        %1775 = vmatpush1.msra.mxu0 0.0
        %1776 = vmatprep.subr.mxu0 0.0
        %1777 = vmatpush1.msra.mxu0 0.0
        %1778 = vmatprep.subr.mxu0 0.0
        %1779 = vmatpush1.msra.mxu0 0.0
        %1780 = vmatprep.subr.mxu0 0.0
        %1781 = vmatpush1.msra.mxu0 0.0
        %1782 = vmatprep.subr.mxu0 0.0
        %1783 = vmatpush1.msra.mxu0 0.0
        %1784 = vmatprep.subr.mxu0 0.0
        %1785 = vmatpush1.msra.mxu0 0.0
        %1786 = vmatprep.subr.mxu0 0.0
        %1787 = vmatpush1.msra.mxu0 0.0
        %1788 = vmatprep.subr.mxu0 0.0
        %1789 = vmatpush1.msra.mxu0 0.0
        %1790 = vmatprep.subr.mxu0 0.0
        %1791 = vmatpush1.msra.mxu0 0.0
        %1792 = vmatprep.subr.mxu0 0.0
        %1793 = vmatpush1.msra.mxu0 0.0
        %1794 = vmatprep.subr.mxu0 0.0
        %1795 = vmatpush1.msra.mxu0 0.0
        %1796 = vmatprep.subr.mxu0 0.0
        %1797 = vmatpush1.msra.mxu0 0.0
        %1798 = vmatprep.mubr.f32.mxu0 0.0
        %v1799 = vand.u32 %v767, 4294901760
        %v1800 = vsub.f32 %v767, %v1799
        %1801 = vmatmul.mubr.f32.gmra.mrb[0].mxu0 %v1800
        %v1802 = vpop.f32.mrb[0].mxu0
        %v1803 = vadd.f32 %v1693, %v1802
        %v1804 = vpop.f32.mrb[0].mxu0
        %v1805 = vadd.f32 %v1695, %v1804
        %1806 = vmatprep.mubr.f32.mxu0 0.0
        %v1807 = vand.u32 %v770, 4294901760
        %v1808 = vsub.f32 %v770, %v1807
        %1809 = vmatmul.mubr.f32.gmra.mrb[0].mxu0 %v1808
        %v1810 = vpop.f32.mrb[0].mxu0
        %v1811 = vadd.f32 %v1700, %v1810
        %v1812 = vpop.f32.mrb[0].mxu0
        %v1813 = vadd.f32 %v1702, %v1812
        %1814 = vmatprep.mubr.f32.mxu0 0.0
        %v1815 = vand.u32 %v773, 4294901760
        %v1816 = vsub.f32 %v773, %v1815
        %1817 = vmatmul.mubr.f32.gmra.mrb[0].mxu0 %v1816
        %v1818 = vpop.f32.mrb[0].mxu0
        %v1819 = vadd.f32 %v1707, %v1818
        %v1820 = vpop.f32.mrb[0].mxu0
        %v1821 = vadd.f32 %v1709, %v1820
        %1822 = vmatprep.mubr.f32.mxu0 0.0
        %v1823 = vand.u32 %v776, 4294901760
        %v1824 = vsub.f32 %v776, %v1823
        %1825 = vmatmul.mubr.f32.gmra.mrb[0].mxu0 %v1824
        %v1826 = vpop.f32.mrb[0].mxu0
        %v1827 = vadd.f32 %v1714, %v1826
        %v1828 = vpop.f32.mrb[0].mxu0
        %v1829 = vadd.f32 %v1716, %v1828
        %1830 = vdwg.mxu0
        %v1831 = vand.u32 %v724, 4294901760
        %1832 = vmatprep.subr.mxu0 %v1831
        %v1833 = vand.u32 %v723, 4294901760
        %1834 = vmatpush1.msra.mxu0 %v1833
        %v1835 = vand.u32 %v728, 4294901760
        %1836 = vmatprep.subr.mxu0 %v1835
        %v1837 = vand.u32 %v727, 4294901760
        %1838 = vmatpush1.msra.mxu0 %v1837
        %v1839 = vand.u32 %v732, 4294901760
        %1840 = vmatprep.subr.mxu0 %v1839
        %v1841 = vand.u32 %v731, 4294901760
        %1842 = vmatpush1.msra.mxu0 %v1841
        %v1843 = vand.u32 %v736, 4294901760
        %1844 = vmatprep.subr.mxu0 %v1843
        %v1845 = vand.u32 %v735, 4294901760
        %1846 = vmatpush1.msra.mxu0 %v1845
        %1847 = vmatprep.subr.mxu0 0.0
        %1848 = vmatpush1.msra.mxu0 0.0
        %1849 = vmatprep.subr.mxu0 0.0
        %1850 = vmatpush1.msra.mxu0 0.0
        %1851 = vmatprep.subr.mxu0 0.0
        %1852 = vmatpush1.msra.mxu0 0.0
        %1853 = vmatprep.subr.mxu0 0.0
        %1854 = vmatpush1.msra.mxu0 0.0
        %1855 = vmatprep.subr.mxu0 0.0
        %1856 = vmatpush1.msra.mxu0 0.0
        %1857 = vmatprep.subr.mxu0 0.0
        %1858 = vmatpush1.msra.mxu0 0.0
        %1859 = vmatprep.subr.mxu0 0.0
        %1860 = vmatpush1.msra.mxu0 0.0
        %1861 = vmatprep.subr.mxu0 0.0
        %1862 = vmatpush1.msra.mxu0 0.0
        %1863 = vmatprep.subr.mxu0 0.0
        %1864 = vmatpush1.msra.mxu0 0.0
        %1865 = vmatprep.subr.mxu0 0.0
        %1866 = vmatpush1.msra.mxu0 0.0
        %1867 = vmatprep.subr.mxu0 0.0
        %1868 = vmatpush1.msra.mxu0 0.0
        %1869 = vmatprep.subr.mxu0 0.0
        %1870 = vmatpush1.msra.mxu0 0.0
        %1871 = vmatprep.subr.mxu0 0.0
        %1872 = vmatpush1.msra.mxu0 0.0
        %1873 = vmatprep.subr.mxu0 0.0
        %1874 = vmatpush1.msra.mxu0 0.0
        %1875 = vmatprep.subr.mxu0 0.0
        %1876 = vmatpush1.msra.mxu0 0.0
        %1877 = vmatprep.subr.mxu0 0.0
        %1878 = vmatpush1.msra.mxu0 0.0
        %1879 = vmatprep.subr.mxu0 0.0
        %1880 = vmatpush1.msra.mxu0 0.0
        %1881 = vmatprep.subr.mxu0 0.0
        %1882 = vmatpush1.msra.mxu0 0.0
        %1883 = vmatprep.subr.mxu0 0.0
        %1884 = vmatpush1.msra.mxu0 0.0
        %1885 = vmatprep.subr.mxu0 0.0
        %1886 = vmatpush1.msra.mxu0 0.0
        %1887 = vmatprep.subr.mxu0 0.0
        %1888 = vmatpush1.msra.mxu0 0.0
        %1889 = vmatprep.subr.mxu0 0.0
        %1890 = vmatpush1.msra.mxu0 0.0
        %1891 = vmatprep.subr.mxu0 0.0
        %1892 = vmatpush1.msra.mxu0 0.0
        %1893 = vmatprep.subr.mxu0 0.0
        %1894 = vmatpush1.msra.mxu0 0.0
        %1895 = vmatprep.subr.mxu0 0.0
        %1896 = vmatpush1.msra.mxu0 0.0
        %1897 = vmatprep.subr.mxu0 0.0
        %1898 = vmatpush1.msra.mxu0 0.0
        %1899 = vmatprep.subr.mxu0 0.0
        %1900 = vmatpush1.msra.mxu0 0.0
        %1901 = vmatprep.subr.mxu0 0.0
        %1902 = vmatpush1.msra.mxu0 0.0
        %1903 = vmatprep.mubr.f32.mxu0 0.0
        %v1904 = vand.u32 %v767, 4294901760
        %v1905 = vsub.f32 %v767, %v1904
        %v1906 = vand.u32 %v1905, 4294901760
        %1907 = vmatmul.mubr.f32.gmra.mrb[0].mxu0 %v1906
        %v1908 = vpop.f32.mrb[0].mxu0
        %v1909 = vadd.f32 %v1803, %v1908
        %v1910 = vpop.f32.mrb[0].mxu0
        %v1911 = vadd.f32 %v1805, %v1910
        %1912 = vmatprep.mubr.f32.mxu0 0.0
        %v1913 = vand.u32 %v770, 4294901760
        %v1914 = vsub.f32 %v770, %v1913
        %v1915 = vand.u32 %v1914, 4294901760
        %1916 = vmatmul.mubr.f32.gmra.mrb[0].mxu0 %v1915
        %v1917 = vpop.f32.mrb[0].mxu0
        %v1918 = vadd.f32 %v1811, %v1917
        %v1919 = vpop.f32.mrb[0].mxu0
        %v1920 = vadd.f32 %v1813, %v1919
        %1921 = vmatprep.mubr.f32.mxu0 0.0
        %v1922 = vand.u32 %v773, 4294901760
        %v1923 = vsub.f32 %v773, %v1922
        %v1924 = vand.u32 %v1923, 4294901760
        %1925 = vmatmul.mubr.f32.gmra.mrb[0].mxu0 %v1924
        %v1926 = vpop.f32.mrb[0].mxu0
        %v1927 = vadd.f32 %v1819, %v1926
        %v1928 = vpop.f32.mrb[0].mxu0
        %v1929 = vadd.f32 %v1821, %v1928
        %1930 = vmatprep.mubr.f32.mxu0 0.0
        %v1931 = vand.u32 %v776, 4294901760
        %v1932 = vsub.f32 %v776, %v1931
        %v1933 = vand.u32 %v1932, 4294901760
        %1934 = vmatmul.mubr.f32.gmra.mrb[0].mxu0 %v1933
        %v1935 = vpop.f32.mrb[0].mxu0
        %v1936 = vadd.f32 %v1827, %v1935
        %v1937 = vpop.f32.mrb[0].mxu0
        %v1938 = vadd.f32 %v1829, %v1937
        %1939 = vdwg.mxu0
        %v1940 = vand.u32 %v724, 4294901760
        %v1941 = vsub.f32 %v724, %v1940
        %v1942 = vand.u32 %v1941, 4294901760
        %1943 = vmatprep.subr.mxu0 %v1942
        %v1944 = vand.u32 %v723, 4294901760
        %v1945 = vsub.f32 %v723, %v1944
        %v1946 = vand.u32 %v1945, 4294901760
        %1947 = vmatpush1.msra.mxu0 %v1946
        %v1948 = vand.u32 %v728, 4294901760
        %v1949 = vsub.f32 %v728, %v1948
        %v1950 = vand.u32 %v1949, 4294901760
        %1951 = vmatprep.subr.mxu0 %v1950
        %v1952 = vand.u32 %v727, 4294901760
        %v1953 = vsub.f32 %v727, %v1952
        %v1954 = vand.u32 %v1953, 4294901760
        %1955 = vmatpush1.msra.mxu0 %v1954
        %v1956 = vand.u32 %v732, 4294901760
        %v1957 = vsub.f32 %v732, %v1956
        %v1958 = vand.u32 %v1957, 4294901760
        %1959 = vmatprep.subr.mxu0 %v1958
        %v1960 = vand.u32 %v731, 4294901760
        %v1961 = vsub.f32 %v731, %v1960
        %v1962 = vand.u32 %v1961, 4294901760
        %1963 = vmatpush1.msra.mxu0 %v1962
        %v1964 = vand.u32 %v736, 4294901760
        %v1965 = vsub.f32 %v736, %v1964
        %v1966 = vand.u32 %v1965, 4294901760
        %1967 = vmatprep.subr.mxu0 %v1966
        %v1968 = vand.u32 %v735, 4294901760
        %v1969 = vsub.f32 %v735, %v1968
        %v1970 = vand.u32 %v1969, 4294901760
        %1971 = vmatpush1.msra.mxu0 %v1970
        %1972 = vmatprep.subr.mxu0 0.0
        %1973 = vmatpush1.msra.mxu0 0.0
        %1974 = vmatprep.subr.mxu0 0.0
        %1975 = vmatpush1.msra.mxu0 0.0
        %1976 = vmatprep.subr.mxu0 0.0
        %1977 = vmatpush1.msra.mxu0 0.0
        %1978 = vmatprep.subr.mxu0 0.0
        %1979 = vmatpush1.msra.mxu0 0.0
        %1980 = vmatprep.subr.mxu0 0.0
        %1981 = vmatpush1.msra.mxu0 0.0
        %1982 = vmatprep.subr.mxu0 0.0
        %1983 = vmatpush1.msra.mxu0 0.0
        %1984 = vmatprep.subr.mxu0 0.0
        %1985 = vmatpush1.msra.mxu0 0.0
        %1986 = vmatprep.subr.mxu0 0.0
        %1987 = vmatpush1.msra.mxu0 0.0
        %1988 = vmatprep.subr.mxu0 0.0
        %1989 = vmatpush1.msra.mxu0 0.0
        %1990 = vmatprep.subr.mxu0 0.0
        %1991 = vmatpush1.msra.mxu0 0.0
        %1992 = vmatprep.subr.mxu0 0.0
        %1993 = vmatpush1.msra.mxu0 0.0
        %1994 = vmatprep.subr.mxu0 0.0
        %1995 = vmatpush1.msra.mxu0 0.0
        %1996 = vmatprep.subr.mxu0 0.0
        %1997 = vmatpush1.msra.mxu0 0.0
        %1998 = vmatprep.subr.mxu0 0.0
        %1999 = vmatpush1.msra.mxu0 0.0
        %2000 = vmatprep.subr.mxu0 0.0
        %2001 = vmatpush1.msra.mxu0 0.0
        %2002 = vmatprep.subr.mxu0 0.0
        %2003 = vmatpush1.msra.mxu0 0.0
        %2004 = vmatprep.subr.mxu0 0.0
        %2005 = vmatpush1.msra.mxu0 0.0
        %2006 = vmatprep.subr.mxu0 0.0
        %2007 = vmatpush1.msra.mxu0 0.0
        %2008 = vmatprep.subr.mxu0 0.0
        %2009 = vmatpush1.msra.mxu0 0.0
        %2010 = vmatprep.subr.mxu0 0.0
        %2011 = vmatpush1.msra.mxu0 0.0
        %2012 = vmatprep.subr.mxu0 0.0
        %2013 = vmatpush1.msra.mxu0 0.0
        %2014 = vmatprep.subr.mxu0 0.0
        %2015 = vmatpush1.msra.mxu0 0.0
        %2016 = vmatprep.subr.mxu0 0.0
        %2017 = vmatpush1.msra.mxu0 0.0
        %2018 = vmatprep.subr.mxu0 0.0
        %2019 = vmatpush1.msra.mxu0 0.0
        %2020 = vmatprep.subr.mxu0 0.0
        %2021 = vmatpush1.msra.mxu0 0.0
        %2022 = vmatprep.subr.mxu0 0.0
        %2023 = vmatpush1.msra.mxu0 0.0
        %2024 = vmatprep.subr.mxu0 0.0
        %2025 = vmatpush1.msra.mxu0 0.0
        %2026 = vmatprep.subr.mxu0 0.0
        %2027 = vmatpush1.msra.mxu0 0.0
        %2028 = vmatprep.mubr.f32.mxu0 0.0
        %v2029 = vand.u32 %v767, 4294901760
        %2030 = vmatmul.mubr.f32.gmra.mrb[0].mxu0 %v2029
        %v2031 = vpop.f32.mrb[0].mxu0
        %v2032 = vadd.f32 %v1909, %v2031
        %v2033 = vpop.f32.mrb[0].mxu0
        %v2034 = vadd.f32 %v1911, %v2033
        %2035 = vmatprep.mubr.f32.mxu0 0.0
        %v2036 = vand.u32 %v770, 4294901760
        %2037 = vmatmul.mubr.f32.gmra.mrb[0].mxu0 %v2036
        %v2038 = vpop.f32.mrb[0].mxu0
        %v2039 = vadd.f32 %v1918, %v2038
        %v2040 = vpop.f32.mrb[0].mxu0
        %v2041 = vadd.f32 %v1920, %v2040
        %2042 = vmatprep.mubr.f32.mxu0 0.0
        %v2043 = vand.u32 %v773, 4294901760
        %2044 = vmatmul.mubr.f32.gmra.mrb[0].mxu0 %v2043
        %v2045 = vpop.f32.mrb[0].mxu0
        %v2046 = vadd.f32 %v1927, %v2045
        %v2047 = vpop.f32.mrb[0].mxu0
        %v2048 = vadd.f32 %v1929, %v2047
        %2049 = vmatprep.mubr.f32.mxu0 0.0
        %v2050 = vand.u32 %v776, 4294901760
        %2051 = vmatmul.mubr.f32.gmra.mrb[0].mxu0 %v2050
        %v2052 = vpop.f32.mrb[0].mxu0
        %v2053 = vadd.f32 %v1936, %v2052
        %v2054 = vpop.f32.mrb[0].mxu0
        %v2055 = vadd.f32 %v1938, %v2054
        %2056 = vdwg.mxu0
        %v2057 = vand.u32 %v724, 4294901760
        %2058 = vmatprep.subr.mxu0 %v2057
        %v2059 = vand.u32 %v723, 4294901760
        %2060 = vmatpush1.msra.mxu0 %v2059
        %v2061 = vand.u32 %v728, 4294901760
        %2062 = vmatprep.subr.mxu0 %v2061
        %v2063 = vand.u32 %v727, 4294901760
        %2064 = vmatpush1.msra.mxu0 %v2063
        %v2065 = vand.u32 %v732, 4294901760
        %2066 = vmatprep.subr.mxu0 %v2065
        %v2067 = vand.u32 %v731, 4294901760
        %2068 = vmatpush1.msra.mxu0 %v2067
        %v2069 = vand.u32 %v736, 4294901760
        %2070 = vmatprep.subr.mxu0 %v2069
        %v2071 = vand.u32 %v735, 4294901760
        %2072 = vmatpush1.msra.mxu0 %v2071
        %2073 = vmatprep.subr.mxu0 0.0
        %2074 = vmatpush1.msra.mxu0 0.0
        %2075 = vmatprep.subr.mxu0 0.0
        %2076 = vmatpush1.msra.mxu0 0.0
        %2077 = vmatprep.subr.mxu0 0.0
        %2078 = vmatpush1.msra.mxu0 0.0
        %2079 = vmatprep.subr.mxu0 0.0
        %2080 = vmatpush1.msra.mxu0 0.0
        %2081 = vmatprep.subr.mxu0 0.0
        %2082 = vmatpush1.msra.mxu0 0.0
        %2083 = vmatprep.subr.mxu0 0.0
        %2084 = vmatpush1.msra.mxu0 0.0
        %2085 = vmatprep.subr.mxu0 0.0
        %2086 = vmatpush1.msra.mxu0 0.0
        %2087 = vmatprep.subr.mxu0 0.0
        %2088 = vmatpush1.msra.mxu0 0.0
        %2089 = vmatprep.subr.mxu0 0.0
        %2090 = vmatpush1.msra.mxu0 0.0
        %2091 = vmatprep.subr.mxu0 0.0
        %2092 = vmatpush1.msra.mxu0 0.0
        %2093 = vmatprep.subr.mxu0 0.0
        %2094 = vmatpush1.msra.mxu0 0.0
        %2095 = vmatprep.subr.mxu0 0.0
        %2096 = vmatpush1.msra.mxu0 0.0
        %2097 = vmatprep.subr.mxu0 0.0
        %2098 = vmatpush1.msra.mxu0 0.0
        %2099 = vmatprep.subr.mxu0 0.0
        %2100 = vmatpush1.msra.mxu0 0.0
        %2101 = vmatprep.subr.mxu0 0.0
        %2102 = vmatpush1.msra.mxu0 0.0
        %2103 = vmatprep.subr.mxu0 0.0
        %2104 = vmatpush1.msra.mxu0 0.0
        %2105 = vmatprep.subr.mxu0 0.0
        %2106 = vmatpush1.msra.mxu0 0.0
        %2107 = vmatprep.subr.mxu0 0.0
        %2108 = vmatpush1.msra.mxu0 0.0
        %2109 = vmatprep.subr.mxu0 0.0
        %2110 = vmatpush1.msra.mxu0 0.0
        %2111 = vmatprep.subr.mxu0 0.0
        %2112 = vmatpush1.msra.mxu0 0.0
        %2113 = vmatprep.subr.mxu0 0.0
        %2114 = vmatpush1.msra.mxu0 0.0
        %2115 = vmatprep.subr.mxu0 0.0
        %2116 = vmatpush1.msra.mxu0 0.0
        %2117 = vmatprep.subr.mxu0 0.0
        %2118 = vmatpush1.msra.mxu0 0.0
        %2119 = vmatprep.subr.mxu0 0.0
        %2120 = vmatpush1.msra.mxu0 0.0
        %2121 = vmatprep.subr.mxu0 0.0
        %2122 = vmatpush1.msra.mxu0 0.0
        %2123 = vmatprep.subr.mxu0 0.0
        %2124 = vmatpush1.msra.mxu0 0.0
        %2125 = vmatprep.subr.mxu0 0.0
        %2126 = vmatpush1.msra.mxu0 0.0
        %2127 = vmatprep.subr.mxu0 0.0
        %2128 = vmatpush1.msra.mxu0 0.0
        %2129 = vmatprep.mubr.f32.mxu0 0.0
        %v2130 = vand.u32 %v767, 4294901760
        %2131 = vmatmul.mubr.f32.gmra.mrb[0].mxu0 %v2130
        %v2132 = vpop.f32.mrb[0].mxu0
        %v2133 = vadd.f32 %v2032, %v2132
        %v2134 = vpop.f32.mrb[0].mxu0
        %v2135 = vadd.f32 %v2034, %v2134
        %2136 = vmatprep.mubr.f32.mxu0 0.0
        %v2137 = vand.u32 %v770, 4294901760
        %2138 = vmatmul.mubr.f32.gmra.mrb[0].mxu0 %v2137
        %v2139 = vpop.f32.mrb[0].mxu0
        %v2140 = vadd.f32 %v2039, %v2139
        %v2141 = vpop.f32.mrb[0].mxu0
        %v2142 = vadd.f32 %v2041, %v2141
        %2143 = vmatprep.mubr.f32.mxu0 0.0
        %v2144 = vand.u32 %v773, 4294901760
        %2145 = vmatmul.mubr.f32.gmra.mrb[0].mxu0 %v2144
        %v2146 = vpop.f32.mrb[0].mxu0
        %v2147 = vadd.f32 %v2046, %v2146
        %v2148 = vpop.f32.mrb[0].mxu0
        %v2149 = vadd.f32 %v2048, %v2148
        %2150 = vmatprep.mubr.f32.mxu0 0.0
        %v2151 = vand.u32 %v776, 4294901760
        %2152 = vmatmul.mubr.f32.gmra.mrb[0].mxu0 %v2151
        %v2153 = vpop.f32.mrb[0].mxu0
        %v2154 = vadd.f32 %v2053, %v2153
        %v2155 = vpop.f32.mrb[0].mxu0
        %v2156 = vadd.f32 %v2055, %v2155
        %2157 = vdwg.mxu0
        %v2158 = vmax.f32 %v1443, 0.0
        %v2159 = vmax.f32 %v1445, 0.0
        %v2160 = vmax.f32 %v2133, 0.0
        %v2161 = vmax.f32 %v2135, 0.0
        %v2162 = vmax.f32 %v1450, 0.0
        %v2163 = vmax.f32 %v1452, 0.0
        %v2164 = vmax.f32 %v2140, 0.0
        %v2165 = vmax.f32 %v2142, 0.0
        %v2166 = vmax.f32 %v1457, 0.0
        %v2167 = vmax.f32 %v1459, 0.0
        %v2168 = vmax.f32 %v2147, 0.0
        %v2169 = vmax.f32 %v2149, 0.0
        %v2170 = vmax.f32 %v1464, 0.0
        %v2171 = vmax.f32 %v1466, 0.0
        %v2172 = vmax.f32 %v2154, 0.0
        %v2173 = vmax.f32 %v2156, 0.0
        %v2174 = vld [vmem:[%s7] sm:$0xff]
        %v2175 = vld [vmem:[%s7 + $0x8] sm:$0xff]
        %v2176 = vld [vmem:[%s7 + $0x10] sm:$0xff]
        %v2177 = vld [vmem:[%s7 + $0x18] sm:$0xff]
        %v2178 = vld [vmem:[%s8] sm:$0xff]
        %v2179 = vld [vmem:[%s8 + $0x8] sm:$0xff]
        %v2180 = vld [vmem:[%s8 + $0x10] sm:$0xff]
        %v2181 = vld [vmem:[%s8 + $0x18] sm:$0xff]
        %2183 = vset.pattern.permute.xlu0 0
        %2184 = vperm.xlu0 %2183, %v2178
        %v2185 = vpop.permute.xlu0 %2184
        %2188 = vset.pattern.permute.xlu0 0
        %2189 = vperm.xlu0 %2188, %v2179
        %v2190 = vpop.permute.xlu0 %2189
        %2193 = vset.pattern.permute.xlu0 0
        %2194 = vperm.xlu0 %2193, %v2180
        %v2195 = vpop.permute.xlu0 %2194
        %2198 = vset.pattern.permute.xlu0 0
        %2199 = vperm.xlu0 %2198, %v2181
        %v2200 = vpop.permute.xlu0 %2199
        %v2203 = vsel %vm765, %v2174, 0
        %v2206 = vsel %vm765, %v2175, 0
        %v2209 = vsel %vm765, %v2176, 0
        %v2212 = vsel %vm765, %v2177, 0
        %v2214 = vand.u32 %v2159, 4294901760
        %2215 = vmatprep.subr.mxu0 %v2214
        %v2216 = vand.u32 %v2158, 4294901760
        %2217 = vmatpush1.msra.mxu0 %v2216
        %v2218 = vand.u32 %v2163, 4294901760
        %2219 = vmatprep.subr.mxu0 %v2218
        %v2220 = vand.u32 %v2162, 4294901760
        %2221 = vmatpush1.msra.mxu0 %v2220
        %v2222 = vand.u32 %v2167, 4294901760
        %2223 = vmatprep.subr.mxu0 %v2222
        %v2224 = vand.u32 %v2166, 4294901760
        %2225 = vmatpush1.msra.mxu0 %v2224
        %v2226 = vand.u32 %v2171, 4294901760
        %2227 = vmatprep.subr.mxu0 %v2226
        %v2228 = vand.u32 %v2170, 4294901760
        %2229 = vmatpush1.msra.mxu0 %v2228
        %2230 = vmatprep.subr.mxu0 0.0
        %2231 = vmatpush1.msra.mxu0 0.0
        %2232 = vmatprep.subr.mxu0 0.0
        %2233 = vmatpush1.msra.mxu0 0.0
        %2234 = vmatprep.subr.mxu0 0.0
        %2235 = vmatpush1.msra.mxu0 0.0
        %2236 = vmatprep.subr.mxu0 0.0
        %2237 = vmatpush1.msra.mxu0 0.0
        %2238 = vmatprep.subr.mxu0 0.0
        %2239 = vmatpush1.msra.mxu0 0.0
        %2240 = vmatprep.subr.mxu0 0.0
        %2241 = vmatpush1.msra.mxu0 0.0
        %2242 = vmatprep.subr.mxu0 0.0
        %2243 = vmatpush1.msra.mxu0 0.0
        %2244 = vmatprep.subr.mxu0 0.0
        %2245 = vmatpush1.msra.mxu0 0.0
        %2246 = vmatprep.subr.mxu0 0.0
        %2247 = vmatpush1.msra.mxu0 0.0
        %2248 = vmatprep.subr.mxu0 0.0
        %2249 = vmatpush1.msra.mxu0 0.0
        %2250 = vmatprep.subr.mxu0 0.0
        %2251 = vmatpush1.msra.mxu0 0.0
        %2252 = vmatprep.subr.mxu0 0.0
        %2253 = vmatpush1.msra.mxu0 0.0
        %2254 = vmatprep.subr.mxu0 0.0
        %2255 = vmatpush1.msra.mxu0 0.0
        %2256 = vmatprep.subr.mxu0 0.0
        %2257 = vmatpush1.msra.mxu0 0.0
        %2258 = vmatprep.subr.mxu0 0.0
        %2259 = vmatpush1.msra.mxu0 0.0
        %2260 = vmatprep.subr.mxu0 0.0
        %2261 = vmatpush1.msra.mxu0 0.0
        %2262 = vmatprep.subr.mxu0 0.0
        %2263 = vmatpush1.msra.mxu0 0.0
        %2264 = vmatprep.subr.mxu0 0.0
        %2265 = vmatpush1.msra.mxu0 0.0
        %2266 = vmatprep.subr.mxu0 0.0
        %2267 = vmatpush1.msra.mxu0 0.0
        %2268 = vmatprep.subr.mxu0 0.0
        %2269 = vmatpush1.msra.mxu0 0.0
        %2270 = vmatprep.subr.mxu0 0.0
        %2271 = vmatpush1.msra.mxu0 0.0
        %2272 = vmatprep.subr.mxu0 0.0
        %2273 = vmatpush1.msra.mxu0 0.0
        %2274 = vmatprep.subr.mxu0 0.0
        %2275 = vmatpush1.msra.mxu0 0.0
        %2276 = vmatprep.subr.mxu0 0.0
        %2277 = vmatpush1.msra.mxu0 0.0
        %2278 = vmatprep.subr.mxu0 0.0
        %2279 = vmatpush1.msra.mxu0 0.0
        %2280 = vmatprep.subr.mxu0 0.0
        %2281 = vmatpush1.msra.mxu0 0.0
        %2282 = vmatprep.subr.mxu0 0.0
        %2283 = vmatpush1.msra.mxu0 0.0
        %2284 = vmatprep.subr.mxu0 0.0
        %2285 = vmatpush1.msra.mxu0 0.0
        %2286 = vmatprep.mubr.f32.mxu0 0.0
        %v2287 = vand.u32 %v2203, 4294901760
        %v2288 = vsub.f32 %v2203, %v2287
        %v2289 = vand.u32 %v2288, 4294901760
        %v2290 = vsub.f32 %v2288, %v2289
        %v2291 = vand.u32 %v2290, 4294901760
        %2292 = vmatmul.mubr.f32.gmra.mrb[0].mxu0 %v2291
        %v2293 = vpop.f32.mrb[0].mxu0
        %v2294 = vadd.f32 %v2185, %v2293
        %v2295 = vpop.f32.mrb[0].mxu0
        %v2296 = vadd.f32 %v2185, %v2295
        %2297 = vmatprep.mubr.f32.mxu0 0.0
        %v2298 = vand.u32 %v2206, 4294901760
        %v2299 = vsub.f32 %v2206, %v2298
        %v2300 = vand.u32 %v2299, 4294901760
        %v2301 = vsub.f32 %v2299, %v2300
        %v2302 = vand.u32 %v2301, 4294901760
        %2303 = vmatmul.mubr.f32.gmra.mrb[0].mxu0 %v2302
        %v2304 = vpop.f32.mrb[0].mxu0
        %v2305 = vadd.f32 %v2190, %v2304
        %v2306 = vpop.f32.mrb[0].mxu0
        %v2307 = vadd.f32 %v2190, %v2306
        %2308 = vmatprep.mubr.f32.mxu0 0.0
        %v2309 = vand.u32 %v2209, 4294901760
        %v2310 = vsub.f32 %v2209, %v2309
        %v2311 = vand.u32 %v2310, 4294901760
        %v2312 = vsub.f32 %v2310, %v2311
        %v2313 = vand.u32 %v2312, 4294901760
        %2314 = vmatmul.mubr.f32.gmra.mrb[0].mxu0 %v2313
        %v2315 = vpop.f32.mrb[0].mxu0
        %v2316 = vadd.f32 %v2195, %v2315
        %v2317 = vpop.f32.mrb[0].mxu0
        %v2318 = vadd.f32 %v2195, %v2317
        %2319 = vmatprep.mubr.f32.mxu0 0.0
        %v2320 = vand.u32 %v2212, 4294901760
        %v2321 = vsub.f32 %v2212, %v2320
        %v2322 = vand.u32 %v2321, 4294901760
        %v2323 = vsub.f32 %v2321, %v2322
        %v2324 = vand.u32 %v2323, 4294901760
        %2325 = vmatmul.mubr.f32.gmra.mrb[0].mxu0 %v2324
        %v2326 = vpop.f32.mrb[0].mxu0
        %v2327 = vadd.f32 %v2200, %v2326
        %v2328 = vpop.f32.mrb[0].mxu0
        %v2329 = vadd.f32 %v2200, %v2328
        %2330 = vdwg.mxu0
        %v2331 = vand.u32 %v2159, 4294901760
        %v2332 = vsub.f32 %v2159, %v2331
        %v2333 = vand.u32 %v2332, 4294901760
        %v2334 = vsub.f32 %v2332, %v2333
        %v2335 = vand.u32 %v2334, 4294901760
        %2336 = vmatprep.subr.mxu0 %v2335
        %v2337 = vand.u32 %v2158, 4294901760
        %v2338 = vsub.f32 %v2158, %v2337
        %v2339 = vand.u32 %v2338, 4294901760
        %v2340 = vsub.f32 %v2338, %v2339
        %v2341 = vand.u32 %v2340, 4294901760
        %2342 = vmatpush1.msra.mxu0 %v2341
        %v2343 = vand.u32 %v2163, 4294901760
        %v2344 = vsub.f32 %v2163, %v2343
        %v2345 = vand.u32 %v2344, 4294901760
        %v2346 = vsub.f32 %v2344, %v2345
        %v2347 = vand.u32 %v2346, 4294901760
        %2348 = vmatprep.subr.mxu0 %v2347
        %v2349 = vand.u32 %v2162, 4294901760
        %v2350 = vsub.f32 %v2162, %v2349
        %v2351 = vand.u32 %v2350, 4294901760
        %v2352 = vsub.f32 %v2350, %v2351
        %v2353 = vand.u32 %v2352, 4294901760
        %2354 = vmatpush1.msra.mxu0 %v2353
        %v2355 = vand.u32 %v2167, 4294901760
        %v2356 = vsub.f32 %v2167, %v2355
        %v2357 = vand.u32 %v2356, 4294901760
        %v2358 = vsub.f32 %v2356, %v2357
        %v2359 = vand.u32 %v2358, 4294901760
        %2360 = vmatprep.subr.mxu0 %v2359
        %v2361 = vand.u32 %v2166, 4294901760
        %v2362 = vsub.f32 %v2166, %v2361
        %v2363 = vand.u32 %v2362, 4294901760
        %v2364 = vsub.f32 %v2362, %v2363
        %v2365 = vand.u32 %v2364, 4294901760
        %2366 = vmatpush1.msra.mxu0 %v2365
        %v2367 = vand.u32 %v2171, 4294901760
        %v2368 = vsub.f32 %v2171, %v2367
        %v2369 = vand.u32 %v2368, 4294901760
        %v2370 = vsub.f32 %v2368, %v2369
        %v2371 = vand.u32 %v2370, 4294901760
        %2372 = vmatprep.subr.mxu0 %v2371
        %v2373 = vand.u32 %v2170, 4294901760
        %v2374 = vsub.f32 %v2170, %v2373
        %v2375 = vand.u32 %v2374, 4294901760
        %v2376 = vsub.f32 %v2374, %v2375
        %v2377 = vand.u32 %v2376, 4294901760
        %2378 = vmatpush1.msra.mxu0 %v2377
        %2379 = vmatprep.subr.mxu0 0.0
        %2380 = vmatpush1.msra.mxu0 0.0
        %2381 = vmatprep.subr.mxu0 0.0
        %2382 = vmatpush1.msra.mxu0 0.0
        %2383 = vmatprep.subr.mxu0 0.0
        %2384 = vmatpush1.msra.mxu0 0.0
        %2385 = vmatprep.subr.mxu0 0.0
        %2386 = vmatpush1.msra.mxu0 0.0
        %2387 = vmatprep.subr.mxu0 0.0
        %2388 = vmatpush1.msra.mxu0 0.0
        %2389 = vmatprep.subr.mxu0 0.0
        %2390 = vmatpush1.msra.mxu0 0.0
        %2391 = vmatprep.subr.mxu0 0.0
        %2392 = vmatpush1.msra.mxu0 0.0
        %2393 = vmatprep.subr.mxu0 0.0
        %2394 = vmatpush1.msra.mxu0 0.0
        %2395 = vmatprep.subr.mxu0 0.0
        %2396 = vmatpush1.msra.mxu0 0.0
        %2397 = vmatprep.subr.mxu0 0.0
        %2398 = vmatpush1.msra.mxu0 0.0
        %2399 = vmatprep.subr.mxu0 0.0
        %2400 = vmatpush1.msra.mxu0 0.0
        %2401 = vmatprep.subr.mxu0 0.0
        %2402 = vmatpush1.msra.mxu0 0.0
        %2403 = vmatprep.subr.mxu0 0.0
        %2404 = vmatpush1.msra.mxu0 0.0
        %2405 = vmatprep.subr.mxu0 0.0
        %2406 = vmatpush1.msra.mxu0 0.0
        %2407 = vmatprep.subr.mxu0 0.0
        %2408 = vmatpush1.msra.mxu0 0.0
        %2409 = vmatprep.subr.mxu0 0.0
        %2410 = vmatpush1.msra.mxu0 0.0
        %2411 = vmatprep.subr.mxu0 0.0
        %2412 = vmatpush1.msra.mxu0 0.0
        %2413 = vmatprep.subr.mxu0 0.0
        %2414 = vmatpush1.msra.mxu0 0.0
        %2415 = vmatprep.subr.mxu0 0.0
        %2416 = vmatpush1.msra.mxu0 0.0
        %2417 = vmatprep.subr.mxu0 0.0
        %2418 = vmatpush1.msra.mxu0 0.0
        %2419 = vmatprep.subr.mxu0 0.0
        %2420 = vmatpush1.msra.mxu0 0.0
        %2421 = vmatprep.subr.mxu0 0.0
        %2422 = vmatpush1.msra.mxu0 0.0
        %2423 = vmatprep.subr.mxu0 0.0
        %2424 = vmatpush1.msra.mxu0 0.0
        %2425 = vmatprep.subr.mxu0 0.0
        %2426 = vmatpush1.msra.mxu0 0.0
        %2427 = vmatprep.subr.mxu0 0.0
        %2428 = vmatpush1.msra.mxu0 0.0
        %2429 = vmatprep.subr.mxu0 0.0
        %2430 = vmatpush1.msra.mxu0 0.0
        %2431 = vmatprep.subr.mxu0 0.0
        %2432 = vmatpush1.msra.mxu0 0.0
        %2433 = vmatprep.subr.mxu0 0.0
        %2434 = vmatpush1.msra.mxu0 0.0
        %2435 = vmatprep.mubr.f32.mxu0 0.0
        %v2436 = vand.u32 %v2203, 4294901760
        %2437 = vmatmul.mubr.f32.gmra.mrb[0].mxu0 %v2436
        %v2438 = vpop.f32.mrb[0].mxu0
        %v2439 = vadd.f32 %v2294, %v2438
        %v2440 = vpop.f32.mrb[0].mxu0
        %v2441 = vadd.f32 %v2296, %v2440
        %2442 = vmatprep.mubr.f32.mxu0 0.0
        %v2443 = vand.u32 %v2206, 4294901760
        %2444 = vmatmul.mubr.f32.gmra.mrb[0].mxu0 %v2443
        %v2445 = vpop.f32.mrb[0].mxu0
        %v2446 = vadd.f32 %v2305, %v2445
        %v2447 = vpop.f32.mrb[0].mxu0
        %v2448 = vadd.f32 %v2307, %v2447
        %2449 = vmatprep.mubr.f32.mxu0 0.0
        %v2450 = vand.u32 %v2209, 4294901760
        %2451 = vmatmul.mubr.f32.gmra.mrb[0].mxu0 %v2450
        %v2452 = vpop.f32.mrb[0].mxu0
        %v2453 = vadd.f32 %v2316, %v2452
        %v2454 = vpop.f32.mrb[0].mxu0
        %v2455 = vadd.f32 %v2318, %v2454
        %2456 = vmatprep.mubr.f32.mxu0 0.0
        %v2457 = vand.u32 %v2212, 4294901760
        %2458 = vmatmul.mubr.f32.gmra.mrb[0].mxu0 %v2457
        %v2459 = vpop.f32.mrb[0].mxu0
        %v2460 = vadd.f32 %v2327, %v2459
        %v2461 = vpop.f32.mrb[0].mxu0
        %v2462 = vadd.f32 %v2329, %v2461
        %2463 = vdwg.mxu0
        %v2464 = vand.u32 %v2159, 4294901760
        %v2465 = vsub.f32 %v2159, %v2464
        %2466 = vmatprep.subr.mxu0 %v2465
        %v2467 = vand.u32 %v2158, 4294901760
        %v2468 = vsub.f32 %v2158, %v2467
        %2469 = vmatpush1.msra.mxu0 %v2468
        %v2470 = vand.u32 %v2163, 4294901760
        %v2471 = vsub.f32 %v2163, %v2470
        %2472 = vmatprep.subr.mxu0 %v2471
        %v2473 = vand.u32 %v2162, 4294901760
        %v2474 = vsub.f32 %v2162, %v2473
        %2475 = vmatpush1.msra.mxu0 %v2474
        %v2476 = vand.u32 %v2167, 4294901760
        %v2477 = vsub.f32 %v2167, %v2476
        %2478 = vmatprep.subr.mxu0 %v2477
        %v2479 = vand.u32 %v2166, 4294901760
        %v2480 = vsub.f32 %v2166, %v2479
        %2481 = vmatpush1.msra.mxu0 %v2480
        %v2482 = vand.u32 %v2171, 4294901760
        %v2483 = vsub.f32 %v2171, %v2482
        %2484 = vmatprep.subr.mxu0 %v2483
        %v2485 = vand.u32 %v2170, 4294901760
        %v2486 = vsub.f32 %v2170, %v2485
        %2487 = vmatpush1.msra.mxu0 %v2486
        %2488 = vmatprep.subr.mxu0 0.0
        %2489 = vmatpush1.msra.mxu0 0.0
        %2490 = vmatprep.subr.mxu0 0.0
        %2491 = vmatpush1.msra.mxu0 0.0
        %2492 = vmatprep.subr.mxu0 0.0
        %2493 = vmatpush1.msra.mxu0 0.0
        %2494 = vmatprep.subr.mxu0 0.0
        %2495 = vmatpush1.msra.mxu0 0.0
        %2496 = vmatprep.subr.mxu0 0.0
        %2497 = vmatpush1.msra.mxu0 0.0
        %2498 = vmatprep.subr.mxu0 0.0
        %2499 = vmatpush1.msra.mxu0 0.0
        %2500 = vmatprep.subr.mxu0 0.0
        %2501 = vmatpush1.msra.mxu0 0.0
        %2502 = vmatprep.subr.mxu0 0.0
        %2503 = vmatpush1.msra.mxu0 0.0
        %2504 = vmatprep.subr.mxu0 0.0
        %2505 = vmatpush1.msra.mxu0 0.0
        %2506 = vmatprep.subr.mxu0 0.0
        %2507 = vmatpush1.msra.mxu0 0.0
        %2508 = vmatprep.subr.mxu0 0.0
        %2509 = vmatpush1.msra.mxu0 0.0
        %2510 = vmatprep.subr.mxu0 0.0
        %2511 = vmatpush1.msra.mxu0 0.0
        %2512 = vmatprep.subr.mxu0 0.0
        %2513 = vmatpush1.msra.mxu0 0.0
        %2514 = vmatprep.subr.mxu0 0.0
        %2515 = vmatpush1.msra.mxu0 0.0
        %2516 = vmatprep.subr.mxu0 0.0
        %2517 = vmatpush1.msra.mxu0 0.0
        %2518 = vmatprep.subr.mxu0 0.0
        %2519 = vmatpush1.msra.mxu0 0.0
        %2520 = vmatprep.subr.mxu0 0.0
        %2521 = vmatpush1.msra.mxu0 0.0
        %2522 = vmatprep.subr.mxu0 0.0
        %2523 = vmatpush1.msra.mxu0 0.0
        %2524 = vmatprep.subr.mxu0 0.0
        %2525 = vmatpush1.msra.mxu0 0.0
        %2526 = vmatprep.subr.mxu0 0.0
        %2527 = vmatpush1.msra.mxu0 0.0
        %2528 = vmatprep.subr.mxu0 0.0
        %2529 = vmatpush1.msra.mxu0 0.0
        %2530 = vmatprep.subr.mxu0 0.0
        %2531 = vmatpush1.msra.mxu0 0.0
        %2532 = vmatprep.subr.mxu0 0.0
        %2533 = vmatpush1.msra.mxu0 0.0
        %2534 = vmatprep.subr.mxu0 0.0
        %2535 = vmatpush1.msra.mxu0 0.0
        %2536 = vmatprep.subr.mxu0 0.0
        %2537 = vmatpush1.msra.mxu0 0.0
        %2538 = vmatprep.subr.mxu0 0.0
        %2539 = vmatpush1.msra.mxu0 0.0
        %2540 = vmatprep.subr.mxu0 0.0
        %2541 = vmatpush1.msra.mxu0 0.0
        %2542 = vmatprep.subr.mxu0 0.0
        %2543 = vmatpush1.msra.mxu0 0.0
        %2544 = vmatprep.mubr.f32.mxu0 0.0
        %v2545 = vand.u32 %v2203, 4294901760
        %v2546 = vsub.f32 %v2203, %v2545
        %2547 = vmatmul.mubr.f32.gmra.mrb[0].mxu0 %v2546
        %v2548 = vpop.f32.mrb[0].mxu0
        %v2549 = vadd.f32 %v2439, %v2548
        %v2550 = vpop.f32.mrb[0].mxu0
        %v2551 = vadd.f32 %v2441, %v2550
        %2552 = vmatprep.mubr.f32.mxu0 0.0
        %v2553 = vand.u32 %v2206, 4294901760
        %v2554 = vsub.f32 %v2206, %v2553
        %2555 = vmatmul.mubr.f32.gmra.mrb[0].mxu0 %v2554
        %v2556 = vpop.f32.mrb[0].mxu0
        %v2557 = vadd.f32 %v2446, %v2556
        %v2558 = vpop.f32.mrb[0].mxu0
        %v2559 = vadd.f32 %v2448, %v2558
        %2560 = vmatprep.mubr.f32.mxu0 0.0
        %v2561 = vand.u32 %v2209, 4294901760
        %v2562 = vsub.f32 %v2209, %v2561
        %2563 = vmatmul.mubr.f32.gmra.mrb[0].mxu0 %v2562
        %v2564 = vpop.f32.mrb[0].mxu0
        %v2565 = vadd.f32 %v2453, %v2564
        %v2566 = vpop.f32.mrb[0].mxu0
        %v2567 = vadd.f32 %v2455, %v2566
        %2568 = vmatprep.mubr.f32.mxu0 0.0
        %v2569 = vand.u32 %v2212, 4294901760
        %v2570 = vsub.f32 %v2212, %v2569
        %2571 = vmatmul.mubr.f32.gmra.mrb[0].mxu0 %v2570
        %v2572 = vpop.f32.mrb[0].mxu0
        %v2573 = vadd.f32 %v2460, %v2572
        %v2574 = vpop.f32.mrb[0].mxu0
        %v2575 = vadd.f32 %v2462, %v2574
        %2576 = vdwg.mxu0
        %v2577 = vand.u32 %v2159, 4294901760
        %2578 = vmatprep.subr.mxu0 %v2577
        %v2579 = vand.u32 %v2158, 4294901760
        %2580 = vmatpush1.msra.mxu0 %v2579
        %v2581 = vand.u32 %v2163, 4294901760
        %2582 = vmatprep.subr.mxu0 %v2581
        %v2583 = vand.u32 %v2162, 4294901760
        %2584 = vmatpush1.msra.mxu0 %v2583
        %v2585 = vand.u32 %v2167, 4294901760
        %2586 = vmatprep.subr.mxu0 %v2585
        %v2587 = vand.u32 %v2166, 4294901760
        %2588 = vmatpush1.msra.mxu0 %v2587
        %v2589 = vand.u32 %v2171, 4294901760
        %2590 = vmatprep.subr.mxu0 %v2589
        %v2591 = vand.u32 %v2170, 4294901760
        %2592 = vmatpush1.msra.mxu0 %v2591
        %2593 = vmatprep.subr.mxu0 0.0
        %2594 = vmatpush1.msra.mxu0 0.0
        %2595 = vmatprep.subr.mxu0 0.0
        %2596 = vmatpush1.msra.mxu0 0.0
        %2597 = vmatprep.subr.mxu0 0.0
        %2598 = vmatpush1.msra.mxu0 0.0
        %2599 = vmatprep.subr.mxu0 0.0
        %2600 = vmatpush1.msra.mxu0 0.0
        %2601 = vmatprep.subr.mxu0 0.0
        %2602 = vmatpush1.msra.mxu0 0.0
        %2603 = vmatprep.subr.mxu0 0.0
        %2604 = vmatpush1.msra.mxu0 0.0
        %2605 = vmatprep.subr.mxu0 0.0
        %2606 = vmatpush1.msra.mxu0 0.0
        %2607 = vmatprep.subr.mxu0 0.0
        %2608 = vmatpush1.msra.mxu0 0.0
        %2609 = vmatprep.subr.mxu0 0.0
        %2610 = vmatpush1.msra.mxu0 0.0
        %2611 = vmatprep.subr.mxu0 0.0
        %2612 = vmatpush1.msra.mxu0 0.0
        %2613 = vmatprep.subr.mxu0 0.0
        %2614 = vmatpush1.msra.mxu0 0.0
        %2615 = vmatprep.subr.mxu0 0.0
        %2616 = vmatpush1.msra.mxu0 0.0
        %2617 = vmatprep.subr.mxu0 0.0
        %2618 = vmatpush1.msra.mxu0 0.0
        %2619 = vmatprep.subr.mxu0 0.0
        %2620 = vmatpush1.msra.mxu0 0.0
        %2621 = vmatprep.subr.mxu0 0.0
        %2622 = vmatpush1.msra.mxu0 0.0
        %2623 = vmatprep.subr.mxu0 0.0
        %2624 = vmatpush1.msra.mxu0 0.0
        %2625 = vmatprep.subr.mxu0 0.0
        %2626 = vmatpush1.msra.mxu0 0.0
        %2627 = vmatprep.subr.mxu0 0.0
        %2628 = vmatpush1.msra.mxu0 0.0
        %2629 = vmatprep.subr.mxu0 0.0
        %2630 = vmatpush1.msra.mxu0 0.0
        %2631 = vmatprep.subr.mxu0 0.0
        %2632 = vmatpush1.msra.mxu0 0.0
        %2633 = vmatprep.subr.mxu0 0.0
        %2634 = vmatpush1.msra.mxu0 0.0
        %2635 = vmatprep.subr.mxu0 0.0
        %2636 = vmatpush1.msra.mxu0 0.0
        %2637 = vmatprep.subr.mxu0 0.0
        %2638 = vmatpush1.msra.mxu0 0.0
        %2639 = vmatprep.subr.mxu0 0.0
        %2640 = vmatpush1.msra.mxu0 0.0
        %2641 = vmatprep.subr.mxu0 0.0
        %2642 = vmatpush1.msra.mxu0 0.0
        %2643 = vmatprep.subr.mxu0 0.0
        %2644 = vmatpush1.msra.mxu0 0.0
        %2645 = vmatprep.subr.mxu0 0.0
        %2646 = vmatpush1.msra.mxu0 0.0
        %2647 = vmatprep.subr.mxu0 0.0
        %2648 = vmatpush1.msra.mxu0 0.0
        %2649 = vmatprep.mubr.f32.mxu0 0.0
        %v2650 = vand.u32 %v2203, 4294901760
        %v2651 = vsub.f32 %v2203, %v2650
        %v2652 = vand.u32 %v2651, 4294901760
        %2653 = vmatmul.mubr.f32.gmra.mrb[0].mxu0 %v2652
        %v2654 = vpop.f32.mrb[0].mxu0
        %v2655 = vadd.f32 %v2549, %v2654
        %v2656 = vpop.f32.mrb[0].mxu0
        %v2657 = vadd.f32 %v2551, %v2656
        %2658 = vmatprep.mubr.f32.mxu0 0.0
        %v2659 = vand.u32 %v2206, 4294901760
        %v2660 = vsub.f32 %v2206, %v2659
        %v2661 = vand.u32 %v2660, 4294901760
        %2662 = vmatmul.mubr.f32.gmra.mrb[0].mxu0 %v2661
        %v2663 = vpop.f32.mrb[0].mxu0
        %v2664 = vadd.f32 %v2557, %v2663
        %v2665 = vpop.f32.mrb[0].mxu0
        %v2666 = vadd.f32 %v2559, %v2665
        %2667 = vmatprep.mubr.f32.mxu0 0.0
        %v2668 = vand.u32 %v2209, 4294901760
        %v2669 = vsub.f32 %v2209, %v2668
        %v2670 = vand.u32 %v2669, 4294901760
        %2671 = vmatmul.mubr.f32.gmra.mrb[0].mxu0 %v2670
        %v2672 = vpop.f32.mrb[0].mxu0
        %v2673 = vadd.f32 %v2565, %v2672
        %v2674 = vpop.f32.mrb[0].mxu0
        %v2675 = vadd.f32 %v2567, %v2674
        %2676 = vmatprep.mubr.f32.mxu0 0.0
        %v2677 = vand.u32 %v2212, 4294901760
        %v2678 = vsub.f32 %v2212, %v2677
        %v2679 = vand.u32 %v2678, 4294901760
        %2680 = vmatmul.mubr.f32.gmra.mrb[0].mxu0 %v2679
        %v2681 = vpop.f32.mrb[0].mxu0
        %v2682 = vadd.f32 %v2573, %v2681
        %v2683 = vpop.f32.mrb[0].mxu0
        %v2684 = vadd.f32 %v2575, %v2683
        %2685 = vdwg.mxu0
        %v2686 = vand.u32 %v2159, 4294901760
        %v2687 = vsub.f32 %v2159, %v2686
        %v2688 = vand.u32 %v2687, 4294901760
        %2689 = vmatprep.subr.mxu0 %v2688
        %v2690 = vand.u32 %v2158, 4294901760
        %v2691 = vsub.f32 %v2158, %v2690
        %v2692 = vand.u32 %v2691, 4294901760
        %2693 = vmatpush1.msra.mxu0 %v2692
        %v2694 = vand.u32 %v2163, 4294901760
        %v2695 = vsub.f32 %v2163, %v2694
        %v2696 = vand.u32 %v2695, 4294901760
        %2697 = vmatprep.subr.mxu0 %v2696
        %v2698 = vand.u32 %v2162, 4294901760
        %v2699 = vsub.f32 %v2162, %v2698
        %v2700 = vand.u32 %v2699, 4294901760
        %2701 = vmatpush1.msra.mxu0 %v2700
        %v2702 = vand.u32 %v2167, 4294901760
        %v2703 = vsub.f32 %v2167, %v2702
        %v2704 = vand.u32 %v2703, 4294901760
        %2705 = vmatprep.subr.mxu0 %v2704
        %v2706 = vand.u32 %v2166, 4294901760
        %v2707 = vsub.f32 %v2166, %v2706
        %v2708 = vand.u32 %v2707, 4294901760
        %2709 = vmatpush1.msra.mxu0 %v2708
        %v2710 = vand.u32 %v2171, 4294901760
        %v2711 = vsub.f32 %v2171, %v2710
        %v2712 = vand.u32 %v2711, 4294901760
        %2713 = vmatprep.subr.mxu0 %v2712
        %v2714 = vand.u32 %v2170, 4294901760
        %v2715 = vsub.f32 %v2170, %v2714
        %v2716 = vand.u32 %v2715, 4294901760
        %2717 = vmatpush1.msra.mxu0 %v2716
        %2718 = vmatprep.subr.mxu0 0.0
        %2719 = vmatpush1.msra.mxu0 0.0
        %2720 = vmatprep.subr.mxu0 0.0
        %2721 = vmatpush1.msra.mxu0 0.0
        %2722 = vmatprep.subr.mxu0 0.0
        %2723 = vmatpush1.msra.mxu0 0.0
        %2724 = vmatprep.subr.mxu0 0.0
        %2725 = vmatpush1.msra.mxu0 0.0
        %2726 = vmatprep.subr.mxu0 0.0
        %2727 = vmatpush1.msra.mxu0 0.0
        %2728 = vmatprep.subr.mxu0 0.0
        %2729 = vmatpush1.msra.mxu0 0.0
        %2730 = vmatprep.subr.mxu0 0.0
        %2731 = vmatpush1.msra.mxu0 0.0
        %2732 = vmatprep.subr.mxu0 0.0
        %2733 = vmatpush1.msra.mxu0 0.0
        %2734 = vmatprep.subr.mxu0 0.0
        %2735 = vmatpush1.msra.mxu0 0.0
        %2736 = vmatprep.subr.mxu0 0.0
        %2737 = vmatpush1.msra.mxu0 0.0
        %2738 = vmatprep.subr.mxu0 0.0
        %2739 = vmatpush1.msra.mxu0 0.0
        %2740 = vmatprep.subr.mxu0 0.0
        %2741 = vmatpush1.msra.mxu0 0.0
        %2742 = vmatprep.subr.mxu0 0.0
        %2743 = vmatpush1.msra.mxu0 0.0
        %2744 = vmatprep.subr.mxu0 0.0
        %2745 = vmatpush1.msra.mxu0 0.0
        %2746 = vmatprep.subr.mxu0 0.0
        %2747 = vmatpush1.msra.mxu0 0.0
        %2748 = vmatprep.subr.mxu0 0.0
        %2749 = vmatpush1.msra.mxu0 0.0
        %2750 = vmatprep.subr.mxu0 0.0
        %2751 = vmatpush1.msra.mxu0 0.0
        %2752 = vmatprep.subr.mxu0 0.0
        %2753 = vmatpush1.msra.mxu0 0.0
        %2754 = vmatprep.subr.mxu0 0.0
        %2755 = vmatpush1.msra.mxu0 0.0
        %2756 = vmatprep.subr.mxu0 0.0
        %2757 = vmatpush1.msra.mxu0 0.0
        %2758 = vmatprep.subr.mxu0 0.0
        %2759 = vmatpush1.msra.mxu0 0.0
        %2760 = vmatprep.subr.mxu0 0.0
        %2761 = vmatpush1.msra.mxu0 0.0
        %2762 = vmatprep.subr.mxu0 0.0
        %2763 = vmatpush1.msra.mxu0 0.0
        %2764 = vmatprep.subr.mxu0 0.0
        %2765 = vmatpush1.msra.mxu0 0.0
        %2766 = vmatprep.subr.mxu0 0.0
        %2767 = vmatpush1.msra.mxu0 0.0
        %2768 = vmatprep.subr.mxu0 0.0
        %2769 = vmatpush1.msra.mxu0 0.0
        %2770 = vmatprep.subr.mxu0 0.0
        %2771 = vmatpush1.msra.mxu0 0.0
        %2772 = vmatprep.subr.mxu0 0.0
        %2773 = vmatpush1.msra.mxu0 0.0
        %2774 = vmatprep.mubr.f32.mxu0 0.0
        %v2775 = vand.u32 %v2203, 4294901760
        %2776 = vmatmul.mubr.f32.gmra.mrb[0].mxu0 %v2775
        %v2777 = vpop.f32.mrb[0].mxu0
        %v2778 = vadd.f32 %v2655, %v2777
        %v2779 = vpop.f32.mrb[0].mxu0
        %v2780 = vadd.f32 %v2657, %v2779
        %2781 = vmatprep.mubr.f32.mxu0 0.0
        %v2782 = vand.u32 %v2206, 4294901760
        %2783 = vmatmul.mubr.f32.gmra.mrb[0].mxu0 %v2782
        %v2784 = vpop.f32.mrb[0].mxu0
        %v2785 = vadd.f32 %v2664, %v2784
        %v2786 = vpop.f32.mrb[0].mxu0
        %v2787 = vadd.f32 %v2666, %v2786
        %2788 = vmatprep.mubr.f32.mxu0 0.0
        %v2789 = vand.u32 %v2209, 4294901760
        %2790 = vmatmul.mubr.f32.gmra.mrb[0].mxu0 %v2789
        %v2791 = vpop.f32.mrb[0].mxu0
        %v2792 = vadd.f32 %v2673, %v2791
        %v2793 = vpop.f32.mrb[0].mxu0
        %v2794 = vadd.f32 %v2675, %v2793
        %2795 = vmatprep.mubr.f32.mxu0 0.0
        %v2796 = vand.u32 %v2212, 4294901760
        %2797 = vmatmul.mubr.f32.gmra.mrb[0].mxu0 %v2796
        %v2798 = vpop.f32.mrb[0].mxu0
        %v2799 = vadd.f32 %v2682, %v2798
        %v2800 = vpop.f32.mrb[0].mxu0
        %v2801 = vadd.f32 %v2684, %v2800
        %2802 = vdwg.mxu0
        %v2803 = vand.u32 %v2159, 4294901760
        %2804 = vmatprep.subr.mxu0 %v2803
        %v2805 = vand.u32 %v2158, 4294901760
        %2806 = vmatpush1.msra.mxu0 %v2805
        %v2807 = vand.u32 %v2163, 4294901760
        %2808 = vmatprep.subr.mxu0 %v2807
        %v2809 = vand.u32 %v2162, 4294901760
        %2810 = vmatpush1.msra.mxu0 %v2809
        %v2811 = vand.u32 %v2167, 4294901760
        %2812 = vmatprep.subr.mxu0 %v2811
        %v2813 = vand.u32 %v2166, 4294901760
        %2814 = vmatpush1.msra.mxu0 %v2813
        %v2815 = vand.u32 %v2171, 4294901760
        %2816 = vmatprep.subr.mxu0 %v2815
        %v2817 = vand.u32 %v2170, 4294901760
        %2818 = vmatpush1.msra.mxu0 %v2817
        %2819 = vmatprep.subr.mxu0 0.0
        %2820 = vmatpush1.msra.mxu0 0.0
        %2821 = vmatprep.subr.mxu0 0.0
        %2822 = vmatpush1.msra.mxu0 0.0
        %2823 = vmatprep.subr.mxu0 0.0
        %2824 = vmatpush1.msra.mxu0 0.0
        %2825 = vmatprep.subr.mxu0 0.0
        %2826 = vmatpush1.msra.mxu0 0.0
        %2827 = vmatprep.subr.mxu0 0.0
        %2828 = vmatpush1.msra.mxu0 0.0
        %2829 = vmatprep.subr.mxu0 0.0
        %2830 = vmatpush1.msra.mxu0 0.0
        %2831 = vmatprep.subr.mxu0 0.0
        %2832 = vmatpush1.msra.mxu0 0.0
        %2833 = vmatprep.subr.mxu0 0.0
        %2834 = vmatpush1.msra.mxu0 0.0
        %2835 = vmatprep.subr.mxu0 0.0
        %2836 = vmatpush1.msra.mxu0 0.0
        %2837 = vmatprep.subr.mxu0 0.0
        %2838 = vmatpush1.msra.mxu0 0.0
        %2839 = vmatprep.subr.mxu0 0.0
        %2840 = vmatpush1.msra.mxu0 0.0
        %2841 = vmatprep.subr.mxu0 0.0
        %2842 = vmatpush1.msra.mxu0 0.0
        %2843 = vmatprep.subr.mxu0 0.0
        %2844 = vmatpush1.msra.mxu0 0.0
        %2845 = vmatprep.subr.mxu0 0.0
        %2846 = vmatpush1.msra.mxu0 0.0
        %2847 = vmatprep.subr.mxu0 0.0
        %2848 = vmatpush1.msra.mxu0 0.0
        %2849 = vmatprep.subr.mxu0 0.0
        %2850 = vmatpush1.msra.mxu0 0.0
        %2851 = vmatprep.subr.mxu0 0.0
        %2852 = vmatpush1.msra.mxu0 0.0
        %2853 = vmatprep.subr.mxu0 0.0
        %2854 = vmatpush1.msra.mxu0 0.0
        %2855 = vmatprep.subr.mxu0 0.0
        %2856 = vmatpush1.msra.mxu0 0.0
        %2857 = vmatprep.subr.mxu0 0.0
        %2858 = vmatpush1.msra.mxu0 0.0
        %2859 = vmatprep.subr.mxu0 0.0
        %2860 = vmatpush1.msra.mxu0 0.0
        %2861 = vmatprep.subr.mxu0 0.0
        %2862 = vmatpush1.msra.mxu0 0.0
        %2863 = vmatprep.subr.mxu0 0.0
        %2864 = vmatpush1.msra.mxu0 0.0
        %2865 = vmatprep.subr.mxu0 0.0
        %2866 = vmatpush1.msra.mxu0 0.0
        %2867 = vmatprep.subr.mxu0 0.0
        %2868 = vmatpush1.msra.mxu0 0.0
        %2869 = vmatprep.subr.mxu0 0.0
        %2870 = vmatpush1.msra.mxu0 0.0
        %2871 = vmatprep.subr.mxu0 0.0
        %2872 = vmatpush1.msra.mxu0 0.0
        %2873 = vmatprep.subr.mxu0 0.0
        %2874 = vmatpush1.msra.mxu0 0.0
        %2875 = vmatprep.mubr.f32.mxu0 0.0
        %v2876 = vand.u32 %v2203, 4294901760
        %2877 = vmatmul.mubr.f32.gmra.mrb[0].mxu0 %v2876
        %v2878 = vpop.f32.mrb[0].mxu0
        %v2879 = vadd.f32 %v2778, %v2878
        %v2880 = vpop.f32.mrb[0].mxu0
        %v2881 = vadd.f32 %v2780, %v2880
        %2882 = vmatprep.mubr.f32.mxu0 0.0
        %v2883 = vand.u32 %v2206, 4294901760
        %2884 = vmatmul.mubr.f32.gmra.mrb[0].mxu0 %v2883
        %v2885 = vpop.f32.mrb[0].mxu0
        %v2886 = vadd.f32 %v2785, %v2885
        %v2887 = vpop.f32.mrb[0].mxu0
        %v2888 = vadd.f32 %v2787, %v2887
        %2889 = vmatprep.mubr.f32.mxu0 0.0
        %v2890 = vand.u32 %v2209, 4294901760
        %2891 = vmatmul.mubr.f32.gmra.mrb[0].mxu0 %v2890
        %v2892 = vpop.f32.mrb[0].mxu0
        %v2893 = vadd.f32 %v2792, %v2892
        %v2894 = vpop.f32.mrb[0].mxu0
        %v2895 = vadd.f32 %v2794, %v2894
        %2896 = vmatprep.mubr.f32.mxu0 0.0
        %v2897 = vand.u32 %v2212, 4294901760
        %2898 = vmatmul.mubr.f32.gmra.mrb[0].mxu0 %v2897
        %v2899 = vpop.f32.mrb[0].mxu0
        %v2900 = vadd.f32 %v2799, %v2899
        %v2901 = vpop.f32.mrb[0].mxu0
        %v2902 = vadd.f32 %v2801, %v2901
        %2903 = vdwg.mxu0
        %v2904 = vand.u32 %v2161, 4294901760
        %2905 = vmatprep.subr.mxu0 %v2904
        %v2906 = vand.u32 %v2160, 4294901760
        %2907 = vmatpush1.msra.mxu0 %v2906
        %v2908 = vand.u32 %v2165, 4294901760
        %2909 = vmatprep.subr.mxu0 %v2908
        %v2910 = vand.u32 %v2164, 4294901760
        %2911 = vmatpush1.msra.mxu0 %v2910
        %v2912 = vand.u32 %v2169, 4294901760
        %2913 = vmatprep.subr.mxu0 %v2912
        %v2914 = vand.u32 %v2168, 4294901760
        %2915 = vmatpush1.msra.mxu0 %v2914
        %v2916 = vand.u32 %v2173, 4294901760
        %2917 = vmatprep.subr.mxu0 %v2916
        %v2918 = vand.u32 %v2172, 4294901760
        %2919 = vmatpush1.msra.mxu0 %v2918
        %2920 = vmatprep.subr.mxu0 0.0
        %2921 = vmatpush1.msra.mxu0 0.0
        %2922 = vmatprep.subr.mxu0 0.0
        %2923 = vmatpush1.msra.mxu0 0.0
        %2924 = vmatprep.subr.mxu0 0.0
        %2925 = vmatpush1.msra.mxu0 0.0
        %2926 = vmatprep.subr.mxu0 0.0
        %2927 = vmatpush1.msra.mxu0 0.0
        %2928 = vmatprep.subr.mxu0 0.0
        %2929 = vmatpush1.msra.mxu0 0.0
        %2930 = vmatprep.subr.mxu0 0.0
        %2931 = vmatpush1.msra.mxu0 0.0
        %2932 = vmatprep.subr.mxu0 0.0
        %2933 = vmatpush1.msra.mxu0 0.0
        %2934 = vmatprep.subr.mxu0 0.0
        %2935 = vmatpush1.msra.mxu0 0.0
        %2936 = vmatprep.subr.mxu0 0.0
        %2937 = vmatpush1.msra.mxu0 0.0
        %2938 = vmatprep.subr.mxu0 0.0
        %2939 = vmatpush1.msra.mxu0 0.0
        %2940 = vmatprep.subr.mxu0 0.0
        %2941 = vmatpush1.msra.mxu0 0.0
        %2942 = vmatprep.subr.mxu0 0.0
        %2943 = vmatpush1.msra.mxu0 0.0
        %2944 = vmatprep.subr.mxu0 0.0
        %2945 = vmatpush1.msra.mxu0 0.0
        %2946 = vmatprep.subr.mxu0 0.0
        %2947 = vmatpush1.msra.mxu0 0.0
        %2948 = vmatprep.subr.mxu0 0.0
        %2949 = vmatpush1.msra.mxu0 0.0
        %2950 = vmatprep.subr.mxu0 0.0
        %2951 = vmatpush1.msra.mxu0 0.0
        %2952 = vmatprep.subr.mxu0 0.0
        %2953 = vmatpush1.msra.mxu0 0.0
        %2954 = vmatprep.subr.mxu0 0.0
        %2955 = vmatpush1.msra.mxu0 0.0
        %2956 = vmatprep.subr.mxu0 0.0
        %2957 = vmatpush1.msra.mxu0 0.0
        %2958 = vmatprep.subr.mxu0 0.0
        %2959 = vmatpush1.msra.mxu0 0.0
        %2960 = vmatprep.subr.mxu0 0.0
        %2961 = vmatpush1.msra.mxu0 0.0
        %2962 = vmatprep.subr.mxu0 0.0
        %2963 = vmatpush1.msra.mxu0 0.0
        %2964 = vmatprep.subr.mxu0 0.0
        %2965 = vmatpush1.msra.mxu0 0.0
        %2966 = vmatprep.subr.mxu0 0.0
        %2967 = vmatpush1.msra.mxu0 0.0
        %2968 = vmatprep.subr.mxu0 0.0
        %2969 = vmatpush1.msra.mxu0 0.0
        %2970 = vmatprep.subr.mxu0 0.0
        %2971 = vmatpush1.msra.mxu0 0.0
        %2972 = vmatprep.subr.mxu0 0.0
        %2973 = vmatpush1.msra.mxu0 0.0
        %2974 = vmatprep.subr.mxu0 0.0
        %2975 = vmatpush1.msra.mxu0 0.0
        %2976 = vmatprep.mubr.f32.mxu0 0.0
        %v2977 = vand.u32 %v2203, 4294901760
        %v2978 = vsub.f32 %v2203, %v2977
        %v2979 = vand.u32 %v2978, 4294901760
        %v2980 = vsub.f32 %v2978, %v2979
        %v2981 = vand.u32 %v2980, 4294901760
        %2982 = vmatmul.mubr.f32.gmra.mrb[0].mxu0 %v2981
        %v2983 = vpop.f32.mrb[0].mxu0
        %v2984 = vadd.f32 %v2185, %v2983
        %v2985 = vpop.f32.mrb[0].mxu0
        %v2986 = vadd.f32 %v2185, %v2985
        %2987 = vmatprep.mubr.f32.mxu0 0.0
        %v2988 = vand.u32 %v2206, 4294901760
        %v2989 = vsub.f32 %v2206, %v2988
        %v2990 = vand.u32 %v2989, 4294901760
        %v2991 = vsub.f32 %v2989, %v2990
        %v2992 = vand.u32 %v2991, 4294901760
        %2993 = vmatmul.mubr.f32.gmra.mrb[0].mxu0 %v2992
        %v2994 = vpop.f32.mrb[0].mxu0
        %v2995 = vadd.f32 %v2190, %v2994
        %v2996 = vpop.f32.mrb[0].mxu0
        %v2997 = vadd.f32 %v2190, %v2996
        %2998 = vmatprep.mubr.f32.mxu0 0.0
        %v2999 = vand.u32 %v2209, 4294901760
        %v3000 = vsub.f32 %v2209, %v2999
        %v3001 = vand.u32 %v3000, 4294901760
        %v3002 = vsub.f32 %v3000, %v3001
        %v3003 = vand.u32 %v3002, 4294901760
        %3004 = vmatmul.mubr.f32.gmra.mrb[0].mxu0 %v3003
        %v3005 = vpop.f32.mrb[0].mxu0
        %v3006 = vadd.f32 %v2195, %v3005
        %v3007 = vpop.f32.mrb[0].mxu0
        %v3008 = vadd.f32 %v2195, %v3007
        %3009 = vmatprep.mubr.f32.mxu0 0.0
        %v3010 = vand.u32 %v2212, 4294901760
        %v3011 = vsub.f32 %v2212, %v3010
        %v3012 = vand.u32 %v3011, 4294901760
        %v3013 = vsub.f32 %v3011, %v3012
        %v3014 = vand.u32 %v3013, 4294901760
        %3015 = vmatmul.mubr.f32.gmra.mrb[0].mxu0 %v3014
        %v3016 = vpop.f32.mrb[0].mxu0
        %v3017 = vadd.f32 %v2200, %v3016
        %v3018 = vpop.f32.mrb[0].mxu0
        %v3019 = vadd.f32 %v2200, %v3018
        %3020 = vdwg.mxu0
        %v3021 = vand.u32 %v2161, 4294901760
        %v3022 = vsub.f32 %v2161, %v3021
        %v3023 = vand.u32 %v3022, 4294901760
        %v3024 = vsub.f32 %v3022, %v3023
        %v3025 = vand.u32 %v3024, 4294901760
        %3026 = vmatprep.subr.mxu0 %v3025
        %v3027 = vand.u32 %v2160, 4294901760
        %v3028 = vsub.f32 %v2160, %v3027
        %v3029 = vand.u32 %v3028, 4294901760
        %v3030 = vsub.f32 %v3028, %v3029
        %v3031 = vand.u32 %v3030, 4294901760
        %3032 = vmatpush1.msra.mxu0 %v3031
        %v3033 = vand.u32 %v2165, 4294901760
        %v3034 = vsub.f32 %v2165, %v3033
        %v3035 = vand.u32 %v3034, 4294901760
        %v3036 = vsub.f32 %v3034, %v3035
        %v3037 = vand.u32 %v3036, 4294901760
        %3038 = vmatprep.subr.mxu0 %v3037
        %v3039 = vand.u32 %v2164, 4294901760
        %v3040 = vsub.f32 %v2164, %v3039
        %v3041 = vand.u32 %v3040, 4294901760
        %v3042 = vsub.f32 %v3040, %v3041
        %v3043 = vand.u32 %v3042, 4294901760
        %3044 = vmatpush1.msra.mxu0 %v3043
        %v3045 = vand.u32 %v2169, 4294901760
        %v3046 = vsub.f32 %v2169, %v3045
        %v3047 = vand.u32 %v3046, 4294901760
        %v3048 = vsub.f32 %v3046, %v3047
        %v3049 = vand.u32 %v3048, 4294901760
        %3050 = vmatprep.subr.mxu0 %v3049
        %v3051 = vand.u32 %v2168, 4294901760
        %v3052 = vsub.f32 %v2168, %v3051
        %v3053 = vand.u32 %v3052, 4294901760
        %v3054 = vsub.f32 %v3052, %v3053
        %v3055 = vand.u32 %v3054, 4294901760
        %3056 = vmatpush1.msra.mxu0 %v3055
        %v3057 = vand.u32 %v2173, 4294901760
        %v3058 = vsub.f32 %v2173, %v3057
        %v3059 = vand.u32 %v3058, 4294901760
        %v3060 = vsub.f32 %v3058, %v3059
        %v3061 = vand.u32 %v3060, 4294901760
        %3062 = vmatprep.subr.mxu0 %v3061
        %v3063 = vand.u32 %v2172, 4294901760
        %v3064 = vsub.f32 %v2172, %v3063
        %v3065 = vand.u32 %v3064, 4294901760
        %v3066 = vsub.f32 %v3064, %v3065
        %v3067 = vand.u32 %v3066, 4294901760
        %3068 = vmatpush1.msra.mxu0 %v3067
        %3069 = vmatprep.subr.mxu0 0.0
        %3070 = vmatpush1.msra.mxu0 0.0
        %3071 = vmatprep.subr.mxu0 0.0
        %3072 = vmatpush1.msra.mxu0 0.0
        %3073 = vmatprep.subr.mxu0 0.0
        %3074 = vmatpush1.msra.mxu0 0.0
        %3075 = vmatprep.subr.mxu0 0.0
        %3076 = vmatpush1.msra.mxu0 0.0
        %3077 = vmatprep.subr.mxu0 0.0
        %3078 = vmatpush1.msra.mxu0 0.0
        %3079 = vmatprep.subr.mxu0 0.0
        %3080 = vmatpush1.msra.mxu0 0.0
        %3081 = vmatprep.subr.mxu0 0.0
        %3082 = vmatpush1.msra.mxu0 0.0
        %3083 = vmatprep.subr.mxu0 0.0
        %3084 = vmatpush1.msra.mxu0 0.0
        %3085 = vmatprep.subr.mxu0 0.0
        %3086 = vmatpush1.msra.mxu0 0.0
        %3087 = vmatprep.subr.mxu0 0.0
        %3088 = vmatpush1.msra.mxu0 0.0
        %3089 = vmatprep.subr.mxu0 0.0
        %3090 = vmatpush1.msra.mxu0 0.0
        %3091 = vmatprep.subr.mxu0 0.0
        %3092 = vmatpush1.msra.mxu0 0.0
        %3093 = vmatprep.subr.mxu0 0.0
        %3094 = vmatpush1.msra.mxu0 0.0
        %3095 = vmatprep.subr.mxu0 0.0
        %3096 = vmatpush1.msra.mxu0 0.0
        %3097 = vmatprep.subr.mxu0 0.0
        %3098 = vmatpush1.msra.mxu0 0.0
        %3099 = vmatprep.subr.mxu0 0.0
        %3100 = vmatpush1.msra.mxu0 0.0
        %3101 = vmatprep.subr.mxu0 0.0
        %3102 = vmatpush1.msra.mxu0 0.0
        %3103 = vmatprep.subr.mxu0 0.0
        %3104 = vmatpush1.msra.mxu0 0.0
        %3105 = vmatprep.subr.mxu0 0.0
        %3106 = vmatpush1.msra.mxu0 0.0
        %3107 = vmatprep.subr.mxu0 0.0
        %3108 = vmatpush1.msra.mxu0 0.0
        %3109 = vmatprep.subr.mxu0 0.0
        %3110 = vmatpush1.msra.mxu0 0.0
        %3111 = vmatprep.subr.mxu0 0.0
        %3112 = vmatpush1.msra.mxu0 0.0
        %3113 = vmatprep.subr.mxu0 0.0
        %3114 = vmatpush1.msra.mxu0 0.0
        %3115 = vmatprep.subr.mxu0 0.0
        %3116 = vmatpush1.msra.mxu0 0.0
        %3117 = vmatprep.subr.mxu0 0.0
        %3118 = vmatpush1.msra.mxu0 0.0
        %3119 = vmatprep.subr.mxu0 0.0
        %3120 = vmatpush1.msra.mxu0 0.0
        %3121 = vmatprep.subr.mxu0 0.0
        %3122 = vmatpush1.msra.mxu0 0.0
        %3123 = vmatprep.subr.mxu0 0.0
        %3124 = vmatpush1.msra.mxu0 0.0
        %3125 = vmatprep.mubr.f32.mxu0 0.0
        %v3126 = vand.u32 %v2203, 4294901760
        %3127 = vmatmul.mubr.f32.gmra.mrb[0].mxu0 %v3126
        %v3128 = vpop.f32.mrb[0].mxu0
        %v3129 = vadd.f32 %v2984, %v3128
        %v3130 = vpop.f32.mrb[0].mxu0
        %v3131 = vadd.f32 %v2986, %v3130
        %3132 = vmatprep.mubr.f32.mxu0 0.0
        %v3133 = vand.u32 %v2206, 4294901760
        %3134 = vmatmul.mubr.f32.gmra.mrb[0].mxu0 %v3133
        %v3135 = vpop.f32.mrb[0].mxu0
        %v3136 = vadd.f32 %v2995, %v3135
        %v3137 = vpop.f32.mrb[0].mxu0
        %v3138 = vadd.f32 %v2997, %v3137
        %3139 = vmatprep.mubr.f32.mxu0 0.0
        %v3140 = vand.u32 %v2209, 4294901760
        %3141 = vmatmul.mubr.f32.gmra.mrb[0].mxu0 %v3140
        %v3142 = vpop.f32.mrb[0].mxu0
        %v3143 = vadd.f32 %v3006, %v3142
        %v3144 = vpop.f32.mrb[0].mxu0
        %v3145 = vadd.f32 %v3008, %v3144
        %3146 = vmatprep.mubr.f32.mxu0 0.0
        %v3147 = vand.u32 %v2212, 4294901760
        %3148 = vmatmul.mubr.f32.gmra.mrb[0].mxu0 %v3147
        %v3149 = vpop.f32.mrb[0].mxu0
        %v3150 = vadd.f32 %v3017, %v3149
        %v3151 = vpop.f32.mrb[0].mxu0
        %v3152 = vadd.f32 %v3019, %v3151
        %3153 = vdwg.mxu0
        %v3154 = vand.u32 %v2161, 4294901760
        %v3155 = vsub.f32 %v2161, %v3154
        %3156 = vmatprep.subr.mxu0 %v3155
        %v3157 = vand.u32 %v2160, 4294901760
        %v3158 = vsub.f32 %v2160, %v3157
        %3159 = vmatpush1.msra.mxu0 %v3158
        %v3160 = vand.u32 %v2165, 4294901760
        %v3161 = vsub.f32 %v2165, %v3160
        %3162 = vmatprep.subr.mxu0 %v3161
        %v3163 = vand.u32 %v2164, 4294901760
        %v3164 = vsub.f32 %v2164, %v3163
        %3165 = vmatpush1.msra.mxu0 %v3164
        %v3166 = vand.u32 %v2169, 4294901760
        %v3167 = vsub.f32 %v2169, %v3166
        %3168 = vmatprep.subr.mxu0 %v3167
        %v3169 = vand.u32 %v2168, 4294901760
        %v3170 = vsub.f32 %v2168, %v3169
        %3171 = vmatpush1.msra.mxu0 %v3170
        %v3172 = vand.u32 %v2173, 4294901760
        %v3173 = vsub.f32 %v2173, %v3172
        %3174 = vmatprep.subr.mxu0 %v3173
        %v3175 = vand.u32 %v2172, 4294901760
        %v3176 = vsub.f32 %v2172, %v3175
        %3177 = vmatpush1.msra.mxu0 %v3176
        %3178 = vmatprep.subr.mxu0 0.0
        %3179 = vmatpush1.msra.mxu0 0.0
        %3180 = vmatprep.subr.mxu0 0.0
        %3181 = vmatpush1.msra.mxu0 0.0
        %3182 = vmatprep.subr.mxu0 0.0
        %3183 = vmatpush1.msra.mxu0 0.0
        %3184 = vmatprep.subr.mxu0 0.0
        %3185 = vmatpush1.msra.mxu0 0.0
        %3186 = vmatprep.subr.mxu0 0.0
        %3187 = vmatpush1.msra.mxu0 0.0
        %3188 = vmatprep.subr.mxu0 0.0
        %3189 = vmatpush1.msra.mxu0 0.0
        %3190 = vmatprep.subr.mxu0 0.0
        %3191 = vmatpush1.msra.mxu0 0.0
        %3192 = vmatprep.subr.mxu0 0.0
        %3193 = vmatpush1.msra.mxu0 0.0
        %3194 = vmatprep.subr.mxu0 0.0
        %3195 = vmatpush1.msra.mxu0 0.0
        %3196 = vmatprep.subr.mxu0 0.0
        %3197 = vmatpush1.msra.mxu0 0.0
        %3198 = vmatprep.subr.mxu0 0.0
        %3199 = vmatpush1.msra.mxu0 0.0
        %3200 = vmatprep.subr.mxu0 0.0
        %3201 = vmatpush1.msra.mxu0 0.0
        %3202 = vmatprep.subr.mxu0 0.0
        %3203 = vmatpush1.msra.mxu0 0.0
        %3204 = vmatprep.subr.mxu0 0.0
        %3205 = vmatpush1.msra.mxu0 0.0
        %3206 = vmatprep.subr.mxu0 0.0
        %3207 = vmatpush1.msra.mxu0 0.0
        %3208 = vmatprep.subr.mxu0 0.0
        %3209 = vmatpush1.msra.mxu0 0.0
        %3210 = vmatprep.subr.mxu0 0.0
        %3211 = vmatpush1.msra.mxu0 0.0
        %3212 = vmatprep.subr.mxu0 0.0
        %3213 = vmatpush1.msra.mxu0 0.0
        %3214 = vmatprep.subr.mxu0 0.0
        %3215 = vmatpush1.msra.mxu0 0.0
        %3216 = vmatprep.subr.mxu0 0.0
        %3217 = vmatpush1.msra.mxu0 0.0
        %3218 = vmatprep.subr.mxu0 0.0
        %3219 = vmatpush1.msra.mxu0 0.0
        %3220 = vmatprep.subr.mxu0 0.0
        %3221 = vmatpush1.msra.mxu0 0.0
        %3222 = vmatprep.subr.mxu0 0.0
        %3223 = vmatpush1.msra.mxu0 0.0
        %3224 = vmatprep.subr.mxu0 0.0
        %3225 = vmatpush1.msra.mxu0 0.0
        %3226 = vmatprep.subr.mxu0 0.0
        %3227 = vmatpush1.msra.mxu0 0.0
        %3228 = vmatprep.subr.mxu0 0.0
        %3229 = vmatpush1.msra.mxu0 0.0
        %3230 = vmatprep.subr.mxu0 0.0
        %3231 = vmatpush1.msra.mxu0 0.0
        %3232 = vmatprep.subr.mxu0 0.0
        %3233 = vmatpush1.msra.mxu0 0.0
        %3234 = vmatprep.mubr.f32.mxu0 0.0
        %v3235 = vand.u32 %v2203, 4294901760
        %v3236 = vsub.f32 %v2203, %v3235
        %3237 = vmatmul.mubr.f32.gmra.mrb[0].mxu0 %v3236
        %v3238 = vpop.f32.mrb[0].mxu0
        %v3239 = vadd.f32 %v3129, %v3238
        %v3240 = vpop.f32.mrb[0].mxu0
        %v3241 = vadd.f32 %v3131, %v3240
        %3242 = vmatprep.mubr.f32.mxu0 0.0
        %v3243 = vand.u32 %v2206, 4294901760
        %v3244 = vsub.f32 %v2206, %v3243
        %3245 = vmatmul.mubr.f32.gmra.mrb[0].mxu0 %v3244
        %v3246 = vpop.f32.mrb[0].mxu0
        %v3247 = vadd.f32 %v3136, %v3246
        %v3248 = vpop.f32.mrb[0].mxu0
        %v3249 = vadd.f32 %v3138, %v3248
        %3250 = vmatprep.mubr.f32.mxu0 0.0
        %v3251 = vand.u32 %v2209, 4294901760
        %v3252 = vsub.f32 %v2209, %v3251
        %3253 = vmatmul.mubr.f32.gmra.mrb[0].mxu0 %v3252
        %v3254 = vpop.f32.mrb[0].mxu0
        %v3255 = vadd.f32 %v3143, %v3254
        %v3256 = vpop.f32.mrb[0].mxu0
        %v3257 = vadd.f32 %v3145, %v3256
        %3258 = vmatprep.mubr.f32.mxu0 0.0
        %v3259 = vand.u32 %v2212, 4294901760
        %v3260 = vsub.f32 %v2212, %v3259
        %3261 = vmatmul.mubr.f32.gmra.mrb[0].mxu0 %v3260
        %v3262 = vpop.f32.mrb[0].mxu0
        %v3263 = vadd.f32 %v3150, %v3262
        %v3264 = vpop.f32.mrb[0].mxu0
        %v3265 = vadd.f32 %v3152, %v3264
        %3266 = vdwg.mxu0
        %v3267 = vand.u32 %v2161, 4294901760
        %3268 = vmatprep.subr.mxu0 %v3267
        %v3269 = vand.u32 %v2160, 4294901760
        %3270 = vmatpush1.msra.mxu0 %v3269
        %v3271 = vand.u32 %v2165, 4294901760
        %3272 = vmatprep.subr.mxu0 %v3271
        %v3273 = vand.u32 %v2164, 4294901760
        %3274 = vmatpush1.msra.mxu0 %v3273
        %v3275 = vand.u32 %v2169, 4294901760
        %3276 = vmatprep.subr.mxu0 %v3275
        %v3277 = vand.u32 %v2168, 4294901760
        %3278 = vmatpush1.msra.mxu0 %v3277
        %v3279 = vand.u32 %v2173, 4294901760
        %3280 = vmatprep.subr.mxu0 %v3279
        %v3281 = vand.u32 %v2172, 4294901760
        %3282 = vmatpush1.msra.mxu0 %v3281
        %3283 = vmatprep.subr.mxu0 0.0
        %3284 = vmatpush1.msra.mxu0 0.0
        %3285 = vmatprep.subr.mxu0 0.0
        %3286 = vmatpush1.msra.mxu0 0.0
        %3287 = vmatprep.subr.mxu0 0.0
        %3288 = vmatpush1.msra.mxu0 0.0
        %3289 = vmatprep.subr.mxu0 0.0
        %3290 = vmatpush1.msra.mxu0 0.0
        %3291 = vmatprep.subr.mxu0 0.0
        %3292 = vmatpush1.msra.mxu0 0.0
        %3293 = vmatprep.subr.mxu0 0.0
        %3294 = vmatpush1.msra.mxu0 0.0
        %3295 = vmatprep.subr.mxu0 0.0
        %3296 = vmatpush1.msra.mxu0 0.0
        %3297 = vmatprep.subr.mxu0 0.0
        %3298 = vmatpush1.msra.mxu0 0.0
        %3299 = vmatprep.subr.mxu0 0.0
        %3300 = vmatpush1.msra.mxu0 0.0
        %3301 = vmatprep.subr.mxu0 0.0
        %3302 = vmatpush1.msra.mxu0 0.0
        %3303 = vmatprep.subr.mxu0 0.0
        %3304 = vmatpush1.msra.mxu0 0.0
        %3305 = vmatprep.subr.mxu0 0.0
        %3306 = vmatpush1.msra.mxu0 0.0
        %3307 = vmatprep.subr.mxu0 0.0
        %3308 = vmatpush1.msra.mxu0 0.0
        %3309 = vmatprep.subr.mxu0 0.0
        %3310 = vmatpush1.msra.mxu0 0.0
        %3311 = vmatprep.subr.mxu0 0.0
        %3312 = vmatpush1.msra.mxu0 0.0
        %3313 = vmatprep.subr.mxu0 0.0
        %3314 = vmatpush1.msra.mxu0 0.0
        %3315 = vmatprep.subr.mxu0 0.0
        %3316 = vmatpush1.msra.mxu0 0.0
        %3317 = vmatprep.subr.mxu0 0.0
        %3318 = vmatpush1.msra.mxu0 0.0
        %3319 = vmatprep.subr.mxu0 0.0
        %3320 = vmatpush1.msra.mxu0 0.0
        %3321 = vmatprep.subr.mxu0 0.0
        %3322 = vmatpush1.msra.mxu0 0.0
        %3323 = vmatprep.subr.mxu0 0.0
        %3324 = vmatpush1.msra.mxu0 0.0
        %3325 = vmatprep.subr.mxu0 0.0
        %3326 = vmatpush1.msra.mxu0 0.0
        %3327 = vmatprep.subr.mxu0 0.0
        %3328 = vmatpush1.msra.mxu0 0.0
        %3329 = vmatprep.subr.mxu0 0.0
        %3330 = vmatpush1.msra.mxu0 0.0
        %3331 = vmatprep.subr.mxu0 0.0
        %3332 = vmatpush1.msra.mxu0 0.0
        %3333 = vmatprep.subr.mxu0 0.0
        %3334 = vmatpush1.msra.mxu0 0.0
        %3335 = vmatprep.subr.mxu0 0.0
        %3336 = vmatpush1.msra.mxu0 0.0
        %3337 = vmatprep.subr.mxu0 0.0
        %3338 = vmatpush1.msra.mxu0 0.0
        %3339 = vmatprep.mubr.f32.mxu0 0.0
        %v3340 = vand.u32 %v2203, 4294901760
        %v3341 = vsub.f32 %v2203, %v3340
        %v3342 = vand.u32 %v3341, 4294901760
        %3343 = vmatmul.mubr.f32.gmra.mrb[0].mxu0 %v3342
        %v3344 = vpop.f32.mrb[0].mxu0
        %v3345 = vadd.f32 %v3239, %v3344
        %v3346 = vpop.f32.mrb[0].mxu0
        %v3347 = vadd.f32 %v3241, %v3346
        %3348 = vmatprep.mubr.f32.mxu0 0.0
        %v3349 = vand.u32 %v2206, 4294901760
        %v3350 = vsub.f32 %v2206, %v3349
        %v3351 = vand.u32 %v3350, 4294901760
        %3352 = vmatmul.mubr.f32.gmra.mrb[0].mxu0 %v3351
        %v3353 = vpop.f32.mrb[0].mxu0
        %v3354 = vadd.f32 %v3247, %v3353
        %v3355 = vpop.f32.mrb[0].mxu0
        %v3356 = vadd.f32 %v3249, %v3355
        %3357 = vmatprep.mubr.f32.mxu0 0.0
        %v3358 = vand.u32 %v2209, 4294901760
        %v3359 = vsub.f32 %v2209, %v3358
        %v3360 = vand.u32 %v3359, 4294901760
        %3361 = vmatmul.mubr.f32.gmra.mrb[0].mxu0 %v3360
        %v3362 = vpop.f32.mrb[0].mxu0
        %v3363 = vadd.f32 %v3255, %v3362
        %v3364 = vpop.f32.mrb[0].mxu0
        %v3365 = vadd.f32 %v3257, %v3364
        %3366 = vmatprep.mubr.f32.mxu0 0.0
        %v3367 = vand.u32 %v2212, 4294901760
        %v3368 = vsub.f32 %v2212, %v3367
        %v3369 = vand.u32 %v3368, 4294901760
        %3370 = vmatmul.mubr.f32.gmra.mrb[0].mxu0 %v3369
        %v3371 = vpop.f32.mrb[0].mxu0
        %v3372 = vadd.f32 %v3263, %v3371
        %v3373 = vpop.f32.mrb[0].mxu0
        %v3374 = vadd.f32 %v3265, %v3373
        %3375 = vdwg.mxu0
        %v3376 = vand.u32 %v2161, 4294901760
        %v3377 = vsub.f32 %v2161, %v3376
        %v3378 = vand.u32 %v3377, 4294901760
        %3379 = vmatprep.subr.mxu0 %v3378
        %v3380 = vand.u32 %v2160, 4294901760
        %v3381 = vsub.f32 %v2160, %v3380
        %v3382 = vand.u32 %v3381, 4294901760
        %3383 = vmatpush1.msra.mxu0 %v3382
        %v3384 = vand.u32 %v2165, 4294901760
        %v3385 = vsub.f32 %v2165, %v3384
        %v3386 = vand.u32 %v3385, 4294901760
        %3387 = vmatprep.subr.mxu0 %v3386
        %v3388 = vand.u32 %v2164, 4294901760
        %v3389 = vsub.f32 %v2164, %v3388
        %v3390 = vand.u32 %v3389, 4294901760
        %3391 = vmatpush1.msra.mxu0 %v3390
        %v3392 = vand.u32 %v2169, 4294901760
        %v3393 = vsub.f32 %v2169, %v3392
        %v3394 = vand.u32 %v3393, 4294901760
        %3395 = vmatprep.subr.mxu0 %v3394
        %v3396 = vand.u32 %v2168, 4294901760
        %v3397 = vsub.f32 %v2168, %v3396
        %v3398 = vand.u32 %v3397, 4294901760
        %3399 = vmatpush1.msra.mxu0 %v3398
        %v3400 = vand.u32 %v2173, 4294901760
        %v3401 = vsub.f32 %v2173, %v3400
        %v3402 = vand.u32 %v3401, 4294901760
        %3403 = vmatprep.subr.mxu0 %v3402
        %v3404 = vand.u32 %v2172, 4294901760
        %v3405 = vsub.f32 %v2172, %v3404
        %v3406 = vand.u32 %v3405, 4294901760
        %3407 = vmatpush1.msra.mxu0 %v3406
        %3408 = vmatprep.subr.mxu0 0.0
        %3409 = vmatpush1.msra.mxu0 0.0
        %3410 = vmatprep.subr.mxu0 0.0
        %3411 = vmatpush1.msra.mxu0 0.0
        %3412 = vmatprep.subr.mxu0 0.0
        %3413 = vmatpush1.msra.mxu0 0.0
        %3414 = vmatprep.subr.mxu0 0.0
        %3415 = vmatpush1.msra.mxu0 0.0
        %3416 = vmatprep.subr.mxu0 0.0
        %3417 = vmatpush1.msra.mxu0 0.0
        %3418 = vmatprep.subr.mxu0 0.0
        %3419 = vmatpush1.msra.mxu0 0.0
        %3420 = vmatprep.subr.mxu0 0.0
        %3421 = vmatpush1.msra.mxu0 0.0
        %3422 = vmatprep.subr.mxu0 0.0
        %3423 = vmatpush1.msra.mxu0 0.0
        %3424 = vmatprep.subr.mxu0 0.0
        %3425 = vmatpush1.msra.mxu0 0.0
        %3426 = vmatprep.subr.mxu0 0.0
        %3427 = vmatpush1.msra.mxu0 0.0
        %3428 = vmatprep.subr.mxu0 0.0
        %3429 = vmatpush1.msra.mxu0 0.0
        %3430 = vmatprep.subr.mxu0 0.0
        %3431 = vmatpush1.msra.mxu0 0.0
        %3432 = vmatprep.subr.mxu0 0.0
        %3433 = vmatpush1.msra.mxu0 0.0
        %3434 = vmatprep.subr.mxu0 0.0
        %3435 = vmatpush1.msra.mxu0 0.0
        %3436 = vmatprep.subr.mxu0 0.0
        %3437 = vmatpush1.msra.mxu0 0.0
        %3438 = vmatprep.subr.mxu0 0.0
        %3439 = vmatpush1.msra.mxu0 0.0
        %3440 = vmatprep.subr.mxu0 0.0
        %3441 = vmatpush1.msra.mxu0 0.0
        %3442 = vmatprep.subr.mxu0 0.0
        %3443 = vmatpush1.msra.mxu0 0.0
        %3444 = vmatprep.subr.mxu0 0.0
        %3445 = vmatpush1.msra.mxu0 0.0
        %3446 = vmatprep.subr.mxu0 0.0
        %3447 = vmatpush1.msra.mxu0 0.0
        %3448 = vmatprep.subr.mxu0 0.0
        %3449 = vmatpush1.msra.mxu0 0.0
        %3450 = vmatprep.subr.mxu0 0.0
        %3451 = vmatpush1.msra.mxu0 0.0
        %3452 = vmatprep.subr.mxu0 0.0
        %3453 = vmatpush1.msra.mxu0 0.0
        %3454 = vmatprep.subr.mxu0 0.0
        %3455 = vmatpush1.msra.mxu0 0.0
        %3456 = vmatprep.subr.mxu0 0.0
        %3457 = vmatpush1.msra.mxu0 0.0
        %3458 = vmatprep.subr.mxu0 0.0
        %3459 = vmatpush1.msra.mxu0 0.0
        %3460 = vmatprep.subr.mxu0 0.0
        %3461 = vmatpush1.msra.mxu0 0.0
        %3462 = vmatprep.subr.mxu0 0.0
        %3463 = vmatpush1.msra.mxu0 0.0
        %3464 = vmatprep.mubr.f32.mxu0 0.0
        %v3465 = vand.u32 %v2203, 4294901760
        %3466 = vmatmul.mubr.f32.gmra.mrb[0].mxu0 %v3465
        %v3467 = vpop.f32.mrb[0].mxu0
        %v3468 = vadd.f32 %v3345, %v3467
        %v3469 = vpop.f32.mrb[0].mxu0
        %v3470 = vadd.f32 %v3347, %v3469
        %3471 = vmatprep.mubr.f32.mxu0 0.0
        %v3472 = vand.u32 %v2206, 4294901760
        %3473 = vmatmul.mubr.f32.gmra.mrb[0].mxu0 %v3472
        %v3474 = vpop.f32.mrb[0].mxu0
        %v3475 = vadd.f32 %v3354, %v3474
        %v3476 = vpop.f32.mrb[0].mxu0
        %v3477 = vadd.f32 %v3356, %v3476
        %3478 = vmatprep.mubr.f32.mxu0 0.0
        %v3479 = vand.u32 %v2209, 4294901760
        %3480 = vmatmul.mubr.f32.gmra.mrb[0].mxu0 %v3479
        %v3481 = vpop.f32.mrb[0].mxu0
        %v3482 = vadd.f32 %v3363, %v3481
        %v3483 = vpop.f32.mrb[0].mxu0
        %v3484 = vadd.f32 %v3365, %v3483
        %3485 = vmatprep.mubr.f32.mxu0 0.0
        %v3486 = vand.u32 %v2212, 4294901760
        %3487 = vmatmul.mubr.f32.gmra.mrb[0].mxu0 %v3486
        %v3488 = vpop.f32.mrb[0].mxu0
        %v3489 = vadd.f32 %v3372, %v3488
        %v3490 = vpop.f32.mrb[0].mxu0
        %v3491 = vadd.f32 %v3374, %v3490
        %3492 = vdwg.mxu0
        %v3493 = vand.u32 %v2161, 4294901760
        %3494 = vmatprep.subr.mxu0 %v3493
        %v3495 = vand.u32 %v2160, 4294901760
        %3496 = vmatpush1.msra.mxu0 %v3495
        %v3497 = vand.u32 %v2165, 4294901760
        %3498 = vmatprep.subr.mxu0 %v3497
        %v3499 = vand.u32 %v2164, 4294901760
        %3500 = vmatpush1.msra.mxu0 %v3499
        %v3501 = vand.u32 %v2169, 4294901760
        %3502 = vmatprep.subr.mxu0 %v3501
        %v3503 = vand.u32 %v2168, 4294901760
        %3504 = vmatpush1.msra.mxu0 %v3503
        %v3505 = vand.u32 %v2173, 4294901760
        %3506 = vmatprep.subr.mxu0 %v3505
        %v3507 = vand.u32 %v2172, 4294901760
        %3508 = vmatpush1.msra.mxu0 %v3507
        %3509 = vmatprep.subr.mxu0 0.0
        %3510 = vmatpush1.msra.mxu0 0.0
        %3511 = vmatprep.subr.mxu0 0.0
        %3512 = vmatpush1.msra.mxu0 0.0
        %3513 = vmatprep.subr.mxu0 0.0
        %3514 = vmatpush1.msra.mxu0 0.0
        %3515 = vmatprep.subr.mxu0 0.0
        %3516 = vmatpush1.msra.mxu0 0.0
        %3517 = vmatprep.subr.mxu0 0.0
        %3518 = vmatpush1.msra.mxu0 0.0
        %3519 = vmatprep.subr.mxu0 0.0
        %3520 = vmatpush1.msra.mxu0 0.0
        %3521 = vmatprep.subr.mxu0 0.0
        %3522 = vmatpush1.msra.mxu0 0.0
        %3523 = vmatprep.subr.mxu0 0.0
        %3524 = vmatpush1.msra.mxu0 0.0
        %3525 = vmatprep.subr.mxu0 0.0
        %3526 = vmatpush1.msra.mxu0 0.0
        %3527 = vmatprep.subr.mxu0 0.0
        %3528 = vmatpush1.msra.mxu0 0.0
        %3529 = vmatprep.subr.mxu0 0.0
        %3530 = vmatpush1.msra.mxu0 0.0
        %3531 = vmatprep.subr.mxu0 0.0
        %3532 = vmatpush1.msra.mxu0 0.0
        %3533 = vmatprep.subr.mxu0 0.0
        %3534 = vmatpush1.msra.mxu0 0.0
        %3535 = vmatprep.subr.mxu0 0.0
        %3536 = vmatpush1.msra.mxu0 0.0
        %3537 = vmatprep.subr.mxu0 0.0
        %3538 = vmatpush1.msra.mxu0 0.0
        %3539 = vmatprep.subr.mxu0 0.0
        %3540 = vmatpush1.msra.mxu0 0.0
        %3541 = vmatprep.subr.mxu0 0.0
        %3542 = vmatpush1.msra.mxu0 0.0
        %3543 = vmatprep.subr.mxu0 0.0
        %3544 = vmatpush1.msra.mxu0 0.0
        %3545 = vmatprep.subr.mxu0 0.0
        %3546 = vmatpush1.msra.mxu0 0.0
        %3547 = vmatprep.subr.mxu0 0.0
        %3548 = vmatpush1.msra.mxu0 0.0
        %3549 = vmatprep.subr.mxu0 0.0
        %3550 = vmatpush1.msra.mxu0 0.0
        %3551 = vmatprep.subr.mxu0 0.0
        %3552 = vmatpush1.msra.mxu0 0.0
        %3553 = vmatprep.subr.mxu0 0.0
        %3554 = vmatpush1.msra.mxu0 0.0
        %3555 = vmatprep.subr.mxu0 0.0
        %3556 = vmatpush1.msra.mxu0 0.0
        %3557 = vmatprep.subr.mxu0 0.0
        %3558 = vmatpush1.msra.mxu0 0.0
        %3559 = vmatprep.subr.mxu0 0.0
        %3560 = vmatpush1.msra.mxu0 0.0
        %3561 = vmatprep.subr.mxu0 0.0
        %3562 = vmatpush1.msra.mxu0 0.0
        %3563 = vmatprep.subr.mxu0 0.0
        %3564 = vmatpush1.msra.mxu0 0.0
        %3565 = vmatprep.mubr.f32.mxu0 0.0
        %v3566 = vand.u32 %v2203, 4294901760
        %3567 = vmatmul.mubr.f32.gmra.mrb[0].mxu0 %v3566
        %v3568 = vpop.f32.mrb[0].mxu0
        %v3569 = vadd.f32 %v3468, %v3568
        %v3570 = vpop.f32.mrb[0].mxu0
        %v3571 = vadd.f32 %v3470, %v3570
        %3572 = vmatprep.mubr.f32.mxu0 0.0
        %v3573 = vand.u32 %v2206, 4294901760
        %3574 = vmatmul.mubr.f32.gmra.mrb[0].mxu0 %v3573
        %v3575 = vpop.f32.mrb[0].mxu0
        %v3576 = vadd.f32 %v3475, %v3575
        %v3577 = vpop.f32.mrb[0].mxu0
        %v3578 = vadd.f32 %v3477, %v3577
        %3579 = vmatprep.mubr.f32.mxu0 0.0
        %v3580 = vand.u32 %v2209, 4294901760
        %3581 = vmatmul.mubr.f32.gmra.mrb[0].mxu0 %v3580
        %v3582 = vpop.f32.mrb[0].mxu0
        %v3583 = vadd.f32 %v3482, %v3582
        %v3584 = vpop.f32.mrb[0].mxu0
        %v3585 = vadd.f32 %v3484, %v3584
        %3586 = vmatprep.mubr.f32.mxu0 0.0
        %v3587 = vand.u32 %v2212, 4294901760
        %3588 = vmatmul.mubr.f32.gmra.mrb[0].mxu0 %v3587
        %v3589 = vpop.f32.mrb[0].mxu0
        %v3590 = vadd.f32 %v3489, %v3589
        %v3591 = vpop.f32.mrb[0].mxu0
        %v3592 = vadd.f32 %v3491, %v3591
        %3593 = vdwg.mxu0
        %v3594 = vmax.f32 %v2879, 0.0
        %v3595 = vmax.f32 %v2881, 0.0
        %v3596 = vmax.f32 %v3569, 0.0
        %v3597 = vmax.f32 %v3571, 0.0
        %v3598 = vmax.f32 %v2886, 0.0
        %v3599 = vmax.f32 %v2888, 0.0
        %v3600 = vmax.f32 %v3576, 0.0
        %v3601 = vmax.f32 %v3578, 0.0
        %v3602 = vmax.f32 %v2893, 0.0
        %v3603 = vmax.f32 %v2895, 0.0
        %v3604 = vmax.f32 %v3583, 0.0
        %v3605 = vmax.f32 %v3585, 0.0
        %v3606 = vmax.f32 %v2900, 0.0
        %v3607 = vmax.f32 %v2902, 0.0
        %v3608 = vmax.f32 %v3590, 0.0
        %v3609 = vmax.f32 %v3592, 0.0
        %v3610 = vld [vmem:[%s9] sm:$0xff]
        %v3611 = vld [vmem:[%s9 + $0x8] sm:$0xff]
        %v3612 = vld [vmem:[%s9 + $0x10] sm:$0xff]
        %v3613 = vld [vmem:[%s9 + $0x18] sm:$0xff]
        %v3614 = vld [vmem:[%s10] sm:$0xff]
        %v3615 = vld [vmem:[%s10 + $0x8] sm:$0xff]
        %v3616 = vld [vmem:[%s10 + $0x10] sm:$0xff]
        %v3617 = vld [vmem:[%s10 + $0x18] sm:$0xff]
        %3619 = vset.pattern.permute.xlu0 0
        %3620 = vperm.xlu0 %3619, %v3614
        %v3621 = vpop.permute.xlu0 %3620
        %3624 = vset.pattern.permute.xlu0 0
        %3625 = vperm.xlu0 %3624, %v3615
        %v3626 = vpop.permute.xlu0 %3625
        %3629 = vset.pattern.permute.xlu0 0
        %3630 = vperm.xlu0 %3629, %v3616
        %v3631 = vpop.permute.xlu0 %3630
        %3634 = vset.pattern.permute.xlu0 0
        %3635 = vperm.xlu0 %3634, %v3617
        %v3636 = vpop.permute.xlu0 %3635
        %v3639 = vsel %vm765, %v3610, 0
        %v3642 = vsel %vm765, %v3611, 0
        %v3645 = vsel %vm765, %v3612, 0
        %v3648 = vsel %vm765, %v3613, 0
        %v3650 = vand.u32 %v3595, 4294901760
        %3651 = vmatprep.subr.mxu0 %v3650
        %v3652 = vand.u32 %v3594, 4294901760
        %3653 = vmatpush1.msra.mxu0 %v3652
        %v3654 = vand.u32 %v3599, 4294901760
        %3655 = vmatprep.subr.mxu0 %v3654
        %v3656 = vand.u32 %v3598, 4294901760
        %3657 = vmatpush1.msra.mxu0 %v3656
        %v3658 = vand.u32 %v3603, 4294901760
        %3659 = vmatprep.subr.mxu0 %v3658
        %v3660 = vand.u32 %v3602, 4294901760
        %3661 = vmatpush1.msra.mxu0 %v3660
        %v3662 = vand.u32 %v3607, 4294901760
        %3663 = vmatprep.subr.mxu0 %v3662
        %v3664 = vand.u32 %v3606, 4294901760
        %3665 = vmatpush1.msra.mxu0 %v3664
        %3666 = vmatprep.subr.mxu0 0.0
        %3667 = vmatpush1.msra.mxu0 0.0
        %3668 = vmatprep.subr.mxu0 0.0
        %3669 = vmatpush1.msra.mxu0 0.0
        %3670 = vmatprep.subr.mxu0 0.0
        %3671 = vmatpush1.msra.mxu0 0.0
        %3672 = vmatprep.subr.mxu0 0.0
        %3673 = vmatpush1.msra.mxu0 0.0
        %3674 = vmatprep.subr.mxu0 0.0
        %3675 = vmatpush1.msra.mxu0 0.0
        %3676 = vmatprep.subr.mxu0 0.0
        %3677 = vmatpush1.msra.mxu0 0.0
        %3678 = vmatprep.subr.mxu0 0.0
        %3679 = vmatpush1.msra.mxu0 0.0
        %3680 = vmatprep.subr.mxu0 0.0
        %3681 = vmatpush1.msra.mxu0 0.0
        %3682 = vmatprep.subr.mxu0 0.0
        %3683 = vmatpush1.msra.mxu0 0.0
        %3684 = vmatprep.subr.mxu0 0.0
        %3685 = vmatpush1.msra.mxu0 0.0
        %3686 = vmatprep.subr.mxu0 0.0
        %3687 = vmatpush1.msra.mxu0 0.0
        %3688 = vmatprep.subr.mxu0 0.0
        %3689 = vmatpush1.msra.mxu0 0.0
        %3690 = vmatprep.subr.mxu0 0.0
        %3691 = vmatpush1.msra.mxu0 0.0
        %3692 = vmatprep.subr.mxu0 0.0
        %3693 = vmatpush1.msra.mxu0 0.0
        %3694 = vmatprep.subr.mxu0 0.0
        %3695 = vmatpush1.msra.mxu0 0.0
        %3696 = vmatprep.subr.mxu0 0.0
        %3697 = vmatpush1.msra.mxu0 0.0
        %3698 = vmatprep.subr.mxu0 0.0
        %3699 = vmatpush1.msra.mxu0 0.0
        %3700 = vmatprep.subr.mxu0 0.0
        %3701 = vmatpush1.msra.mxu0 0.0
        %3702 = vmatprep.subr.mxu0 0.0
        %3703 = vmatpush1.msra.mxu0 0.0
        %3704 = vmatprep.subr.mxu0 0.0
        %3705 = vmatpush1.msra.mxu0 0.0
        %3706 = vmatprep.subr.mxu0 0.0
        %3707 = vmatpush1.msra.mxu0 0.0
        %3708 = vmatprep.subr.mxu0 0.0
        %3709 = vmatpush1.msra.mxu0 0.0
        %3710 = vmatprep.subr.mxu0 0.0
        %3711 = vmatpush1.msra.mxu0 0.0
        %3712 = vmatprep.subr.mxu0 0.0
        %3713 = vmatpush1.msra.mxu0 0.0
        %3714 = vmatprep.subr.mxu0 0.0
        %3715 = vmatpush1.msra.mxu0 0.0
        %3716 = vmatprep.subr.mxu0 0.0
        %3717 = vmatpush1.msra.mxu0 0.0
        %3718 = vmatprep.subr.mxu0 0.0
        %3719 = vmatpush1.msra.mxu0 0.0
        %3720 = vmatprep.subr.mxu0 0.0
        %3721 = vmatpush1.msra.mxu0 0.0
        %3722 = vmatprep.mubr.f32.mxu0 0.0
        %v3723 = vand.u32 %v3639, 4294901760
        %v3724 = vsub.f32 %v3639, %v3723
        %v3725 = vand.u32 %v3724, 4294901760
        %v3726 = vsub.f32 %v3724, %v3725
        %v3727 = vand.u32 %v3726, 4294901760
        %3728 = vmatmul.mubr.f32.gmra.mrb[0].mxu0 %v3727
        %v3729 = vpop.f32.mrb[0].mxu0
        %v3730 = vadd.f32 %v3621, %v3729
        %v3731 = vpop.f32.mrb[0].mxu0
        %v3732 = vadd.f32 %v3621, %v3731
        %3733 = vmatprep.mubr.f32.mxu0 0.0
        %v3734 = vand.u32 %v3642, 4294901760
        %v3735 = vsub.f32 %v3642, %v3734
        %v3736 = vand.u32 %v3735, 4294901760
        %v3737 = vsub.f32 %v3735, %v3736
        %v3738 = vand.u32 %v3737, 4294901760
        %3739 = vmatmul.mubr.f32.gmra.mrb[0].mxu0 %v3738
        %v3740 = vpop.f32.mrb[0].mxu0
        %v3741 = vadd.f32 %v3626, %v3740
        %v3742 = vpop.f32.mrb[0].mxu0
        %v3743 = vadd.f32 %v3626, %v3742
        %3744 = vmatprep.mubr.f32.mxu0 0.0
        %v3745 = vand.u32 %v3645, 4294901760
        %v3746 = vsub.f32 %v3645, %v3745
        %v3747 = vand.u32 %v3746, 4294901760
        %v3748 = vsub.f32 %v3746, %v3747
        %v3749 = vand.u32 %v3748, 4294901760
        %3750 = vmatmul.mubr.f32.gmra.mrb[0].mxu0 %v3749
        %v3751 = vpop.f32.mrb[0].mxu0
        %v3752 = vadd.f32 %v3631, %v3751
        %v3753 = vpop.f32.mrb[0].mxu0
        %v3754 = vadd.f32 %v3631, %v3753
        %3755 = vmatprep.mubr.f32.mxu0 0.0
        %v3756 = vand.u32 %v3648, 4294901760
        %v3757 = vsub.f32 %v3648, %v3756
        %v3758 = vand.u32 %v3757, 4294901760
        %v3759 = vsub.f32 %v3757, %v3758
        %v3760 = vand.u32 %v3759, 4294901760
        %3761 = vmatmul.mubr.f32.gmra.mrb[0].mxu0 %v3760
        %v3762 = vpop.f32.mrb[0].mxu0
        %v3763 = vadd.f32 %v3636, %v3762
        %v3764 = vpop.f32.mrb[0].mxu0
        %v3765 = vadd.f32 %v3636, %v3764
        %3766 = vdwg.mxu0
        %v3767 = vand.u32 %v3595, 4294901760
        %v3768 = vsub.f32 %v3595, %v3767
        %v3769 = vand.u32 %v3768, 4294901760
        %v3770 = vsub.f32 %v3768, %v3769
        %v3771 = vand.u32 %v3770, 4294901760
        %3772 = vmatprep.subr.mxu0 %v3771
        %v3773 = vand.u32 %v3594, 4294901760
        %v3774 = vsub.f32 %v3594, %v3773
        %v3775 = vand.u32 %v3774, 4294901760
        %v3776 = vsub.f32 %v3774, %v3775
        %v3777 = vand.u32 %v3776, 4294901760
        %3778 = vmatpush1.msra.mxu0 %v3777
        %v3779 = vand.u32 %v3599, 4294901760
        %v3780 = vsub.f32 %v3599, %v3779
        %v3781 = vand.u32 %v3780, 4294901760
        %v3782 = vsub.f32 %v3780, %v3781
        %v3783 = vand.u32 %v3782, 4294901760
        %3784 = vmatprep.subr.mxu0 %v3783
        %v3785 = vand.u32 %v3598, 4294901760
        %v3786 = vsub.f32 %v3598, %v3785
        %v3787 = vand.u32 %v3786, 4294901760
        %v3788 = vsub.f32 %v3786, %v3787
        %v3789 = vand.u32 %v3788, 4294901760
        %3790 = vmatpush1.msra.mxu0 %v3789
        %v3791 = vand.u32 %v3603, 4294901760
        %v3792 = vsub.f32 %v3603, %v3791
        %v3793 = vand.u32 %v3792, 4294901760
        %v3794 = vsub.f32 %v3792, %v3793
        %v3795 = vand.u32 %v3794, 4294901760
        %3796 = vmatprep.subr.mxu0 %v3795
        %v3797 = vand.u32 %v3602, 4294901760
        %v3798 = vsub.f32 %v3602, %v3797
        %v3799 = vand.u32 %v3798, 4294901760
        %v3800 = vsub.f32 %v3798, %v3799
        %v3801 = vand.u32 %v3800, 4294901760
        %3802 = vmatpush1.msra.mxu0 %v3801
        %v3803 = vand.u32 %v3607, 4294901760
        %v3804 = vsub.f32 %v3607, %v3803
        %v3805 = vand.u32 %v3804, 4294901760
        %v3806 = vsub.f32 %v3804, %v3805
        %v3807 = vand.u32 %v3806, 4294901760
        %3808 = vmatprep.subr.mxu0 %v3807
        %v3809 = vand.u32 %v3606, 4294901760
        %v3810 = vsub.f32 %v3606, %v3809
        %v3811 = vand.u32 %v3810, 4294901760
        %v3812 = vsub.f32 %v3810, %v3811
        %v3813 = vand.u32 %v3812, 4294901760
        %3814 = vmatpush1.msra.mxu0 %v3813
        %3815 = vmatprep.subr.mxu0 0.0
        %3816 = vmatpush1.msra.mxu0 0.0
        %3817 = vmatprep.subr.mxu0 0.0
        %3818 = vmatpush1.msra.mxu0 0.0
        %3819 = vmatprep.subr.mxu0 0.0
        %3820 = vmatpush1.msra.mxu0 0.0
        %3821 = vmatprep.subr.mxu0 0.0
        %3822 = vmatpush1.msra.mxu0 0.0
        %3823 = vmatprep.subr.mxu0 0.0
        %3824 = vmatpush1.msra.mxu0 0.0
        %3825 = vmatprep.subr.mxu0 0.0
        %3826 = vmatpush1.msra.mxu0 0.0
        %3827 = vmatprep.subr.mxu0 0.0
        %3828 = vmatpush1.msra.mxu0 0.0
        %3829 = vmatprep.subr.mxu0 0.0
        %3830 = vmatpush1.msra.mxu0 0.0
        %3831 = vmatprep.subr.mxu0 0.0
        %3832 = vmatpush1.msra.mxu0 0.0
        %3833 = vmatprep.subr.mxu0 0.0
        %3834 = vmatpush1.msra.mxu0 0.0
        %3835 = vmatprep.subr.mxu0 0.0
        %3836 = vmatpush1.msra.mxu0 0.0
        %3837 = vmatprep.subr.mxu0 0.0
        %3838 = vmatpush1.msra.mxu0 0.0
        %3839 = vmatprep.subr.mxu0 0.0
        %3840 = vmatpush1.msra.mxu0 0.0
        %3841 = vmatprep.subr.mxu0 0.0
        %3842 = vmatpush1.msra.mxu0 0.0
        %3843 = vmatprep.subr.mxu0 0.0
        %3844 = vmatpush1.msra.mxu0 0.0
        %3845 = vmatprep.subr.mxu0 0.0
        %3846 = vmatpush1.msra.mxu0 0.0
        %3847 = vmatprep.subr.mxu0 0.0
        %3848 = vmatpush1.msra.mxu0 0.0
        %3849 = vmatprep.subr.mxu0 0.0
        %3850 = vmatpush1.msra.mxu0 0.0
        %3851 = vmatprep.subr.mxu0 0.0
        %3852 = vmatpush1.msra.mxu0 0.0
        %3853 = vmatprep.subr.mxu0 0.0
        %3854 = vmatpush1.msra.mxu0 0.0
        %3855 = vmatprep.subr.mxu0 0.0
        %3856 = vmatpush1.msra.mxu0 0.0
        %3857 = vmatprep.subr.mxu0 0.0
        %3858 = vmatpush1.msra.mxu0 0.0
        %3859 = vmatprep.subr.mxu0 0.0
        %3860 = vmatpush1.msra.mxu0 0.0
        %3861 = vmatprep.subr.mxu0 0.0
        %3862 = vmatpush1.msra.mxu0 0.0
        %3863 = vmatprep.subr.mxu0 0.0
        %3864 = vmatpush1.msra.mxu0 0.0
        %3865 = vmatprep.subr.mxu0 0.0
        %3866 = vmatpush1.msra.mxu0 0.0
        %3867 = vmatprep.subr.mxu0 0.0
        %3868 = vmatpush1.msra.mxu0 0.0
        %3869 = vmatprep.subr.mxu0 0.0
        %3870 = vmatpush1.msra.mxu0 0.0
        %3871 = vmatprep.mubr.f32.mxu0 0.0
        %v3872 = vand.u32 %v3639, 4294901760
        %3873 = vmatmul.mubr.f32.gmra.mrb[0].mxu0 %v3872
        %v3874 = vpop.f32.mrb[0].mxu0
        %v3875 = vadd.f32 %v3730, %v3874
        %v3876 = vpop.f32.mrb[0].mxu0
        %v3877 = vadd.f32 %v3732, %v3876
        %3878 = vmatprep.mubr.f32.mxu0 0.0
        %v3879 = vand.u32 %v3642, 4294901760
        %3880 = vmatmul.mubr.f32.gmra.mrb[0].mxu0 %v3879
        %v3881 = vpop.f32.mrb[0].mxu0
        %v3882 = vadd.f32 %v3741, %v3881
        %v3883 = vpop.f32.mrb[0].mxu0
        %v3884 = vadd.f32 %v3743, %v3883
        %3885 = vmatprep.mubr.f32.mxu0 0.0
        %v3886 = vand.u32 %v3645, 4294901760
        %3887 = vmatmul.mubr.f32.gmra.mrb[0].mxu0 %v3886
        %v3888 = vpop.f32.mrb[0].mxu0
        %v3889 = vadd.f32 %v3752, %v3888
        %v3890 = vpop.f32.mrb[0].mxu0
        %v3891 = vadd.f32 %v3754, %v3890
        %3892 = vmatprep.mubr.f32.mxu0 0.0
        %v3893 = vand.u32 %v3648, 4294901760
        %3894 = vmatmul.mubr.f32.gmra.mrb[0].mxu0 %v3893
        %v3895 = vpop.f32.mrb[0].mxu0
        %v3896 = vadd.f32 %v3763, %v3895
        %v3897 = vpop.f32.mrb[0].mxu0
        %v3898 = vadd.f32 %v3765, %v3897
        %3899 = vdwg.mxu0
        %v3900 = vand.u32 %v3595, 4294901760
        %v3901 = vsub.f32 %v3595, %v3900
        %3902 = vmatprep.subr.mxu0 %v3901
        %v3903 = vand.u32 %v3594, 4294901760
        %v3904 = vsub.f32 %v3594, %v3903
        %3905 = vmatpush1.msra.mxu0 %v3904
        %v3906 = vand.u32 %v3599, 4294901760
        %v3907 = vsub.f32 %v3599, %v3906
        %3908 = vmatprep.subr.mxu0 %v3907
        %v3909 = vand.u32 %v3598, 4294901760
        %v3910 = vsub.f32 %v3598, %v3909
        %3911 = vmatpush1.msra.mxu0 %v3910
        %v3912 = vand.u32 %v3603, 4294901760
        %v3913 = vsub.f32 %v3603, %v3912
        %3914 = vmatprep.subr.mxu0 %v3913
        %v3915 = vand.u32 %v3602, 4294901760
        %v3916 = vsub.f32 %v3602, %v3915
        %3917 = vmatpush1.msra.mxu0 %v3916
        %v3918 = vand.u32 %v3607, 4294901760
        %v3919 = vsub.f32 %v3607, %v3918
        %3920 = vmatprep.subr.mxu0 %v3919
        %v3921 = vand.u32 %v3606, 4294901760
        %v3922 = vsub.f32 %v3606, %v3921
        %3923 = vmatpush1.msra.mxu0 %v3922
        %3924 = vmatprep.subr.mxu0 0.0
        %3925 = vmatpush1.msra.mxu0 0.0
        %3926 = vmatprep.subr.mxu0 0.0
        %3927 = vmatpush1.msra.mxu0 0.0
        %3928 = vmatprep.subr.mxu0 0.0
        %3929 = vmatpush1.msra.mxu0 0.0
        %3930 = vmatprep.subr.mxu0 0.0
        %3931 = vmatpush1.msra.mxu0 0.0
        %3932 = vmatprep.subr.mxu0 0.0
        %3933 = vmatpush1.msra.mxu0 0.0
        %3934 = vmatprep.subr.mxu0 0.0
        %3935 = vmatpush1.msra.mxu0 0.0
        %3936 = vmatprep.subr.mxu0 0.0
        %3937 = vmatpush1.msra.mxu0 0.0
        %3938 = vmatprep.subr.mxu0 0.0
        %3939 = vmatpush1.msra.mxu0 0.0
        %3940 = vmatprep.subr.mxu0 0.0
        %3941 = vmatpush1.msra.mxu0 0.0
        %3942 = vmatprep.subr.mxu0 0.0
        %3943 = vmatpush1.msra.mxu0 0.0
        %3944 = vmatprep.subr.mxu0 0.0
        %3945 = vmatpush1.msra.mxu0 0.0
        %3946 = vmatprep.subr.mxu0 0.0
        %3947 = vmatpush1.msra.mxu0 0.0
        %3948 = vmatprep.subr.mxu0 0.0
        %3949 = vmatpush1.msra.mxu0 0.0
        %3950 = vmatprep.subr.mxu0 0.0
        %3951 = vmatpush1.msra.mxu0 0.0
        %3952 = vmatprep.subr.mxu0 0.0
        %3953 = vmatpush1.msra.mxu0 0.0
        %3954 = vmatprep.subr.mxu0 0.0
        %3955 = vmatpush1.msra.mxu0 0.0
        %3956 = vmatprep.subr.mxu0 0.0
        %3957 = vmatpush1.msra.mxu0 0.0
        %3958 = vmatprep.subr.mxu0 0.0
        %3959 = vmatpush1.msra.mxu0 0.0
        %3960 = vmatprep.subr.mxu0 0.0
        %3961 = vmatpush1.msra.mxu0 0.0
        %3962 = vmatprep.subr.mxu0 0.0
        %3963 = vmatpush1.msra.mxu0 0.0
        %3964 = vmatprep.subr.mxu0 0.0
        %3965 = vmatpush1.msra.mxu0 0.0
        %3966 = vmatprep.subr.mxu0 0.0
        %3967 = vmatpush1.msra.mxu0 0.0
        %3968 = vmatprep.subr.mxu0 0.0
        %3969 = vmatpush1.msra.mxu0 0.0
        %3970 = vmatprep.subr.mxu0 0.0
        %3971 = vmatpush1.msra.mxu0 0.0
        %3972 = vmatprep.subr.mxu0 0.0
        %3973 = vmatpush1.msra.mxu0 0.0
        %3974 = vmatprep.subr.mxu0 0.0
        %3975 = vmatpush1.msra.mxu0 0.0
        %3976 = vmatprep.subr.mxu0 0.0
        %3977 = vmatpush1.msra.mxu0 0.0
        %3978 = vmatprep.subr.mxu0 0.0
        %3979 = vmatpush1.msra.mxu0 0.0
        %3980 = vmatprep.mubr.f32.mxu0 0.0
        %v3981 = vand.u32 %v3639, 4294901760
        %v3982 = vsub.f32 %v3639, %v3981
        %3983 = vmatmul.mubr.f32.gmra.mrb[0].mxu0 %v3982
        %v3984 = vpop.f32.mrb[0].mxu0
        %v3985 = vadd.f32 %v3875, %v3984
        %v3986 = vpop.f32.mrb[0].mxu0
        %v3987 = vadd.f32 %v3877, %v3986
        %3988 = vmatprep.mubr.f32.mxu0 0.0
        %v3989 = vand.u32 %v3642, 4294901760
        %v3990 = vsub.f32 %v3642, %v3989
        %3991 = vmatmul.mubr.f32.gmra.mrb[0].mxu0 %v3990
        %v3992 = vpop.f32.mrb[0].mxu0
        %v3993 = vadd.f32 %v3882, %v3992
        %v3994 = vpop.f32.mrb[0].mxu0
        %v3995 = vadd.f32 %v3884, %v3994
        %3996 = vmatprep.mubr.f32.mxu0 0.0
        %v3997 = vand.u32 %v3645, 4294901760
        %v3998 = vsub.f32 %v3645, %v3997
        %3999 = vmatmul.mubr.f32.gmra.mrb[0].mxu0 %v3998
        %v4000 = vpop.f32.mrb[0].mxu0
        %v4001 = vadd.f32 %v3889, %v4000
        %v4002 = vpop.f32.mrb[0].mxu0
        %v4003 = vadd.f32 %v3891, %v4002
        %4004 = vmatprep.mubr.f32.mxu0 0.0
        %v4005 = vand.u32 %v3648, 4294901760
        %v4006 = vsub.f32 %v3648, %v4005
        %4007 = vmatmul.mubr.f32.gmra.mrb[0].mxu0 %v4006
        %v4008 = vpop.f32.mrb[0].mxu0
        %v4009 = vadd.f32 %v3896, %v4008
        %v4010 = vpop.f32.mrb[0].mxu0
        %v4011 = vadd.f32 %v3898, %v4010
        %4012 = vdwg.mxu0
        %v4013 = vand.u32 %v3595, 4294901760
        %4014 = vmatprep.subr.mxu0 %v4013
        %v4015 = vand.u32 %v3594, 4294901760
        %4016 = vmatpush1.msra.mxu0 %v4015
        %v4017 = vand.u32 %v3599, 4294901760
        %4018 = vmatprep.subr.mxu0 %v4017
        %v4019 = vand.u32 %v3598, 4294901760
        %4020 = vmatpush1.msra.mxu0 %v4019
        %v4021 = vand.u32 %v3603, 4294901760
        %4022 = vmatprep.subr.mxu0 %v4021
        %v4023 = vand.u32 %v3602, 4294901760
        %4024 = vmatpush1.msra.mxu0 %v4023
        %v4025 = vand.u32 %v3607, 4294901760
        %4026 = vmatprep.subr.mxu0 %v4025
        %v4027 = vand.u32 %v3606, 4294901760
        %4028 = vmatpush1.msra.mxu0 %v4027
        %4029 = vmatprep.subr.mxu0 0.0
        %4030 = vmatpush1.msra.mxu0 0.0
        %4031 = vmatprep.subr.mxu0 0.0
        %4032 = vmatpush1.msra.mxu0 0.0
        %4033 = vmatprep.subr.mxu0 0.0
        %4034 = vmatpush1.msra.mxu0 0.0
        %4035 = vmatprep.subr.mxu0 0.0
        %4036 = vmatpush1.msra.mxu0 0.0
        %4037 = vmatprep.subr.mxu0 0.0
        %4038 = vmatpush1.msra.mxu0 0.0
        %4039 = vmatprep.subr.mxu0 0.0
        %4040 = vmatpush1.msra.mxu0 0.0
        %4041 = vmatprep.subr.mxu0 0.0
        %4042 = vmatpush1.msra.mxu0 0.0
        %4043 = vmatprep.subr.mxu0 0.0
        %4044 = vmatpush1.msra.mxu0 0.0
        %4045 = vmatprep.subr.mxu0 0.0
        %4046 = vmatpush1.msra.mxu0 0.0
        %4047 = vmatprep.subr.mxu0 0.0
        %4048 = vmatpush1.msra.mxu0 0.0
        %4049 = vmatprep.subr.mxu0 0.0
        %4050 = vmatpush1.msra.mxu0 0.0
        %4051 = vmatprep.subr.mxu0 0.0
        %4052 = vmatpush1.msra.mxu0 0.0
        %4053 = vmatprep.subr.mxu0 0.0
        %4054 = vmatpush1.msra.mxu0 0.0
        %4055 = vmatprep.subr.mxu0 0.0
        %4056 = vmatpush1.msra.mxu0 0.0
        %4057 = vmatprep.subr.mxu0 0.0
        %4058 = vmatpush1.msra.mxu0 0.0
        %4059 = vmatprep.subr.mxu0 0.0
        %4060 = vmatpush1.msra.mxu0 0.0
        %4061 = vmatprep.subr.mxu0 0.0
        %4062 = vmatpush1.msra.mxu0 0.0
        %4063 = vmatprep.subr.mxu0 0.0
        %4064 = vmatpush1.msra.mxu0 0.0
        %4065 = vmatprep.subr.mxu0 0.0
        %4066 = vmatpush1.msra.mxu0 0.0
        %4067 = vmatprep.subr.mxu0 0.0
        %4068 = vmatpush1.msra.mxu0 0.0
        %4069 = vmatprep.subr.mxu0 0.0
        %4070 = vmatpush1.msra.mxu0 0.0
        %4071 = vmatprep.subr.mxu0 0.0
        %4072 = vmatpush1.msra.mxu0 0.0
        %4073 = vmatprep.subr.mxu0 0.0
        %4074 = vmatpush1.msra.mxu0 0.0
        %4075 = vmatprep.subr.mxu0 0.0
        %4076 = vmatpush1.msra.mxu0 0.0
        %4077 = vmatprep.subr.mxu0 0.0
        %4078 = vmatpush1.msra.mxu0 0.0
        %4079 = vmatprep.subr.mxu0 0.0
        %4080 = vmatpush1.msra.mxu0 0.0
        %4081 = vmatprep.subr.mxu0 0.0
        %4082 = vmatpush1.msra.mxu0 0.0
        %4083 = vmatprep.subr.mxu0 0.0
        %4084 = vmatpush1.msra.mxu0 0.0
        %4085 = vmatprep.mubr.f32.mxu0 0.0
        %v4086 = vand.u32 %v3639, 4294901760
        %v4087 = vsub.f32 %v3639, %v4086
        %v4088 = vand.u32 %v4087, 4294901760
        %4089 = vmatmul.mubr.f32.gmra.mrb[0].mxu0 %v4088
        %v4090 = vpop.f32.mrb[0].mxu0
        %v4091 = vadd.f32 %v3985, %v4090
        %v4092 = vpop.f32.mrb[0].mxu0
        %v4093 = vadd.f32 %v3987, %v4092
        %4094 = vmatprep.mubr.f32.mxu0 0.0
        %v4095 = vand.u32 %v3642, 4294901760
        %v4096 = vsub.f32 %v3642, %v4095
        %v4097 = vand.u32 %v4096, 4294901760
        %4098 = vmatmul.mubr.f32.gmra.mrb[0].mxu0 %v4097
        %v4099 = vpop.f32.mrb[0].mxu0
        %v4100 = vadd.f32 %v3993, %v4099
        %v4101 = vpop.f32.mrb[0].mxu0
        %v4102 = vadd.f32 %v3995, %v4101
        %4103 = vmatprep.mubr.f32.mxu0 0.0
        %v4104 = vand.u32 %v3645, 4294901760
        %v4105 = vsub.f32 %v3645, %v4104
        %v4106 = vand.u32 %v4105, 4294901760
        %4107 = vmatmul.mubr.f32.gmra.mrb[0].mxu0 %v4106
        %v4108 = vpop.f32.mrb[0].mxu0
        %v4109 = vadd.f32 %v4001, %v4108
        %v4110 = vpop.f32.mrb[0].mxu0
        %v4111 = vadd.f32 %v4003, %v4110
        %4112 = vmatprep.mubr.f32.mxu0 0.0
        %v4113 = vand.u32 %v3648, 4294901760
        %v4114 = vsub.f32 %v3648, %v4113
        %v4115 = vand.u32 %v4114, 4294901760
        %4116 = vmatmul.mubr.f32.gmra.mrb[0].mxu0 %v4115
        %v4117 = vpop.f32.mrb[0].mxu0
        %v4118 = vadd.f32 %v4009, %v4117
        %v4119 = vpop.f32.mrb[0].mxu0
        %v4120 = vadd.f32 %v4011, %v4119
        %4121 = vdwg.mxu0
        %v4122 = vand.u32 %v3595, 4294901760
        %v4123 = vsub.f32 %v3595, %v4122
        %v4124 = vand.u32 %v4123, 4294901760
        %4125 = vmatprep.subr.mxu0 %v4124
        %v4126 = vand.u32 %v3594, 4294901760
        %v4127 = vsub.f32 %v3594, %v4126
        %v4128 = vand.u32 %v4127, 4294901760
        %4129 = vmatpush1.msra.mxu0 %v4128
        %v4130 = vand.u32 %v3599, 4294901760
        %v4131 = vsub.f32 %v3599, %v4130
        %v4132 = vand.u32 %v4131, 4294901760
        %4133 = vmatprep.subr.mxu0 %v4132
        %v4134 = vand.u32 %v3598, 4294901760
        %v4135 = vsub.f32 %v3598, %v4134
        %v4136 = vand.u32 %v4135, 4294901760
        %4137 = vmatpush1.msra.mxu0 %v4136
        %v4138 = vand.u32 %v3603, 4294901760
        %v4139 = vsub.f32 %v3603, %v4138
        %v4140 = vand.u32 %v4139, 4294901760
        %4141 = vmatprep.subr.mxu0 %v4140
        %v4142 = vand.u32 %v3602, 4294901760
        %v4143 = vsub.f32 %v3602, %v4142
        %v4144 = vand.u32 %v4143, 4294901760
        %4145 = vmatpush1.msra.mxu0 %v4144
        %v4146 = vand.u32 %v3607, 4294901760
        %v4147 = vsub.f32 %v3607, %v4146
        %v4148 = vand.u32 %v4147, 4294901760
        %4149 = vmatprep.subr.mxu0 %v4148
        %v4150 = vand.u32 %v3606, 4294901760
        %v4151 = vsub.f32 %v3606, %v4150
        %v4152 = vand.u32 %v4151, 4294901760
        %4153 = vmatpush1.msra.mxu0 %v4152
        %4154 = vmatprep.subr.mxu0 0.0
        %4155 = vmatpush1.msra.mxu0 0.0
        %4156 = vmatprep.subr.mxu0 0.0
        %4157 = vmatpush1.msra.mxu0 0.0
        %4158 = vmatprep.subr.mxu0 0.0
        %4159 = vmatpush1.msra.mxu0 0.0
        %4160 = vmatprep.subr.mxu0 0.0
        %4161 = vmatpush1.msra.mxu0 0.0
        %4162 = vmatprep.subr.mxu0 0.0
        %4163 = vmatpush1.msra.mxu0 0.0
        %4164 = vmatprep.subr.mxu0 0.0
        %4165 = vmatpush1.msra.mxu0 0.0
        %4166 = vmatprep.subr.mxu0 0.0
        %4167 = vmatpush1.msra.mxu0 0.0
        %4168 = vmatprep.subr.mxu0 0.0
        %4169 = vmatpush1.msra.mxu0 0.0
        %4170 = vmatprep.subr.mxu0 0.0
        %4171 = vmatpush1.msra.mxu0 0.0
        %4172 = vmatprep.subr.mxu0 0.0
        %4173 = vmatpush1.msra.mxu0 0.0
        %4174 = vmatprep.subr.mxu0 0.0
        %4175 = vmatpush1.msra.mxu0 0.0
        %4176 = vmatprep.subr.mxu0 0.0
        %4177 = vmatpush1.msra.mxu0 0.0
        %4178 = vmatprep.subr.mxu0 0.0
        %4179 = vmatpush1.msra.mxu0 0.0
        %4180 = vmatprep.subr.mxu0 0.0
        %4181 = vmatpush1.msra.mxu0 0.0
        %4182 = vmatprep.subr.mxu0 0.0
        %4183 = vmatpush1.msra.mxu0 0.0
        %4184 = vmatprep.subr.mxu0 0.0
        %4185 = vmatpush1.msra.mxu0 0.0
        %4186 = vmatprep.subr.mxu0 0.0
        %4187 = vmatpush1.msra.mxu0 0.0
        %4188 = vmatprep.subr.mxu0 0.0
        %4189 = vmatpush1.msra.mxu0 0.0
        %4190 = vmatprep.subr.mxu0 0.0
        %4191 = vmatpush1.msra.mxu0 0.0
        %4192 = vmatprep.subr.mxu0 0.0
        %4193 = vmatpush1.msra.mxu0 0.0
        %4194 = vmatprep.subr.mxu0 0.0
        %4195 = vmatpush1.msra.mxu0 0.0
        %4196 = vmatprep.subr.mxu0 0.0
        %4197 = vmatpush1.msra.mxu0 0.0
        %4198 = vmatprep.subr.mxu0 0.0
        %4199 = vmatpush1.msra.mxu0 0.0
        %4200 = vmatprep.subr.mxu0 0.0
        %4201 = vmatpush1.msra.mxu0 0.0
        %4202 = vmatprep.subr.mxu0 0.0
        %4203 = vmatpush1.msra.mxu0 0.0
        %4204 = vmatprep.subr.mxu0 0.0
        %4205 = vmatpush1.msra.mxu0 0.0
        %4206 = vmatprep.subr.mxu0 0.0
        %4207 = vmatpush1.msra.mxu0 0.0
        %4208 = vmatprep.subr.mxu0 0.0
        %4209 = vmatpush1.msra.mxu0 0.0
        %4210 = vmatprep.mubr.f32.mxu0 0.0
        %v4211 = vand.u32 %v3639, 4294901760
        %4212 = vmatmul.mubr.f32.gmra.mrb[0].mxu0 %v4211
        %v4213 = vpop.f32.mrb[0].mxu0
        %v4214 = vadd.f32 %v4091, %v4213
        %v4215 = vpop.f32.mrb[0].mxu0
        %v4216 = vadd.f32 %v4093, %v4215
        %4217 = vmatprep.mubr.f32.mxu0 0.0
        %v4218 = vand.u32 %v3642, 4294901760
        %4219 = vmatmul.mubr.f32.gmra.mrb[0].mxu0 %v4218
        %v4220 = vpop.f32.mrb[0].mxu0
        %v4221 = vadd.f32 %v4100, %v4220
        %v4222 = vpop.f32.mrb[0].mxu0
        %v4223 = vadd.f32 %v4102, %v4222
        %4224 = vmatprep.mubr.f32.mxu0 0.0
        %v4225 = vand.u32 %v3645, 4294901760
        %4226 = vmatmul.mubr.f32.gmra.mrb[0].mxu0 %v4225
        %v4227 = vpop.f32.mrb[0].mxu0
        %v4228 = vadd.f32 %v4109, %v4227
        %v4229 = vpop.f32.mrb[0].mxu0
        %v4230 = vadd.f32 %v4111, %v4229
        %4231 = vmatprep.mubr.f32.mxu0 0.0
        %v4232 = vand.u32 %v3648, 4294901760
        %4233 = vmatmul.mubr.f32.gmra.mrb[0].mxu0 %v4232
        %v4234 = vpop.f32.mrb[0].mxu0
        %v4235 = vadd.f32 %v4118, %v4234
        %v4236 = vpop.f32.mrb[0].mxu0
        %v4237 = vadd.f32 %v4120, %v4236
        %4238 = vdwg.mxu0
        %v4239 = vand.u32 %v3595, 4294901760
        %4240 = vmatprep.subr.mxu0 %v4239
        %v4241 = vand.u32 %v3594, 4294901760
        %4242 = vmatpush1.msra.mxu0 %v4241
        %v4243 = vand.u32 %v3599, 4294901760
        %4244 = vmatprep.subr.mxu0 %v4243
        %v4245 = vand.u32 %v3598, 4294901760
        %4246 = vmatpush1.msra.mxu0 %v4245
        %v4247 = vand.u32 %v3603, 4294901760
        %4248 = vmatprep.subr.mxu0 %v4247
        %v4249 = vand.u32 %v3602, 4294901760
        %4250 = vmatpush1.msra.mxu0 %v4249
        %v4251 = vand.u32 %v3607, 4294901760
        %4252 = vmatprep.subr.mxu0 %v4251
        %v4253 = vand.u32 %v3606, 4294901760
        %4254 = vmatpush1.msra.mxu0 %v4253
        %4255 = vmatprep.subr.mxu0 0.0
        %4256 = vmatpush1.msra.mxu0 0.0
        %4257 = vmatprep.subr.mxu0 0.0
        %4258 = vmatpush1.msra.mxu0 0.0
        %4259 = vmatprep.subr.mxu0 0.0
        %4260 = vmatpush1.msra.mxu0 0.0
        %4261 = vmatprep.subr.mxu0 0.0
        %4262 = vmatpush1.msra.mxu0 0.0
        %4263 = vmatprep.subr.mxu0 0.0
        %4264 = vmatpush1.msra.mxu0 0.0
        %4265 = vmatprep.subr.mxu0 0.0
        %4266 = vmatpush1.msra.mxu0 0.0
        %4267 = vmatprep.subr.mxu0 0.0
        %4268 = vmatpush1.msra.mxu0 0.0
        %4269 = vmatprep.subr.mxu0 0.0
        %4270 = vmatpush1.msra.mxu0 0.0
        %4271 = vmatprep.subr.mxu0 0.0
        %4272 = vmatpush1.msra.mxu0 0.0
        %4273 = vmatprep.subr.mxu0 0.0
        %4274 = vmatpush1.msra.mxu0 0.0
        %4275 = vmatprep.subr.mxu0 0.0
        %4276 = vmatpush1.msra.mxu0 0.0
        %4277 = vmatprep.subr.mxu0 0.0
        %4278 = vmatpush1.msra.mxu0 0.0
        %4279 = vmatprep.subr.mxu0 0.0
        %4280 = vmatpush1.msra.mxu0 0.0
        %4281 = vmatprep.subr.mxu0 0.0
        %4282 = vmatpush1.msra.mxu0 0.0
        %4283 = vmatprep.subr.mxu0 0.0
        %4284 = vmatpush1.msra.mxu0 0.0
        %4285 = vmatprep.subr.mxu0 0.0
        %4286 = vmatpush1.msra.mxu0 0.0
        %4287 = vmatprep.subr.mxu0 0.0
        %4288 = vmatpush1.msra.mxu0 0.0
        %4289 = vmatprep.subr.mxu0 0.0
        %4290 = vmatpush1.msra.mxu0 0.0
        %4291 = vmatprep.subr.mxu0 0.0
        %4292 = vmatpush1.msra.mxu0 0.0
        %4293 = vmatprep.subr.mxu0 0.0
        %4294 = vmatpush1.msra.mxu0 0.0
        %4295 = vmatprep.subr.mxu0 0.0
        %4296 = vmatpush1.msra.mxu0 0.0
        %4297 = vmatprep.subr.mxu0 0.0
        %4298 = vmatpush1.msra.mxu0 0.0
        %4299 = vmatprep.subr.mxu0 0.0
        %4300 = vmatpush1.msra.mxu0 0.0
        %4301 = vmatprep.subr.mxu0 0.0
        %4302 = vmatpush1.msra.mxu0 0.0
        %4303 = vmatprep.subr.mxu0 0.0
        %4304 = vmatpush1.msra.mxu0 0.0
        %4305 = vmatprep.subr.mxu0 0.0
        %4306 = vmatpush1.msra.mxu0 0.0
        %4307 = vmatprep.subr.mxu0 0.0
        %4308 = vmatpush1.msra.mxu0 0.0
        %4309 = vmatprep.subr.mxu0 0.0
        %4310 = vmatpush1.msra.mxu0 0.0
        %4311 = vmatprep.mubr.f32.mxu0 0.0
        %v4312 = vand.u32 %v3639, 4294901760
        %4313 = vmatmul.mubr.f32.gmra.mrb[0].mxu0 %v4312
        %v4314 = vpop.f32.mrb[0].mxu0
        %v4315 = vadd.f32 %v4214, %v4314
        %v4316 = vpop.f32.mrb[0].mxu0
        %v4317 = vadd.f32 %v4216, %v4316
        %4318 = vmatprep.mubr.f32.mxu0 0.0
        %v4319 = vand.u32 %v3642, 4294901760
        %4320 = vmatmul.mubr.f32.gmra.mrb[0].mxu0 %v4319
        %v4321 = vpop.f32.mrb[0].mxu0
        %v4322 = vadd.f32 %v4221, %v4321
        %v4323 = vpop.f32.mrb[0].mxu0
        %v4324 = vadd.f32 %v4223, %v4323
        %4325 = vmatprep.mubr.f32.mxu0 0.0
        %v4326 = vand.u32 %v3645, 4294901760
        %4327 = vmatmul.mubr.f32.gmra.mrb[0].mxu0 %v4326
        %v4328 = vpop.f32.mrb[0].mxu0
        %v4329 = vadd.f32 %v4228, %v4328
        %v4330 = vpop.f32.mrb[0].mxu0
        %v4331 = vadd.f32 %v4230, %v4330
        %4332 = vmatprep.mubr.f32.mxu0 0.0
        %v4333 = vand.u32 %v3648, 4294901760
        %4334 = vmatmul.mubr.f32.gmra.mrb[0].mxu0 %v4333
        %v4335 = vpop.f32.mrb[0].mxu0
        %v4336 = vadd.f32 %v4235, %v4335
        %v4337 = vpop.f32.mrb[0].mxu0
        %v4338 = vadd.f32 %v4237, %v4337
        %4339 = vdwg.mxu0
        %v4340 = vand.u32 %v3597, 4294901760
        %4341 = vmatprep.subr.mxu0 %v4340
        %v4342 = vand.u32 %v3596, 4294901760
        %4343 = vmatpush1.msra.mxu0 %v4342
        %v4344 = vand.u32 %v3601, 4294901760
        %4345 = vmatprep.subr.mxu0 %v4344
        %v4346 = vand.u32 %v3600, 4294901760
        %4347 = vmatpush1.msra.mxu0 %v4346
        %v4348 = vand.u32 %v3605, 4294901760
        %4349 = vmatprep.subr.mxu0 %v4348
        %v4350 = vand.u32 %v3604, 4294901760
        %4351 = vmatpush1.msra.mxu0 %v4350
        %v4352 = vand.u32 %v3609, 4294901760
        %4353 = vmatprep.subr.mxu0 %v4352
        %v4354 = vand.u32 %v3608, 4294901760
        %4355 = vmatpush1.msra.mxu0 %v4354
        %4356 = vmatprep.subr.mxu0 0.0
        %4357 = vmatpush1.msra.mxu0 0.0
        %4358 = vmatprep.subr.mxu0 0.0
        %4359 = vmatpush1.msra.mxu0 0.0
        %4360 = vmatprep.subr.mxu0 0.0
        %4361 = vmatpush1.msra.mxu0 0.0
        %4362 = vmatprep.subr.mxu0 0.0
        %4363 = vmatpush1.msra.mxu0 0.0
        %4364 = vmatprep.subr.mxu0 0.0
        %4365 = vmatpush1.msra.mxu0 0.0
        %4366 = vmatprep.subr.mxu0 0.0
        %4367 = vmatpush1.msra.mxu0 0.0
        %4368 = vmatprep.subr.mxu0 0.0
        %4369 = vmatpush1.msra.mxu0 0.0
        %4370 = vmatprep.subr.mxu0 0.0
        %4371 = vmatpush1.msra.mxu0 0.0
        %4372 = vmatprep.subr.mxu0 0.0
        %4373 = vmatpush1.msra.mxu0 0.0
        %4374 = vmatprep.subr.mxu0 0.0
        %4375 = vmatpush1.msra.mxu0 0.0
        %4376 = vmatprep.subr.mxu0 0.0
        %4377 = vmatpush1.msra.mxu0 0.0
        %4378 = vmatprep.subr.mxu0 0.0
        %4379 = vmatpush1.msra.mxu0 0.0
        %4380 = vmatprep.subr.mxu0 0.0
        %4381 = vmatpush1.msra.mxu0 0.0
        %4382 = vmatprep.subr.mxu0 0.0
        %4383 = vmatpush1.msra.mxu0 0.0
        %4384 = vmatprep.subr.mxu0 0.0
        %4385 = vmatpush1.msra.mxu0 0.0
        %4386 = vmatprep.subr.mxu0 0.0
        %4387 = vmatpush1.msra.mxu0 0.0
        %4388 = vmatprep.subr.mxu0 0.0
        %4389 = vmatpush1.msra.mxu0 0.0
        %4390 = vmatprep.subr.mxu0 0.0
        %4391 = vmatpush1.msra.mxu0 0.0
        %4392 = vmatprep.subr.mxu0 0.0
        %4393 = vmatpush1.msra.mxu0 0.0
        %4394 = vmatprep.subr.mxu0 0.0
        %4395 = vmatpush1.msra.mxu0 0.0
        %4396 = vmatprep.subr.mxu0 0.0
        %4397 = vmatpush1.msra.mxu0 0.0
        %4398 = vmatprep.subr.mxu0 0.0
        %4399 = vmatpush1.msra.mxu0 0.0
        %4400 = vmatprep.subr.mxu0 0.0
        %4401 = vmatpush1.msra.mxu0 0.0
        %4402 = vmatprep.subr.mxu0 0.0
        %4403 = vmatpush1.msra.mxu0 0.0
        %4404 = vmatprep.subr.mxu0 0.0
        %4405 = vmatpush1.msra.mxu0 0.0
        %4406 = vmatprep.subr.mxu0 0.0
        %4407 = vmatpush1.msra.mxu0 0.0
        %4408 = vmatprep.subr.mxu0 0.0
        %4409 = vmatpush1.msra.mxu0 0.0
        %4410 = vmatprep.subr.mxu0 0.0
        %4411 = vmatpush1.msra.mxu0 0.0
        %4412 = vmatprep.mubr.f32.mxu0 0.0
        %v4413 = vand.u32 %v3639, 4294901760
        %v4414 = vsub.f32 %v3639, %v4413
        %v4415 = vand.u32 %v4414, 4294901760
        %v4416 = vsub.f32 %v4414, %v4415
        %v4417 = vand.u32 %v4416, 4294901760
        %4418 = vmatmul.mubr.f32.gmra.mrb[0].mxu0 %v4417
        %v4419 = vpop.f32.mrb[0].mxu0
        %v4420 = vadd.f32 %v3621, %v4419
        %v4421 = vpop.f32.mrb[0].mxu0
        %v4422 = vadd.f32 %v3621, %v4421
        %4423 = vmatprep.mubr.f32.mxu0 0.0
        %v4424 = vand.u32 %v3642, 4294901760
        %v4425 = vsub.f32 %v3642, %v4424
        %v4426 = vand.u32 %v4425, 4294901760
        %v4427 = vsub.f32 %v4425, %v4426
        %v4428 = vand.u32 %v4427, 4294901760
        %4429 = vmatmul.mubr.f32.gmra.mrb[0].mxu0 %v4428
        %v4430 = vpop.f32.mrb[0].mxu0
        %v4431 = vadd.f32 %v3626, %v4430
        %v4432 = vpop.f32.mrb[0].mxu0
        %v4433 = vadd.f32 %v3626, %v4432
        %4434 = vmatprep.mubr.f32.mxu0 0.0
        %v4435 = vand.u32 %v3645, 4294901760
        %v4436 = vsub.f32 %v3645, %v4435
        %v4437 = vand.u32 %v4436, 4294901760
        %v4438 = vsub.f32 %v4436, %v4437
        %v4439 = vand.u32 %v4438, 4294901760
        %4440 = vmatmul.mubr.f32.gmra.mrb[0].mxu0 %v4439
        %v4441 = vpop.f32.mrb[0].mxu0
        %v4442 = vadd.f32 %v3631, %v4441
        %v4443 = vpop.f32.mrb[0].mxu0
        %v4444 = vadd.f32 %v3631, %v4443
        %4445 = vmatprep.mubr.f32.mxu0 0.0
        %v4446 = vand.u32 %v3648, 4294901760
        %v4447 = vsub.f32 %v3648, %v4446
        %v4448 = vand.u32 %v4447, 4294901760
        %v4449 = vsub.f32 %v4447, %v4448
        %v4450 = vand.u32 %v4449, 4294901760
        %4451 = vmatmul.mubr.f32.gmra.mrb[0].mxu0 %v4450
        %v4452 = vpop.f32.mrb[0].mxu0
        %v4453 = vadd.f32 %v3636, %v4452
        %v4454 = vpop.f32.mrb[0].mxu0
        %v4455 = vadd.f32 %v3636, %v4454
        %4456 = vdwg.mxu0
        %v4457 = vand.u32 %v3597, 4294901760
        %v4458 = vsub.f32 %v3597, %v4457
        %v4459 = vand.u32 %v4458, 4294901760
        %v4460 = vsub.f32 %v4458, %v4459
        %v4461 = vand.u32 %v4460, 4294901760
        %4462 = vmatprep.subr.mxu0 %v4461
        %v4463 = vand.u32 %v3596, 4294901760
        %v4464 = vsub.f32 %v3596, %v4463
        %v4465 = vand.u32 %v4464, 4294901760
        %v4466 = vsub.f32 %v4464, %v4465
        %v4467 = vand.u32 %v4466, 4294901760
        %4468 = vmatpush1.msra.mxu0 %v4467
        %v4469 = vand.u32 %v3601, 4294901760
        %v4470 = vsub.f32 %v3601, %v4469
        %v4471 = vand.u32 %v4470, 4294901760
        %v4472 = vsub.f32 %v4470, %v4471
        %v4473 = vand.u32 %v4472, 4294901760
        %4474 = vmatprep.subr.mxu0 %v4473
        %v4475 = vand.u32 %v3600, 4294901760
        %v4476 = vsub.f32 %v3600, %v4475
        %v4477 = vand.u32 %v4476, 4294901760
        %v4478 = vsub.f32 %v4476, %v4477
        %v4479 = vand.u32 %v4478, 4294901760
        %4480 = vmatpush1.msra.mxu0 %v4479
        %v4481 = vand.u32 %v3605, 4294901760
        %v4482 = vsub.f32 %v3605, %v4481
        %v4483 = vand.u32 %v4482, 4294901760
        %v4484 = vsub.f32 %v4482, %v4483
        %v4485 = vand.u32 %v4484, 4294901760
        %4486 = vmatprep.subr.mxu0 %v4485
        %v4487 = vand.u32 %v3604, 4294901760
        %v4488 = vsub.f32 %v3604, %v4487
        %v4489 = vand.u32 %v4488, 4294901760
        %v4490 = vsub.f32 %v4488, %v4489
        %v4491 = vand.u32 %v4490, 4294901760
        %4492 = vmatpush1.msra.mxu0 %v4491
        %v4493 = vand.u32 %v3609, 4294901760
        %v4494 = vsub.f32 %v3609, %v4493
        %v4495 = vand.u32 %v4494, 4294901760
        %v4496 = vsub.f32 %v4494, %v4495
        %v4497 = vand.u32 %v4496, 4294901760
        %4498 = vmatprep.subr.mxu0 %v4497
        %v4499 = vand.u32 %v3608, 4294901760
        %v4500 = vsub.f32 %v3608, %v4499
        %v4501 = vand.u32 %v4500, 4294901760
        %v4502 = vsub.f32 %v4500, %v4501
        %v4503 = vand.u32 %v4502, 4294901760
        %4504 = vmatpush1.msra.mxu0 %v4503
        %4505 = vmatprep.subr.mxu0 0.0
        %4506 = vmatpush1.msra.mxu0 0.0
        %4507 = vmatprep.subr.mxu0 0.0
        %4508 = vmatpush1.msra.mxu0 0.0
        %4509 = vmatprep.subr.mxu0 0.0
        %4510 = vmatpush1.msra.mxu0 0.0
        %4511 = vmatprep.subr.mxu0 0.0
        %4512 = vmatpush1.msra.mxu0 0.0
        %4513 = vmatprep.subr.mxu0 0.0
        %4514 = vmatpush1.msra.mxu0 0.0
        %4515 = vmatprep.subr.mxu0 0.0
        %4516 = vmatpush1.msra.mxu0 0.0
        %4517 = vmatprep.subr.mxu0 0.0
        %4518 = vmatpush1.msra.mxu0 0.0
        %4519 = vmatprep.subr.mxu0 0.0
        %4520 = vmatpush1.msra.mxu0 0.0
        %4521 = vmatprep.subr.mxu0 0.0
        %4522 = vmatpush1.msra.mxu0 0.0
        %4523 = vmatprep.subr.mxu0 0.0
        %4524 = vmatpush1.msra.mxu0 0.0
        %4525 = vmatprep.subr.mxu0 0.0
        %4526 = vmatpush1.msra.mxu0 0.0
        %4527 = vmatprep.subr.mxu0 0.0
        %4528 = vmatpush1.msra.mxu0 0.0
        %4529 = vmatprep.subr.mxu0 0.0
        %4530 = vmatpush1.msra.mxu0 0.0
        %4531 = vmatprep.subr.mxu0 0.0
        %4532 = vmatpush1.msra.mxu0 0.0
        %4533 = vmatprep.subr.mxu0 0.0
        %4534 = vmatpush1.msra.mxu0 0.0
        %4535 = vmatprep.subr.mxu0 0.0
        %4536 = vmatpush1.msra.mxu0 0.0
        %4537 = vmatprep.subr.mxu0 0.0
        %4538 = vmatpush1.msra.mxu0 0.0
        %4539 = vmatprep.subr.mxu0 0.0
        %4540 = vmatpush1.msra.mxu0 0.0
        %4541 = vmatprep.subr.mxu0 0.0
        %4542 = vmatpush1.msra.mxu0 0.0
        %4543 = vmatprep.subr.mxu0 0.0
        %4544 = vmatpush1.msra.mxu0 0.0
        %4545 = vmatprep.subr.mxu0 0.0
        %4546 = vmatpush1.msra.mxu0 0.0
        %4547 = vmatprep.subr.mxu0 0.0
        %4548 = vmatpush1.msra.mxu0 0.0
        %4549 = vmatprep.subr.mxu0 0.0
        %4550 = vmatpush1.msra.mxu0 0.0
        %4551 = vmatprep.subr.mxu0 0.0
        %4552 = vmatpush1.msra.mxu0 0.0
        %4553 = vmatprep.subr.mxu0 0.0
        %4554 = vmatpush1.msra.mxu0 0.0
        %4555 = vmatprep.subr.mxu0 0.0
        %4556 = vmatpush1.msra.mxu0 0.0
        %4557 = vmatprep.subr.mxu0 0.0
        %4558 = vmatpush1.msra.mxu0 0.0
        %4559 = vmatprep.subr.mxu0 0.0
        %4560 = vmatpush1.msra.mxu0 0.0
        %4561 = vmatprep.mubr.f32.mxu0 0.0
        %v4562 = vand.u32 %v3639, 4294901760
        %4563 = vmatmul.mubr.f32.gmra.mrb[0].mxu0 %v4562
        %v4564 = vpop.f32.mrb[0].mxu0
        %v4565 = vadd.f32 %v4420, %v4564
        %v4566 = vpop.f32.mrb[0].mxu0
        %v4567 = vadd.f32 %v4422, %v4566
        %4568 = vmatprep.mubr.f32.mxu0 0.0
        %v4569 = vand.u32 %v3642, 4294901760
        %4570 = vmatmul.mubr.f32.gmra.mrb[0].mxu0 %v4569
        %v4571 = vpop.f32.mrb[0].mxu0
        %v4572 = vadd.f32 %v4431, %v4571
        %v4573 = vpop.f32.mrb[0].mxu0
        %v4574 = vadd.f32 %v4433, %v4573
        %4575 = vmatprep.mubr.f32.mxu0 0.0
        %v4576 = vand.u32 %v3645, 4294901760
        %4577 = vmatmul.mubr.f32.gmra.mrb[0].mxu0 %v4576
        %v4578 = vpop.f32.mrb[0].mxu0
        %v4579 = vadd.f32 %v4442, %v4578
        %v4580 = vpop.f32.mrb[0].mxu0
        %v4581 = vadd.f32 %v4444, %v4580
        %4582 = vmatprep.mubr.f32.mxu0 0.0
        %v4583 = vand.u32 %v3648, 4294901760
        %4584 = vmatmul.mubr.f32.gmra.mrb[0].mxu0 %v4583
        %v4585 = vpop.f32.mrb[0].mxu0
        %v4586 = vadd.f32 %v4453, %v4585
        %v4587 = vpop.f32.mrb[0].mxu0
        %v4588 = vadd.f32 %v4455, %v4587
        %4589 = vdwg.mxu0
        %v4590 = vand.u32 %v3597, 4294901760
        %v4591 = vsub.f32 %v3597, %v4590
        %4592 = vmatprep.subr.mxu0 %v4591
        %v4593 = vand.u32 %v3596, 4294901760
        %v4594 = vsub.f32 %v3596, %v4593
        %4595 = vmatpush1.msra.mxu0 %v4594
        %v4596 = vand.u32 %v3601, 4294901760
        %v4597 = vsub.f32 %v3601, %v4596
        %4598 = vmatprep.subr.mxu0 %v4597
        %v4599 = vand.u32 %v3600, 4294901760
        %v4600 = vsub.f32 %v3600, %v4599
        %4601 = vmatpush1.msra.mxu0 %v4600
        %v4602 = vand.u32 %v3605, 4294901760
        %v4603 = vsub.f32 %v3605, %v4602
        %4604 = vmatprep.subr.mxu0 %v4603
        %v4605 = vand.u32 %v3604, 4294901760
        %v4606 = vsub.f32 %v3604, %v4605
        %4607 = vmatpush1.msra.mxu0 %v4606
        %v4608 = vand.u32 %v3609, 4294901760
        %v4609 = vsub.f32 %v3609, %v4608
        %4610 = vmatprep.subr.mxu0 %v4609
        %v4611 = vand.u32 %v3608, 4294901760
        %v4612 = vsub.f32 %v3608, %v4611
        %4613 = vmatpush1.msra.mxu0 %v4612
        %4614 = vmatprep.subr.mxu0 0.0
        %4615 = vmatpush1.msra.mxu0 0.0
        %4616 = vmatprep.subr.mxu0 0.0
        %4617 = vmatpush1.msra.mxu0 0.0
        %4618 = vmatprep.subr.mxu0 0.0
        %4619 = vmatpush1.msra.mxu0 0.0
        %4620 = vmatprep.subr.mxu0 0.0
        %4621 = vmatpush1.msra.mxu0 0.0
        %4622 = vmatprep.subr.mxu0 0.0
        %4623 = vmatpush1.msra.mxu0 0.0
        %4624 = vmatprep.subr.mxu0 0.0
        %4625 = vmatpush1.msra.mxu0 0.0
        %4626 = vmatprep.subr.mxu0 0.0
        %4627 = vmatpush1.msra.mxu0 0.0
        %4628 = vmatprep.subr.mxu0 0.0
        %4629 = vmatpush1.msra.mxu0 0.0
        %4630 = vmatprep.subr.mxu0 0.0
        %4631 = vmatpush1.msra.mxu0 0.0
        %4632 = vmatprep.subr.mxu0 0.0
        %4633 = vmatpush1.msra.mxu0 0.0
        %4634 = vmatprep.subr.mxu0 0.0
        %4635 = vmatpush1.msra.mxu0 0.0
        %4636 = vmatprep.subr.mxu0 0.0
        %4637 = vmatpush1.msra.mxu0 0.0
        %4638 = vmatprep.subr.mxu0 0.0
        %4639 = vmatpush1.msra.mxu0 0.0
        %4640 = vmatprep.subr.mxu0 0.0
        %4641 = vmatpush1.msra.mxu0 0.0
        %4642 = vmatprep.subr.mxu0 0.0
        %4643 = vmatpush1.msra.mxu0 0.0
        %4644 = vmatprep.subr.mxu0 0.0
        %4645 = vmatpush1.msra.mxu0 0.0
        %4646 = vmatprep.subr.mxu0 0.0
        %4647 = vmatpush1.msra.mxu0 0.0
        %4648 = vmatprep.subr.mxu0 0.0
        %4649 = vmatpush1.msra.mxu0 0.0
        %4650 = vmatprep.subr.mxu0 0.0
        %4651 = vmatpush1.msra.mxu0 0.0
        %4652 = vmatprep.subr.mxu0 0.0
        %4653 = vmatpush1.msra.mxu0 0.0
        %4654 = vmatprep.subr.mxu0 0.0
        %4655 = vmatpush1.msra.mxu0 0.0
        %4656 = vmatprep.subr.mxu0 0.0
        %4657 = vmatpush1.msra.mxu0 0.0
        %4658 = vmatprep.subr.mxu0 0.0
        %4659 = vmatpush1.msra.mxu0 0.0
        %4660 = vmatprep.subr.mxu0 0.0
        %4661 = vmatpush1.msra.mxu0 0.0
        %4662 = vmatprep.subr.mxu0 0.0
        %4663 = vmatpush1.msra.mxu0 0.0
        %4664 = vmatprep.subr.mxu0 0.0
        %4665 = vmatpush1.msra.mxu0 0.0
        %4666 = vmatprep.subr.mxu0 0.0
        %4667 = vmatpush1.msra.mxu0 0.0
        %4668 = vmatprep.subr.mxu0 0.0
        %4669 = vmatpush1.msra.mxu0 0.0
        %4670 = vmatprep.mubr.f32.mxu0 0.0
        %v4671 = vand.u32 %v3639, 4294901760
        %v4672 = vsub.f32 %v3639, %v4671
        %4673 = vmatmul.mubr.f32.gmra.mrb[0].mxu0 %v4672
        %v4674 = vpop.f32.mrb[0].mxu0
        %v4675 = vadd.f32 %v4565, %v4674
        %v4676 = vpop.f32.mrb[0].mxu0
        %v4677 = vadd.f32 %v4567, %v4676
        %4678 = vmatprep.mubr.f32.mxu0 0.0
        %v4679 = vand.u32 %v3642, 4294901760
        %v4680 = vsub.f32 %v3642, %v4679
        %4681 = vmatmul.mubr.f32.gmra.mrb[0].mxu0 %v4680
        %v4682 = vpop.f32.mrb[0].mxu0
        %v4683 = vadd.f32 %v4572, %v4682
        %v4684 = vpop.f32.mrb[0].mxu0
        %v4685 = vadd.f32 %v4574, %v4684
        %4686 = vmatprep.mubr.f32.mxu0 0.0
        %v4687 = vand.u32 %v3645, 4294901760
        %v4688 = vsub.f32 %v3645, %v4687
        %4689 = vmatmul.mubr.f32.gmra.mrb[0].mxu0 %v4688
        %v4690 = vpop.f32.mrb[0].mxu0
        %v4691 = vadd.f32 %v4579, %v4690
        %v4692 = vpop.f32.mrb[0].mxu0
        %v4693 = vadd.f32 %v4581, %v4692
        %4694 = vmatprep.mubr.f32.mxu0 0.0
        %v4695 = vand.u32 %v3648, 4294901760
        %v4696 = vsub.f32 %v3648, %v4695
        %4697 = vmatmul.mubr.f32.gmra.mrb[0].mxu0 %v4696
        %v4698 = vpop.f32.mrb[0].mxu0
        %v4699 = vadd.f32 %v4586, %v4698
        %v4700 = vpop.f32.mrb[0].mxu0
        %v4701 = vadd.f32 %v4588, %v4700
        %4702 = vdwg.mxu0
        %v4703 = vand.u32 %v3597, 4294901760
        %4704 = vmatprep.subr.mxu0 %v4703
        %v4705 = vand.u32 %v3596, 4294901760
        %4706 = vmatpush1.msra.mxu0 %v4705
        %v4707 = vand.u32 %v3601, 4294901760
        %4708 = vmatprep.subr.mxu0 %v4707
        %v4709 = vand.u32 %v3600, 4294901760
        %4710 = vmatpush1.msra.mxu0 %v4709
        %v4711 = vand.u32 %v3605, 4294901760
        %4712 = vmatprep.subr.mxu0 %v4711
        %v4713 = vand.u32 %v3604, 4294901760
        %4714 = vmatpush1.msra.mxu0 %v4713
        %v4715 = vand.u32 %v3609, 4294901760
        %4716 = vmatprep.subr.mxu0 %v4715
        %v4717 = vand.u32 %v3608, 4294901760
        %4718 = vmatpush1.msra.mxu0 %v4717
        %4719 = vmatprep.subr.mxu0 0.0
        %4720 = vmatpush1.msra.mxu0 0.0
        %4721 = vmatprep.subr.mxu0 0.0
        %4722 = vmatpush1.msra.mxu0 0.0
        %4723 = vmatprep.subr.mxu0 0.0
        %4724 = vmatpush1.msra.mxu0 0.0
        %4725 = vmatprep.subr.mxu0 0.0
        %4726 = vmatpush1.msra.mxu0 0.0
        %4727 = vmatprep.subr.mxu0 0.0
        %4728 = vmatpush1.msra.mxu0 0.0
        %4729 = vmatprep.subr.mxu0 0.0
        %4730 = vmatpush1.msra.mxu0 0.0
        %4731 = vmatprep.subr.mxu0 0.0
        %4732 = vmatpush1.msra.mxu0 0.0
        %4733 = vmatprep.subr.mxu0 0.0
        %4734 = vmatpush1.msra.mxu0 0.0
        %4735 = vmatprep.subr.mxu0 0.0
        %4736 = vmatpush1.msra.mxu0 0.0
        %4737 = vmatprep.subr.mxu0 0.0
        %4738 = vmatpush1.msra.mxu0 0.0
        %4739 = vmatprep.subr.mxu0 0.0
        %4740 = vmatpush1.msra.mxu0 0.0
        %4741 = vmatprep.subr.mxu0 0.0
        %4742 = vmatpush1.msra.mxu0 0.0
        %4743 = vmatprep.subr.mxu0 0.0
        %4744 = vmatpush1.msra.mxu0 0.0
        %4745 = vmatprep.subr.mxu0 0.0
        %4746 = vmatpush1.msra.mxu0 0.0
        %4747 = vmatprep.subr.mxu0 0.0
        %4748 = vmatpush1.msra.mxu0 0.0
        %4749 = vmatprep.subr.mxu0 0.0
        %4750 = vmatpush1.msra.mxu0 0.0
        %4751 = vmatprep.subr.mxu0 0.0
        %4752 = vmatpush1.msra.mxu0 0.0
        %4753 = vmatprep.subr.mxu0 0.0
        %4754 = vmatpush1.msra.mxu0 0.0
        %4755 = vmatprep.subr.mxu0 0.0
        %4756 = vmatpush1.msra.mxu0 0.0
        %4757 = vmatprep.subr.mxu0 0.0
        %4758 = vmatpush1.msra.mxu0 0.0
        %4759 = vmatprep.subr.mxu0 0.0
        %4760 = vmatpush1.msra.mxu0 0.0
        %4761 = vmatprep.subr.mxu0 0.0
        %4762 = vmatpush1.msra.mxu0 0.0
        %4763 = vmatprep.subr.mxu0 0.0
        %4764 = vmatpush1.msra.mxu0 0.0
        %4765 = vmatprep.subr.mxu0 0.0
        %4766 = vmatpush1.msra.mxu0 0.0
        %4767 = vmatprep.subr.mxu0 0.0
        %4768 = vmatpush1.msra.mxu0 0.0
        %4769 = vmatprep.subr.mxu0 0.0
        %4770 = vmatpush1.msra.mxu0 0.0
        %4771 = vmatprep.subr.mxu0 0.0
        %4772 = vmatpush1.msra.mxu0 0.0
        %4773 = vmatprep.subr.mxu0 0.0
        %4774 = vmatpush1.msra.mxu0 0.0
        %4775 = vmatprep.mubr.f32.mxu0 0.0
        %v4776 = vand.u32 %v3639, 4294901760
        %v4777 = vsub.f32 %v3639, %v4776
        %v4778 = vand.u32 %v4777, 4294901760
        %4779 = vmatmul.mubr.f32.gmra.mrb[0].mxu0 %v4778
        %v4780 = vpop.f32.mrb[0].mxu0
        %v4781 = vadd.f32 %v4675, %v4780
        %v4782 = vpop.f32.mrb[0].mxu0
        %v4783 = vadd.f32 %v4677, %v4782
        %4784 = vmatprep.mubr.f32.mxu0 0.0
        %v4785 = vand.u32 %v3642, 4294901760
        %v4786 = vsub.f32 %v3642, %v4785
        %v4787 = vand.u32 %v4786, 4294901760
        %4788 = vmatmul.mubr.f32.gmra.mrb[0].mxu0 %v4787
        %v4789 = vpop.f32.mrb[0].mxu0
        %v4790 = vadd.f32 %v4683, %v4789
        %v4791 = vpop.f32.mrb[0].mxu0
        %v4792 = vadd.f32 %v4685, %v4791
        %4793 = vmatprep.mubr.f32.mxu0 0.0
        %v4794 = vand.u32 %v3645, 4294901760
        %v4795 = vsub.f32 %v3645, %v4794
        %v4796 = vand.u32 %v4795, 4294901760
        %4797 = vmatmul.mubr.f32.gmra.mrb[0].mxu0 %v4796
        %v4798 = vpop.f32.mrb[0].mxu0
        %v4799 = vadd.f32 %v4691, %v4798
        %v4800 = vpop.f32.mrb[0].mxu0
        %v4801 = vadd.f32 %v4693, %v4800
        %4802 = vmatprep.mubr.f32.mxu0 0.0
        %v4803 = vand.u32 %v3648, 4294901760
        %v4804 = vsub.f32 %v3648, %v4803
        %v4805 = vand.u32 %v4804, 4294901760
        %4806 = vmatmul.mubr.f32.gmra.mrb[0].mxu0 %v4805
        %v4807 = vpop.f32.mrb[0].mxu0
        %v4808 = vadd.f32 %v4699, %v4807
        %v4809 = vpop.f32.mrb[0].mxu0
        %v4810 = vadd.f32 %v4701, %v4809
        %4811 = vdwg.mxu0
        %v4812 = vand.u32 %v3597, 4294901760
        %v4813 = vsub.f32 %v3597, %v4812
        %v4814 = vand.u32 %v4813, 4294901760
        %4815 = vmatprep.subr.mxu0 %v4814
        %v4816 = vand.u32 %v3596, 4294901760
        %v4817 = vsub.f32 %v3596, %v4816
        %v4818 = vand.u32 %v4817, 4294901760
        %4819 = vmatpush1.msra.mxu0 %v4818
        %v4820 = vand.u32 %v3601, 4294901760
        %v4821 = vsub.f32 %v3601, %v4820
        %v4822 = vand.u32 %v4821, 4294901760
        %4823 = vmatprep.subr.mxu0 %v4822
        %v4824 = vand.u32 %v3600, 4294901760
        %v4825 = vsub.f32 %v3600, %v4824
        %v4826 = vand.u32 %v4825, 4294901760
        %4827 = vmatpush1.msra.mxu0 %v4826
        %v4828 = vand.u32 %v3605, 4294901760
        %v4829 = vsub.f32 %v3605, %v4828
        %v4830 = vand.u32 %v4829, 4294901760
        %4831 = vmatprep.subr.mxu0 %v4830
        %v4832 = vand.u32 %v3604, 4294901760
        %v4833 = vsub.f32 %v3604, %v4832
        %v4834 = vand.u32 %v4833, 4294901760
        %4835 = vmatpush1.msra.mxu0 %v4834
        %v4836 = vand.u32 %v3609, 4294901760
        %v4837 = vsub.f32 %v3609, %v4836
        %v4838 = vand.u32 %v4837, 4294901760
        %4839 = vmatprep.subr.mxu0 %v4838
        %v4840 = vand.u32 %v3608, 4294901760
        %v4841 = vsub.f32 %v3608, %v4840
        %v4842 = vand.u32 %v4841, 4294901760
        %4843 = vmatpush1.msra.mxu0 %v4842
        %4844 = vmatprep.subr.mxu0 0.0
        %4845 = vmatpush1.msra.mxu0 0.0
        %4846 = vmatprep.subr.mxu0 0.0
        %4847 = vmatpush1.msra.mxu0 0.0
        %4848 = vmatprep.subr.mxu0 0.0
        %4849 = vmatpush1.msra.mxu0 0.0
        %4850 = vmatprep.subr.mxu0 0.0
        %4851 = vmatpush1.msra.mxu0 0.0
        %4852 = vmatprep.subr.mxu0 0.0
        %4853 = vmatpush1.msra.mxu0 0.0
        %4854 = vmatprep.subr.mxu0 0.0
        %4855 = vmatpush1.msra.mxu0 0.0
        %4856 = vmatprep.subr.mxu0 0.0
        %4857 = vmatpush1.msra.mxu0 0.0
        %4858 = vmatprep.subr.mxu0 0.0
        %4859 = vmatpush1.msra.mxu0 0.0
        %4860 = vmatprep.subr.mxu0 0.0
        %4861 = vmatpush1.msra.mxu0 0.0
        %4862 = vmatprep.subr.mxu0 0.0
        %4863 = vmatpush1.msra.mxu0 0.0
        %4864 = vmatprep.subr.mxu0 0.0
        %4865 = vmatpush1.msra.mxu0 0.0
        %4866 = vmatprep.subr.mxu0 0.0
        %4867 = vmatpush1.msra.mxu0 0.0
        %4868 = vmatprep.subr.mxu0 0.0
        %4869 = vmatpush1.msra.mxu0 0.0
        %4870 = vmatprep.subr.mxu0 0.0
        %4871 = vmatpush1.msra.mxu0 0.0
        %4872 = vmatprep.subr.mxu0 0.0
        %4873 = vmatpush1.msra.mxu0 0.0
        %4874 = vmatprep.subr.mxu0 0.0
        %4875 = vmatpush1.msra.mxu0 0.0
        %4876 = vmatprep.subr.mxu0 0.0
        %4877 = vmatpush1.msra.mxu0 0.0
        %4878 = vmatprep.subr.mxu0 0.0
        %4879 = vmatpush1.msra.mxu0 0.0
        %4880 = vmatprep.subr.mxu0 0.0
        %4881 = vmatpush1.msra.mxu0 0.0
        %4882 = vmatprep.subr.mxu0 0.0
        %4883 = vmatpush1.msra.mxu0 0.0
        %4884 = vmatprep.subr.mxu0 0.0
        %4885 = vmatpush1.msra.mxu0 0.0
        %4886 = vmatprep.subr.mxu0 0.0
        %4887 = vmatpush1.msra.mxu0 0.0
        %4888 = vmatprep.subr.mxu0 0.0
        %4889 = vmatpush1.msra.mxu0 0.0
        %4890 = vmatprep.subr.mxu0 0.0
        %4891 = vmatpush1.msra.mxu0 0.0
        %4892 = vmatprep.subr.mxu0 0.0
        %4893 = vmatpush1.msra.mxu0 0.0
        %4894 = vmatprep.subr.mxu0 0.0
        %4895 = vmatpush1.msra.mxu0 0.0
        %4896 = vmatprep.subr.mxu0 0.0
        %4897 = vmatpush1.msra.mxu0 0.0
        %4898 = vmatprep.subr.mxu0 0.0
        %4899 = vmatpush1.msra.mxu0 0.0
        %4900 = vmatprep.mubr.f32.mxu0 0.0
        %v4901 = vand.u32 %v3639, 4294901760
        %4902 = vmatmul.mubr.f32.gmra.mrb[0].mxu0 %v4901
        %v4903 = vpop.f32.mrb[0].mxu0
        %v4904 = vadd.f32 %v4781, %v4903
        %v4905 = vpop.f32.mrb[0].mxu0
        %v4906 = vadd.f32 %v4783, %v4905
        %4907 = vmatprep.mubr.f32.mxu0 0.0
        %v4908 = vand.u32 %v3642, 4294901760
        %4909 = vmatmul.mubr.f32.gmra.mrb[0].mxu0 %v4908
        %v4910 = vpop.f32.mrb[0].mxu0
        %v4911 = vadd.f32 %v4790, %v4910
        %v4912 = vpop.f32.mrb[0].mxu0
        %v4913 = vadd.f32 %v4792, %v4912
        %4914 = vmatprep.mubr.f32.mxu0 0.0
        %v4915 = vand.u32 %v3645, 4294901760
        %4916 = vmatmul.mubr.f32.gmra.mrb[0].mxu0 %v4915
        %v4917 = vpop.f32.mrb[0].mxu0
        %v4918 = vadd.f32 %v4799, %v4917
        %v4919 = vpop.f32.mrb[0].mxu0
        %v4920 = vadd.f32 %v4801, %v4919
        %4921 = vmatprep.mubr.f32.mxu0 0.0
        %v4922 = vand.u32 %v3648, 4294901760
        %4923 = vmatmul.mubr.f32.gmra.mrb[0].mxu0 %v4922
        %v4924 = vpop.f32.mrb[0].mxu0
        %v4925 = vadd.f32 %v4808, %v4924
        %v4926 = vpop.f32.mrb[0].mxu0
        %v4927 = vadd.f32 %v4810, %v4926
        %4928 = vdwg.mxu0
        %v4929 = vand.u32 %v3597, 4294901760
        %4930 = vmatprep.subr.mxu0 %v4929
        %v4931 = vand.u32 %v3596, 4294901760
        %4932 = vmatpush1.msra.mxu0 %v4931
        %v4933 = vand.u32 %v3601, 4294901760
        %4934 = vmatprep.subr.mxu0 %v4933
        %v4935 = vand.u32 %v3600, 4294901760
        %4936 = vmatpush1.msra.mxu0 %v4935
        %v4937 = vand.u32 %v3605, 4294901760
        %4938 = vmatprep.subr.mxu0 %v4937
        %v4939 = vand.u32 %v3604, 4294901760
        %4940 = vmatpush1.msra.mxu0 %v4939
        %v4941 = vand.u32 %v3609, 4294901760
        %4942 = vmatprep.subr.mxu0 %v4941
        %v4943 = vand.u32 %v3608, 4294901760
        %4944 = vmatpush1.msra.mxu0 %v4943
        %4945 = vmatprep.subr.mxu0 0.0
        %4946 = vmatpush1.msra.mxu0 0.0
        %4947 = vmatprep.subr.mxu0 0.0
        %4948 = vmatpush1.msra.mxu0 0.0
        %4949 = vmatprep.subr.mxu0 0.0
        %4950 = vmatpush1.msra.mxu0 0.0
        %4951 = vmatprep.subr.mxu0 0.0
        %4952 = vmatpush1.msra.mxu0 0.0
        %4953 = vmatprep.subr.mxu0 0.0
        %4954 = vmatpush1.msra.mxu0 0.0
        %4955 = vmatprep.subr.mxu0 0.0
        %4956 = vmatpush1.msra.mxu0 0.0
        %4957 = vmatprep.subr.mxu0 0.0
        %4958 = vmatpush1.msra.mxu0 0.0
        %4959 = vmatprep.subr.mxu0 0.0
        %4960 = vmatpush1.msra.mxu0 0.0
        %4961 = vmatprep.subr.mxu0 0.0
        %4962 = vmatpush1.msra.mxu0 0.0
        %4963 = vmatprep.subr.mxu0 0.0
        %4964 = vmatpush1.msra.mxu0 0.0
        %4965 = vmatprep.subr.mxu0 0.0
        %4966 = vmatpush1.msra.mxu0 0.0
        %4967 = vmatprep.subr.mxu0 0.0
        %4968 = vmatpush1.msra.mxu0 0.0
        %4969 = vmatprep.subr.mxu0 0.0
        %4970 = vmatpush1.msra.mxu0 0.0
        %4971 = vmatprep.subr.mxu0 0.0
        %4972 = vmatpush1.msra.mxu0 0.0
        %4973 = vmatprep.subr.mxu0 0.0
        %4974 = vmatpush1.msra.mxu0 0.0
        %4975 = vmatprep.subr.mxu0 0.0
        %4976 = vmatpush1.msra.mxu0 0.0
        %4977 = vmatprep.subr.mxu0 0.0
        %4978 = vmatpush1.msra.mxu0 0.0
        %4979 = vmatprep.subr.mxu0 0.0
        %4980 = vmatpush1.msra.mxu0 0.0
        %4981 = vmatprep.subr.mxu0 0.0
        %4982 = vmatpush1.msra.mxu0 0.0
        %4983 = vmatprep.subr.mxu0 0.0
        %4984 = vmatpush1.msra.mxu0 0.0
        %4985 = vmatprep.subr.mxu0 0.0
        %4986 = vmatpush1.msra.mxu0 0.0
        %4987 = vmatprep.subr.mxu0 0.0
        %4988 = vmatpush1.msra.mxu0 0.0
        %4989 = vmatprep.subr.mxu0 0.0
        %4990 = vmatpush1.msra.mxu0 0.0
        %4991 = vmatprep.subr.mxu0 0.0
        %4992 = vmatpush1.msra.mxu0 0.0
        %4993 = vmatprep.subr.mxu0 0.0
        %4994 = vmatpush1.msra.mxu0 0.0
        %4995 = vmatprep.subr.mxu0 0.0
        %4996 = vmatpush1.msra.mxu0 0.0
        %4997 = vmatprep.subr.mxu0 0.0
        %4998 = vmatpush1.msra.mxu0 0.0
        %4999 = vmatprep.subr.mxu0 0.0
        %5000 = vmatpush1.msra.mxu0 0.0
        %5001 = vmatprep.mubr.f32.mxu0 0.0
        %v5002 = vand.u32 %v3639, 4294901760
        %5003 = vmatmul.mubr.f32.gmra.mrb[0].mxu0 %v5002
        %v5004 = vpop.f32.mrb[0].mxu0
        %v5005 = vadd.f32 %v4904, %v5004
        %v5006 = vpop.f32.mrb[0].mxu0
        %v5007 = vadd.f32 %v4906, %v5006
        %5008 = vmatprep.mubr.f32.mxu0 0.0
        %v5009 = vand.u32 %v3642, 4294901760
        %5010 = vmatmul.mubr.f32.gmra.mrb[0].mxu0 %v5009
        %v5011 = vpop.f32.mrb[0].mxu0
        %v5012 = vadd.f32 %v4911, %v5011
        %v5013 = vpop.f32.mrb[0].mxu0
        %v5014 = vadd.f32 %v4913, %v5013
        %5015 = vmatprep.mubr.f32.mxu0 0.0
        %v5016 = vand.u32 %v3645, 4294901760
        %5017 = vmatmul.mubr.f32.gmra.mrb[0].mxu0 %v5016
        %v5018 = vpop.f32.mrb[0].mxu0
        %v5019 = vadd.f32 %v4918, %v5018
        %v5020 = vpop.f32.mrb[0].mxu0
        %v5021 = vadd.f32 %v4920, %v5020
        %5022 = vmatprep.mubr.f32.mxu0 0.0
        %v5023 = vand.u32 %v3648, 4294901760
        %5024 = vmatmul.mubr.f32.gmra.mrb[0].mxu0 %v5023
        %v5025 = vpop.f32.mrb[0].mxu0
        %v5026 = vadd.f32 %v4925, %v5025
        %v5027 = vpop.f32.mrb[0].mxu0
        %v5028 = vadd.f32 %v4927, %v5027
        %5029 = vdwg.mxu0
        %v5030 = vmax.f32 %v4315, 0.0
        %v5031 = vmax.f32 %v4317, 0.0
        %v5032 = vmax.f32 %v5005, 0.0
        %v5033 = vmax.f32 %v5007, 0.0
        %v5034 = vmax.f32 %v4322, 0.0
        %v5035 = vmax.f32 %v4324, 0.0
        %v5036 = vmax.f32 %v5012, 0.0
        %v5037 = vmax.f32 %v5014, 0.0
        %v5038 = vmax.f32 %v4329, 0.0
        %v5039 = vmax.f32 %v4331, 0.0
        %v5040 = vmax.f32 %v5019, 0.0
        %v5041 = vmax.f32 %v5021, 0.0
        %v5042 = vmax.f32 %v4336, 0.0
        %v5043 = vmax.f32 %v4338, 0.0
        %v5044 = vmax.f32 %v5026, 0.0
        %v5045 = vmax.f32 %v5028, 0.0
        %v5046 = vld [vmem:[%s11] sm:$0x1]
        %v5047 = vld [vmem:[#allocation2] sm:$0x1]
        %5049 = vset.pattern.permute.xlu0 0
        %5050 = vperm.xlu0 %5049, %v5047
        %v5051 = vpop.permute.xlu0 %5050
        %v5053 = vlaneseq
        %v5054 = vshrl.u32 %v5053, 7
        %v5055 = vsub.s32 0, %v5054
        %v5056 = vrot.slane %v5051, %v5055
        %v5058 = vsel %vm765, %v5046, 0
        %v5060 = vand.u32 %v5031, 4294901760
        %5061 = vmatprep.subr.mxu0 %v5060
        %v5062 = vand.u32 %v5030, 4294901760
        %5063 = vmatpush1.msra.mxu0 %v5062
        %v5064 = vand.u32 %v5035, 4294901760
        %5065 = vmatprep.subr.mxu0 %v5064
        %v5066 = vand.u32 %v5034, 4294901760
        %5067 = vmatpush1.msra.mxu0 %v5066
        %v5068 = vand.u32 %v5039, 4294901760
        %5069 = vmatprep.subr.mxu0 %v5068
        %v5070 = vand.u32 %v5038, 4294901760
        %5071 = vmatpush1.msra.mxu0 %v5070
        %v5072 = vand.u32 %v5043, 4294901760
        %5073 = vmatprep.subr.mxu0 %v5072
        %v5074 = vand.u32 %v5042, 4294901760
        %5075 = vmatpush1.msra.mxu0 %v5074
        %5076 = vmatprep.subr.mxu0 0.0
        %5077 = vmatpush1.msra.mxu0 0.0
        %5078 = vmatprep.subr.mxu0 0.0
        %5079 = vmatpush1.msra.mxu0 0.0
        %5080 = vmatprep.subr.mxu0 0.0
        %5081 = vmatpush1.msra.mxu0 0.0
        %5082 = vmatprep.subr.mxu0 0.0
        %5083 = vmatpush1.msra.mxu0 0.0
        %5084 = vmatprep.subr.mxu0 0.0
        %5085 = vmatpush1.msra.mxu0 0.0
        %5086 = vmatprep.subr.mxu0 0.0
        %5087 = vmatpush1.msra.mxu0 0.0
        %5088 = vmatprep.subr.mxu0 0.0
        %5089 = vmatpush1.msra.mxu0 0.0
        %5090 = vmatprep.subr.mxu0 0.0
        %5091 = vmatpush1.msra.mxu0 0.0
        %5092 = vmatprep.subr.mxu0 0.0
        %5093 = vmatpush1.msra.mxu0 0.0
        %5094 = vmatprep.subr.mxu0 0.0
        %5095 = vmatpush1.msra.mxu0 0.0
        %5096 = vmatprep.subr.mxu0 0.0
        %5097 = vmatpush1.msra.mxu0 0.0
        %5098 = vmatprep.subr.mxu0 0.0
        %5099 = vmatpush1.msra.mxu0 0.0
        %5100 = vmatprep.subr.mxu0 0.0
        %5101 = vmatpush1.msra.mxu0 0.0
        %5102 = vmatprep.subr.mxu0 0.0
        %5103 = vmatpush1.msra.mxu0 0.0
        %5104 = vmatprep.subr.mxu0 0.0
        %5105 = vmatpush1.msra.mxu0 0.0
        %5106 = vmatprep.subr.mxu0 0.0
        %5107 = vmatpush1.msra.mxu0 0.0
        %5108 = vmatprep.subr.mxu0 0.0
        %5109 = vmatpush1.msra.mxu0 0.0
        %5110 = vmatprep.subr.mxu0 0.0
        %5111 = vmatpush1.msra.mxu0 0.0
        %5112 = vmatprep.subr.mxu0 0.0
        %5113 = vmatpush1.msra.mxu0 0.0
        %5114 = vmatprep.subr.mxu0 0.0
        %5115 = vmatpush1.msra.mxu0 0.0
        %5116 = vmatprep.subr.mxu0 0.0
        %5117 = vmatpush1.msra.mxu0 0.0
        %5118 = vmatprep.subr.mxu0 0.0
        %5119 = vmatpush1.msra.mxu0 0.0
        %5120 = vmatprep.subr.mxu0 0.0
        %5121 = vmatpush1.msra.mxu0 0.0
        %5122 = vmatprep.subr.mxu0 0.0
        %5123 = vmatpush1.msra.mxu0 0.0
        %5124 = vmatprep.subr.mxu0 0.0
        %5125 = vmatpush1.msra.mxu0 0.0
        %5126 = vmatprep.subr.mxu0 0.0
        %5127 = vmatpush1.msra.mxu0 0.0
        %5128 = vmatprep.subr.mxu0 0.0
        %5129 = vmatpush1.msra.mxu0 0.0
        %5130 = vmatprep.subr.mxu0 0.0
        %5131 = vmatpush1.msra.mxu0 0.0
        %5132 = vmatprep.mubr.f32.mxu0 0.0
        %v5133 = vand.u32 %v5058, 4294901760
        %v5134 = vsub.f32 %v5058, %v5133
        %v5135 = vand.u32 %v5134, 4294901760
        %v5136 = vsub.f32 %v5134, %v5135
        %v5137 = vand.u32 %v5136, 4294901760
        %5138 = vmatmul.mubr.f32.gmra.mrb[0].mxu0 %v5137
        %v5139 = vpop.f32.mrb[0].mxu0
        %v5140 = vadd.f32 %v5056, %v5139
        %v5141 = vpop.f32.mrb[0].mxu0
        %v5142 = vadd.f32 %v5056, %v5141
        %5143 = vdwg.mxu0
        %v5144 = vand.u32 %v5031, 4294901760
        %v5145 = vsub.f32 %v5031, %v5144
        %v5146 = vand.u32 %v5145, 4294901760
        %v5147 = vsub.f32 %v5145, %v5146
        %v5148 = vand.u32 %v5147, 4294901760
        %5149 = vmatprep.subr.mxu0 %v5148
        %v5150 = vand.u32 %v5030, 4294901760
        %v5151 = vsub.f32 %v5030, %v5150
        %v5152 = vand.u32 %v5151, 4294901760
        %v5153 = vsub.f32 %v5151, %v5152
        %v5154 = vand.u32 %v5153, 4294901760
        %5155 = vmatpush1.msra.mxu0 %v5154
        %v5156 = vand.u32 %v5035, 4294901760
        %v5157 = vsub.f32 %v5035, %v5156
        %v5158 = vand.u32 %v5157, 4294901760
        %v5159 = vsub.f32 %v5157, %v5158
        %v5160 = vand.u32 %v5159, 4294901760
        %5161 = vmatprep.subr.mxu0 %v5160
        %v5162 = vand.u32 %v5034, 4294901760
        %v5163 = vsub.f32 %v5034, %v5162
        %v5164 = vand.u32 %v5163, 4294901760
        %v5165 = vsub.f32 %v5163, %v5164
        %v5166 = vand.u32 %v5165, 4294901760
        %5167 = vmatpush1.msra.mxu0 %v5166
        %v5168 = vand.u32 %v5039, 4294901760
        %v5169 = vsub.f32 %v5039, %v5168
        %v5170 = vand.u32 %v5169, 4294901760
        %v5171 = vsub.f32 %v5169, %v5170
        %v5172 = vand.u32 %v5171, 4294901760
        %5173 = vmatprep.subr.mxu0 %v5172
        %v5174 = vand.u32 %v5038, 4294901760
        %v5175 = vsub.f32 %v5038, %v5174
        %v5176 = vand.u32 %v5175, 4294901760
        %v5177 = vsub.f32 %v5175, %v5176
        %v5178 = vand.u32 %v5177, 4294901760
        %5179 = vmatpush1.msra.mxu0 %v5178
        %v5180 = vand.u32 %v5043, 4294901760
        %v5181 = vsub.f32 %v5043, %v5180
        %v5182 = vand.u32 %v5181, 4294901760
        %v5183 = vsub.f32 %v5181, %v5182
        %v5184 = vand.u32 %v5183, 4294901760
        %5185 = vmatprep.subr.mxu0 %v5184
        %v5186 = vand.u32 %v5042, 4294901760
        %v5187 = vsub.f32 %v5042, %v5186
        %v5188 = vand.u32 %v5187, 4294901760
        %v5189 = vsub.f32 %v5187, %v5188
        %v5190 = vand.u32 %v5189, 4294901760
        %5191 = vmatpush1.msra.mxu0 %v5190
        %5192 = vmatprep.subr.mxu0 0.0
        %5193 = vmatpush1.msra.mxu0 0.0
        %5194 = vmatprep.subr.mxu0 0.0
        %5195 = vmatpush1.msra.mxu0 0.0
        %5196 = vmatprep.subr.mxu0 0.0
        %5197 = vmatpush1.msra.mxu0 0.0
        %5198 = vmatprep.subr.mxu0 0.0
        %5199 = vmatpush1.msra.mxu0 0.0
        %5200 = vmatprep.subr.mxu0 0.0
        %5201 = vmatpush1.msra.mxu0 0.0
        %5202 = vmatprep.subr.mxu0 0.0
        %5203 = vmatpush1.msra.mxu0 0.0
        %5204 = vmatprep.subr.mxu0 0.0
        %5205 = vmatpush1.msra.mxu0 0.0
        %5206 = vmatprep.subr.mxu0 0.0
        %5207 = vmatpush1.msra.mxu0 0.0
        %5208 = vmatprep.subr.mxu0 0.0
        %5209 = vmatpush1.msra.mxu0 0.0
        %5210 = vmatprep.subr.mxu0 0.0
        %5211 = vmatpush1.msra.mxu0 0.0
        %5212 = vmatprep.subr.mxu0 0.0
        %5213 = vmatpush1.msra.mxu0 0.0
        %5214 = vmatprep.subr.mxu0 0.0
        %5215 = vmatpush1.msra.mxu0 0.0
        %5216 = vmatprep.subr.mxu0 0.0
        %5217 = vmatpush1.msra.mxu0 0.0
        %5218 = vmatprep.subr.mxu0 0.0
        %5219 = vmatpush1.msra.mxu0 0.0
        %5220 = vmatprep.subr.mxu0 0.0
        %5221 = vmatpush1.msra.mxu0 0.0
        %5222 = vmatprep.subr.mxu0 0.0
        %5223 = vmatpush1.msra.mxu0 0.0
        %5224 = vmatprep.subr.mxu0 0.0
        %5225 = vmatpush1.msra.mxu0 0.0
        %5226 = vmatprep.subr.mxu0 0.0
        %5227 = vmatpush1.msra.mxu0 0.0
        %5228 = vmatprep.subr.mxu0 0.0
        %5229 = vmatpush1.msra.mxu0 0.0
        %5230 = vmatprep.subr.mxu0 0.0
        %5231 = vmatpush1.msra.mxu0 0.0
        %5232 = vmatprep.subr.mxu0 0.0
        %5233 = vmatpush1.msra.mxu0 0.0
        %5234 = vmatprep.subr.mxu0 0.0
        %5235 = vmatpush1.msra.mxu0 0.0
        %5236 = vmatprep.subr.mxu0 0.0
        %5237 = vmatpush1.msra.mxu0 0.0
        %5238 = vmatprep.subr.mxu0 0.0
        %5239 = vmatpush1.msra.mxu0 0.0
        %5240 = vmatprep.subr.mxu0 0.0
        %5241 = vmatpush1.msra.mxu0 0.0
        %5242 = vmatprep.subr.mxu0 0.0
        %5243 = vmatpush1.msra.mxu0 0.0
        %5244 = vmatprep.subr.mxu0 0.0
        %5245 = vmatpush1.msra.mxu0 0.0
        %5246 = vmatprep.subr.mxu0 0.0
        %5247 = vmatpush1.msra.mxu0 0.0
        %5248 = vmatprep.mubr.f32.mxu0 0.0
        %v5249 = vand.u32 %v5058, 4294901760
        %5250 = vmatmul.mubr.f32.gmra.mrb[0].mxu0 %v5249
        %v5251 = vpop.f32.mrb[0].mxu0
        %v5252 = vadd.f32 %v5140, %v5251
        %v5253 = vpop.f32.mrb[0].mxu0
        %v5254 = vadd.f32 %v5142, %v5253
        %5255 = vdwg.mxu0
        %v5256 = vand.u32 %v5031, 4294901760
        %v5257 = vsub.f32 %v5031, %v5256
        %5258 = vmatprep.subr.mxu0 %v5257
        %v5259 = vand.u32 %v5030, 4294901760
        %v5260 = vsub.f32 %v5030, %v5259
        %5261 = vmatpush1.msra.mxu0 %v5260
        %v5262 = vand.u32 %v5035, 4294901760
        %v5263 = vsub.f32 %v5035, %v5262
        %5264 = vmatprep.subr.mxu0 %v5263
        %v5265 = vand.u32 %v5034, 4294901760
        %v5266 = vsub.f32 %v5034, %v5265
        %5267 = vmatpush1.msra.mxu0 %v5266
        %v5268 = vand.u32 %v5039, 4294901760
        %v5269 = vsub.f32 %v5039, %v5268
        %5270 = vmatprep.subr.mxu0 %v5269
        %v5271 = vand.u32 %v5038, 4294901760
        %v5272 = vsub.f32 %v5038, %v5271
        %5273 = vmatpush1.msra.mxu0 %v5272
        %v5274 = vand.u32 %v5043, 4294901760
        %v5275 = vsub.f32 %v5043, %v5274
        %5276 = vmatprep.subr.mxu0 %v5275
        %v5277 = vand.u32 %v5042, 4294901760
        %v5278 = vsub.f32 %v5042, %v5277
        %5279 = vmatpush1.msra.mxu0 %v5278
        %5280 = vmatprep.subr.mxu0 0.0
        %5281 = vmatpush1.msra.mxu0 0.0
        %5282 = vmatprep.subr.mxu0 0.0
        %5283 = vmatpush1.msra.mxu0 0.0
        %5284 = vmatprep.subr.mxu0 0.0
        %5285 = vmatpush1.msra.mxu0 0.0
        %5286 = vmatprep.subr.mxu0 0.0
        %5287 = vmatpush1.msra.mxu0 0.0
        %5288 = vmatprep.subr.mxu0 0.0
        %5289 = vmatpush1.msra.mxu0 0.0
        %5290 = vmatprep.subr.mxu0 0.0
        %5291 = vmatpush1.msra.mxu0 0.0
        %5292 = vmatprep.subr.mxu0 0.0
        %5293 = vmatpush1.msra.mxu0 0.0
        %5294 = vmatprep.subr.mxu0 0.0
        %5295 = vmatpush1.msra.mxu0 0.0
        %5296 = vmatprep.subr.mxu0 0.0
        %5297 = vmatpush1.msra.mxu0 0.0
        %5298 = vmatprep.subr.mxu0 0.0
        %5299 = vmatpush1.msra.mxu0 0.0
        %5300 = vmatprep.subr.mxu0 0.0
        %5301 = vmatpush1.msra.mxu0 0.0
        %5302 = vmatprep.subr.mxu0 0.0
        %5303 = vmatpush1.msra.mxu0 0.0
        %5304 = vmatprep.subr.mxu0 0.0
        %5305 = vmatpush1.msra.mxu0 0.0
        %5306 = vmatprep.subr.mxu0 0.0
        %5307 = vmatpush1.msra.mxu0 0.0
        %5308 = vmatprep.subr.mxu0 0.0
        %5309 = vmatpush1.msra.mxu0 0.0
        %5310 = vmatprep.subr.mxu0 0.0
        %5311 = vmatpush1.msra.mxu0 0.0
        %5312 = vmatprep.subr.mxu0 0.0
        %5313 = vmatpush1.msra.mxu0 0.0
        %5314 = vmatprep.subr.mxu0 0.0
        %5315 = vmatpush1.msra.mxu0 0.0
        %5316 = vmatprep.subr.mxu0 0.0
        %5317 = vmatpush1.msra.mxu0 0.0
        %5318 = vmatprep.subr.mxu0 0.0
        %5319 = vmatpush1.msra.mxu0 0.0
        %5320 = vmatprep.subr.mxu0 0.0
        %5321 = vmatpush1.msra.mxu0 0.0
        %5322 = vmatprep.subr.mxu0 0.0
        %5323 = vmatpush1.msra.mxu0 0.0
        %5324 = vmatprep.subr.mxu0 0.0
        %5325 = vmatpush1.msra.mxu0 0.0
        %5326 = vmatprep.subr.mxu0 0.0
        %5327 = vmatpush1.msra.mxu0 0.0
        %5328 = vmatprep.subr.mxu0 0.0
        %5329 = vmatpush1.msra.mxu0 0.0
        %5330 = vmatprep.subr.mxu0 0.0
        %5331 = vmatpush1.msra.mxu0 0.0
        %5332 = vmatprep.subr.mxu0 0.0
        %5333 = vmatpush1.msra.mxu0 0.0
        %5334 = vmatprep.subr.mxu0 0.0
        %5335 = vmatpush1.msra.mxu0 0.0
        %5336 = vmatprep.mubr.f32.mxu0 0.0
        %v5337 = vand.u32 %v5058, 4294901760
        %v5338 = vsub.f32 %v5058, %v5337
        %5339 = vmatmul.mubr.f32.gmra.mrb[0].mxu0 %v5338
        %v5340 = vpop.f32.mrb[0].mxu0
        %v5341 = vadd.f32 %v5252, %v5340
        %v5342 = vpop.f32.mrb[0].mxu0
        %v5343 = vadd.f32 %v5254, %v5342
        %5344 = vdwg.mxu0
        %v5345 = vand.u32 %v5031, 4294901760
        %5346 = vmatprep.subr.mxu0 %v5345
        %v5347 = vand.u32 %v5030, 4294901760
        %5348 = vmatpush1.msra.mxu0 %v5347
        %v5349 = vand.u32 %v5035, 4294901760
        %5350 = vmatprep.subr.mxu0 %v5349
        %v5351 = vand.u32 %v5034, 4294901760
        %5352 = vmatpush1.msra.mxu0 %v5351
        %v5353 = vand.u32 %v5039, 4294901760
        %5354 = vmatprep.subr.mxu0 %v5353
        %v5355 = vand.u32 %v5038, 4294901760
        %5356 = vmatpush1.msra.mxu0 %v5355
        %v5357 = vand.u32 %v5043, 4294901760
        %5358 = vmatprep.subr.mxu0 %v5357
        %v5359 = vand.u32 %v5042, 4294901760
        %5360 = vmatpush1.msra.mxu0 %v5359
        %5361 = vmatprep.subr.mxu0 0.0
        %5362 = vmatpush1.msra.mxu0 0.0
        %5363 = vmatprep.subr.mxu0 0.0
        %5364 = vmatpush1.msra.mxu0 0.0
        %5365 = vmatprep.subr.mxu0 0.0
        %5366 = vmatpush1.msra.mxu0 0.0
        %5367 = vmatprep.subr.mxu0 0.0
        %5368 = vmatpush1.msra.mxu0 0.0
        %5369 = vmatprep.subr.mxu0 0.0
        %5370 = vmatpush1.msra.mxu0 0.0
        %5371 = vmatprep.subr.mxu0 0.0
        %5372 = vmatpush1.msra.mxu0 0.0
        %5373 = vmatprep.subr.mxu0 0.0
        %5374 = vmatpush1.msra.mxu0 0.0
        %5375 = vmatprep.subr.mxu0 0.0
        %5376 = vmatpush1.msra.mxu0 0.0
        %5377 = vmatprep.subr.mxu0 0.0
        %5378 = vmatpush1.msra.mxu0 0.0
        %5379 = vmatprep.subr.mxu0 0.0
        %5380 = vmatpush1.msra.mxu0 0.0
        %5381 = vmatprep.subr.mxu0 0.0
        %5382 = vmatpush1.msra.mxu0 0.0
        %5383 = vmatprep.subr.mxu0 0.0
        %5384 = vmatpush1.msra.mxu0 0.0
        %5385 = vmatprep.subr.mxu0 0.0
        %5386 = vmatpush1.msra.mxu0 0.0
        %5387 = vmatprep.subr.mxu0 0.0
        %5388 = vmatpush1.msra.mxu0 0.0
        %5389 = vmatprep.subr.mxu0 0.0
        %5390 = vmatpush1.msra.mxu0 0.0
        %5391 = vmatprep.subr.mxu0 0.0
        %5392 = vmatpush1.msra.mxu0 0.0
        %5393 = vmatprep.subr.mxu0 0.0
        %5394 = vmatpush1.msra.mxu0 0.0
        %5395 = vmatprep.subr.mxu0 0.0
        %5396 = vmatpush1.msra.mxu0 0.0
        %5397 = vmatprep.subr.mxu0 0.0
        %5398 = vmatpush1.msra.mxu0 0.0
        %5399 = vmatprep.subr.mxu0 0.0
        %5400 = vmatpush1.msra.mxu0 0.0
        %5401 = vmatprep.subr.mxu0 0.0
        %5402 = vmatpush1.msra.mxu0 0.0
        %5403 = vmatprep.subr.mxu0 0.0
        %5404 = vmatpush1.msra.mxu0 0.0
        %5405 = vmatprep.subr.mxu0 0.0
        %5406 = vmatpush1.msra.mxu0 0.0
        %5407 = vmatprep.subr.mxu0 0.0
        %5408 = vmatpush1.msra.mxu0 0.0
        %5409 = vmatprep.subr.mxu0 0.0
        %5410 = vmatpush1.msra.mxu0 0.0
        %5411 = vmatprep.subr.mxu0 0.0
        %5412 = vmatpush1.msra.mxu0 0.0
        %5413 = vmatprep.subr.mxu0 0.0
        %5414 = vmatpush1.msra.mxu0 0.0
        %5415 = vmatprep.subr.mxu0 0.0
        %5416 = vmatpush1.msra.mxu0 0.0
        %5417 = vmatprep.mubr.f32.mxu0 0.0
        %v5418 = vand.u32 %v5058, 4294901760
        %v5419 = vsub.f32 %v5058, %v5418
        %v5420 = vand.u32 %v5419, 4294901760
        %5421 = vmatmul.mubr.f32.gmra.mrb[0].mxu0 %v5420
        %v5422 = vpop.f32.mrb[0].mxu0
        %v5423 = vadd.f32 %v5341, %v5422
        %v5424 = vpop.f32.mrb[0].mxu0
        %v5425 = vadd.f32 %v5343, %v5424
        %5426 = vdwg.mxu0
        %v5427 = vand.u32 %v5031, 4294901760
        %v5428 = vsub.f32 %v5031, %v5427
        %v5429 = vand.u32 %v5428, 4294901760
        %5430 = vmatprep.subr.mxu0 %v5429
        %v5431 = vand.u32 %v5030, 4294901760
        %v5432 = vsub.f32 %v5030, %v5431
        %v5433 = vand.u32 %v5432, 4294901760
        %5434 = vmatpush1.msra.mxu0 %v5433
        %v5435 = vand.u32 %v5035, 4294901760
        %v5436 = vsub.f32 %v5035, %v5435
        %v5437 = vand.u32 %v5436, 4294901760
        %5438 = vmatprep.subr.mxu0 %v5437
        %v5439 = vand.u32 %v5034, 4294901760
        %v5440 = vsub.f32 %v5034, %v5439
        %v5441 = vand.u32 %v5440, 4294901760
        %5442 = vmatpush1.msra.mxu0 %v5441
        %v5443 = vand.u32 %v5039, 4294901760
        %v5444 = vsub.f32 %v5039, %v5443
        %v5445 = vand.u32 %v5444, 4294901760
        %5446 = vmatprep.subr.mxu0 %v5445
        %v5447 = vand.u32 %v5038, 4294901760
        %v5448 = vsub.f32 %v5038, %v5447
        %v5449 = vand.u32 %v5448, 4294901760
        %5450 = vmatpush1.msra.mxu0 %v5449
        %v5451 = vand.u32 %v5043, 4294901760
        %v5452 = vsub.f32 %v5043, %v5451
        %v5453 = vand.u32 %v5452, 4294901760
        %5454 = vmatprep.subr.mxu0 %v5453
        %v5455 = vand.u32 %v5042, 4294901760
        %v5456 = vsub.f32 %v5042, %v5455
        %v5457 = vand.u32 %v5456, 4294901760
        %5458 = vmatpush1.msra.mxu0 %v5457
        %5459 = vmatprep.subr.mxu0 0.0
        %5460 = vmatpush1.msra.mxu0 0.0
        %5461 = vmatprep.subr.mxu0 0.0
        %5462 = vmatpush1.msra.mxu0 0.0
        %5463 = vmatprep.subr.mxu0 0.0
        %5464 = vmatpush1.msra.mxu0 0.0
        %5465 = vmatprep.subr.mxu0 0.0
        %5466 = vmatpush1.msra.mxu0 0.0
        %5467 = vmatprep.subr.mxu0 0.0
        %5468 = vmatpush1.msra.mxu0 0.0
        %5469 = vmatprep.subr.mxu0 0.0
        %5470 = vmatpush1.msra.mxu0 0.0
        %5471 = vmatprep.subr.mxu0 0.0
        %5472 = vmatpush1.msra.mxu0 0.0
        %5473 = vmatprep.subr.mxu0 0.0
        %5474 = vmatpush1.msra.mxu0 0.0
        %5475 = vmatprep.subr.mxu0 0.0
        %5476 = vmatpush1.msra.mxu0 0.0
        %5477 = vmatprep.subr.mxu0 0.0
        %5478 = vmatpush1.msra.mxu0 0.0
        %5479 = vmatprep.subr.mxu0 0.0
        %5480 = vmatpush1.msra.mxu0 0.0
        %5481 = vmatprep.subr.mxu0 0.0
        %5482 = vmatpush1.msra.mxu0 0.0
        %5483 = vmatprep.subr.mxu0 0.0
        %5484 = vmatpush1.msra.mxu0 0.0
        %5485 = vmatprep.subr.mxu0 0.0
        %5486 = vmatpush1.msra.mxu0 0.0
        %5487 = vmatprep.subr.mxu0 0.0
        %5488 = vmatpush1.msra.mxu0 0.0
        %5489 = vmatprep.subr.mxu0 0.0
        %5490 = vmatpush1.msra.mxu0 0.0
        %5491 = vmatprep.subr.mxu0 0.0
        %5492 = vmatpush1.msra.mxu0 0.0
        %5493 = vmatprep.subr.mxu0 0.0
        %5494 = vmatpush1.msra.mxu0 0.0
        %5495 = vmatprep.subr.mxu0 0.0
        %5496 = vmatpush1.msra.mxu0 0.0
        %5497 = vmatprep.subr.mxu0 0.0
        %5498 = vmatpush1.msra.mxu0 0.0
        %5499 = vmatprep.subr.mxu0 0.0
        %5500 = vmatpush1.msra.mxu0 0.0
        %5501 = vmatprep.subr.mxu0 0.0
        %5502 = vmatpush1.msra.mxu0 0.0
        %5503 = vmatprep.subr.mxu0 0.0
        %5504 = vmatpush1.msra.mxu0 0.0
        %5505 = vmatprep.subr.mxu0 0.0
        %5506 = vmatpush1.msra.mxu0 0.0
        %5507 = vmatprep.subr.mxu0 0.0
        %5508 = vmatpush1.msra.mxu0 0.0
        %5509 = vmatprep.subr.mxu0 0.0
        %5510 = vmatpush1.msra.mxu0 0.0
        %5511 = vmatprep.subr.mxu0 0.0
        %5512 = vmatpush1.msra.mxu0 0.0
        %5513 = vmatprep.subr.mxu0 0.0
        %5514 = vmatpush1.msra.mxu0 0.0
        %5515 = vmatprep.mubr.f32.mxu0 0.0
        %v5516 = vand.u32 %v5058, 4294901760
        %5517 = vmatmul.mubr.f32.gmra.mrb[0].mxu0 %v5516
        %v5518 = vpop.f32.mrb[0].mxu0
        %v5519 = vadd.f32 %v5423, %v5518
        %v5520 = vpop.f32.mrb[0].mxu0
        %v5521 = vadd.f32 %v5425, %v5520
        %5522 = vdwg.mxu0
        %v5523 = vand.u32 %v5031, 4294901760
        %5524 = vmatprep.subr.mxu0 %v5523
        %v5525 = vand.u32 %v5030, 4294901760
        %5526 = vmatpush1.msra.mxu0 %v5525
        %v5527 = vand.u32 %v5035, 4294901760
        %5528 = vmatprep.subr.mxu0 %v5527
        %v5529 = vand.u32 %v5034, 4294901760
        %5530 = vmatpush1.msra.mxu0 %v5529
        %v5531 = vand.u32 %v5039, 4294901760
        %5532 = vmatprep.subr.mxu0 %v5531
        %v5533 = vand.u32 %v5038, 4294901760
        %5534 = vmatpush1.msra.mxu0 %v5533
        %v5535 = vand.u32 %v5043, 4294901760
        %5536 = vmatprep.subr.mxu0 %v5535
        %v5537 = vand.u32 %v5042, 4294901760
        %5538 = vmatpush1.msra.mxu0 %v5537
        %5539 = vmatprep.subr.mxu0 0.0
        %5540 = vmatpush1.msra.mxu0 0.0
        %5541 = vmatprep.subr.mxu0 0.0
        %5542 = vmatpush1.msra.mxu0 0.0
        %5543 = vmatprep.subr.mxu0 0.0
        %5544 = vmatpush1.msra.mxu0 0.0
        %5545 = vmatprep.subr.mxu0 0.0
        %5546 = vmatpush1.msra.mxu0 0.0
        %5547 = vmatprep.subr.mxu0 0.0
        %5548 = vmatpush1.msra.mxu0 0.0
        %5549 = vmatprep.subr.mxu0 0.0
        %5550 = vmatpush1.msra.mxu0 0.0
        %5551 = vmatprep.subr.mxu0 0.0
        %5552 = vmatpush1.msra.mxu0 0.0
        %5553 = vmatprep.subr.mxu0 0.0
        %5554 = vmatpush1.msra.mxu0 0.0
        %5555 = vmatprep.subr.mxu0 0.0
        %5556 = vmatpush1.msra.mxu0 0.0
        %5557 = vmatprep.subr.mxu0 0.0
        %5558 = vmatpush1.msra.mxu0 0.0
        %5559 = vmatprep.subr.mxu0 0.0
        %5560 = vmatpush1.msra.mxu0 0.0
        %5561 = vmatprep.subr.mxu0 0.0
        %5562 = vmatpush1.msra.mxu0 0.0
        %5563 = vmatprep.subr.mxu0 0.0
        %5564 = vmatpush1.msra.mxu0 0.0
        %5565 = vmatprep.subr.mxu0 0.0
        %5566 = vmatpush1.msra.mxu0 0.0
        %5567 = vmatprep.subr.mxu0 0.0
        %5568 = vmatpush1.msra.mxu0 0.0
        %5569 = vmatprep.subr.mxu0 0.0
        %5570 = vmatpush1.msra.mxu0 0.0
        %5571 = vmatprep.subr.mxu0 0.0
        %5572 = vmatpush1.msra.mxu0 0.0
        %5573 = vmatprep.subr.mxu0 0.0
        %5574 = vmatpush1.msra.mxu0 0.0
        %5575 = vmatprep.subr.mxu0 0.0
        %5576 = vmatpush1.msra.mxu0 0.0
        %5577 = vmatprep.subr.mxu0 0.0
        %5578 = vmatpush1.msra.mxu0 0.0
        %5579 = vmatprep.subr.mxu0 0.0
        %5580 = vmatpush1.msra.mxu0 0.0
        %5581 = vmatprep.subr.mxu0 0.0
        %5582 = vmatpush1.msra.mxu0 0.0
        %5583 = vmatprep.subr.mxu0 0.0
        %5584 = vmatpush1.msra.mxu0 0.0
        %5585 = vmatprep.subr.mxu0 0.0
        %5586 = vmatpush1.msra.mxu0 0.0
        %5587 = vmatprep.subr.mxu0 0.0
        %5588 = vmatpush1.msra.mxu0 0.0
        %5589 = vmatprep.subr.mxu0 0.0
        %5590 = vmatpush1.msra.mxu0 0.0
        %5591 = vmatprep.subr.mxu0 0.0
        %5592 = vmatpush1.msra.mxu0 0.0
        %5593 = vmatprep.subr.mxu0 0.0
        %5594 = vmatpush1.msra.mxu0 0.0
        %5595 = vmatprep.mubr.f32.mxu0 0.0
        %v5596 = vand.u32 %v5058, 4294901760
        %5597 = vmatmul.mubr.f32.gmra.mrb[0].mxu0 %v5596
        %v5598 = vpop.f32.mrb[0].mxu0
        %v5599 = vadd.f32 %v5519, %v5598
        %v5600 = vpop.f32.mrb[0].mxu0
        %v5601 = vadd.f32 %v5521, %v5600
        %5602 = vdwg.mxu0
        %v5603 = vand.u32 %v5033, 4294901760
        %5604 = vmatprep.subr.mxu0 %v5603
        %v5605 = vand.u32 %v5032, 4294901760
        %5606 = vmatpush1.msra.mxu0 %v5605
        %v5607 = vand.u32 %v5037, 4294901760
        %5608 = vmatprep.subr.mxu0 %v5607
        %v5609 = vand.u32 %v5036, 4294901760
        %5610 = vmatpush1.msra.mxu0 %v5609
        %v5611 = vand.u32 %v5041, 4294901760
        %5612 = vmatprep.subr.mxu0 %v5611
        %v5613 = vand.u32 %v5040, 4294901760
        %5614 = vmatpush1.msra.mxu0 %v5613
        %v5615 = vand.u32 %v5045, 4294901760
        %5616 = vmatprep.subr.mxu0 %v5615
        %v5617 = vand.u32 %v5044, 4294901760
        %5618 = vmatpush1.msra.mxu0 %v5617
        %5619 = vmatprep.subr.mxu0 0.0
        %5620 = vmatpush1.msra.mxu0 0.0
        %5621 = vmatprep.subr.mxu0 0.0
        %5622 = vmatpush1.msra.mxu0 0.0
        %5623 = vmatprep.subr.mxu0 0.0
        %5624 = vmatpush1.msra.mxu0 0.0
        %5625 = vmatprep.subr.mxu0 0.0
        %5626 = vmatpush1.msra.mxu0 0.0
        %5627 = vmatprep.subr.mxu0 0.0
        %5628 = vmatpush1.msra.mxu0 0.0
        %5629 = vmatprep.subr.mxu0 0.0
        %5630 = vmatpush1.msra.mxu0 0.0
        %5631 = vmatprep.subr.mxu0 0.0
        %5632 = vmatpush1.msra.mxu0 0.0
        %5633 = vmatprep.subr.mxu0 0.0
        %5634 = vmatpush1.msra.mxu0 0.0
        %5635 = vmatprep.subr.mxu0 0.0
        %5636 = vmatpush1.msra.mxu0 0.0
        %5637 = vmatprep.subr.mxu0 0.0
        %5638 = vmatpush1.msra.mxu0 0.0
        %5639 = vmatprep.subr.mxu0 0.0
        %5640 = vmatpush1.msra.mxu0 0.0
        %5641 = vmatprep.subr.mxu0 0.0
        %5642 = vmatpush1.msra.mxu0 0.0
        %5643 = vmatprep.subr.mxu0 0.0
        %5644 = vmatpush1.msra.mxu0 0.0
        %5645 = vmatprep.subr.mxu0 0.0
        %5646 = vmatpush1.msra.mxu0 0.0
        %5647 = vmatprep.subr.mxu0 0.0
        %5648 = vmatpush1.msra.mxu0 0.0
        %5649 = vmatprep.subr.mxu0 0.0
        %5650 = vmatpush1.msra.mxu0 0.0
        %5651 = vmatprep.subr.mxu0 0.0
        %5652 = vmatpush1.msra.mxu0 0.0
        %5653 = vmatprep.subr.mxu0 0.0
        %5654 = vmatpush1.msra.mxu0 0.0
        %5655 = vmatprep.subr.mxu0 0.0
        %5656 = vmatpush1.msra.mxu0 0.0
        %5657 = vmatprep.subr.mxu0 0.0
        %5658 = vmatpush1.msra.mxu0 0.0
        %5659 = vmatprep.subr.mxu0 0.0
        %5660 = vmatpush1.msra.mxu0 0.0
        %5661 = vmatprep.subr.mxu0 0.0
        %5662 = vmatpush1.msra.mxu0 0.0
        %5663 = vmatprep.subr.mxu0 0.0
        %5664 = vmatpush1.msra.mxu0 0.0
        %5665 = vmatprep.subr.mxu0 0.0
        %5666 = vmatpush1.msra.mxu0 0.0
        %5667 = vmatprep.subr.mxu0 0.0
        %5668 = vmatpush1.msra.mxu0 0.0
        %5669 = vmatprep.subr.mxu0 0.0
        %5670 = vmatpush1.msra.mxu0 0.0
        %5671 = vmatprep.subr.mxu0 0.0
        %5672 = vmatpush1.msra.mxu0 0.0
        %5673 = vmatprep.subr.mxu0 0.0
        %5674 = vmatpush1.msra.mxu0 0.0
        %5675 = vmatprep.mubr.f32.mxu0 0.0
        %v5676 = vand.u32 %v5058, 4294901760
        %v5677 = vsub.f32 %v5058, %v5676
        %v5678 = vand.u32 %v5677, 4294901760
        %v5679 = vsub.f32 %v5677, %v5678
        %v5680 = vand.u32 %v5679, 4294901760
        %5681 = vmatmul.mubr.f32.gmra.mrb[0].mxu0 %v5680
        %v5682 = vpop.f32.mrb[0].mxu0
        %v5683 = vadd.f32 %v5056, %v5682
        %v5684 = vpop.f32.mrb[0].mxu0
        %v5685 = vadd.f32 %v5056, %v5684
        %5686 = vdwg.mxu0
        %v5687 = vand.u32 %v5033, 4294901760
        %v5688 = vsub.f32 %v5033, %v5687
        %v5689 = vand.u32 %v5688, 4294901760
        %v5690 = vsub.f32 %v5688, %v5689
        %v5691 = vand.u32 %v5690, 4294901760
        %5692 = vmatprep.subr.mxu0 %v5691
        %v5693 = vand.u32 %v5032, 4294901760
        %v5694 = vsub.f32 %v5032, %v5693
        %v5695 = vand.u32 %v5694, 4294901760
        %v5696 = vsub.f32 %v5694, %v5695
        %v5697 = vand.u32 %v5696, 4294901760
        %5698 = vmatpush1.msra.mxu0 %v5697
        %v5699 = vand.u32 %v5037, 4294901760
        %v5700 = vsub.f32 %v5037, %v5699
        %v5701 = vand.u32 %v5700, 4294901760
        %v5702 = vsub.f32 %v5700, %v5701
        %v5703 = vand.u32 %v5702, 4294901760
        %5704 = vmatprep.subr.mxu0 %v5703
        %v5705 = vand.u32 %v5036, 4294901760
        %v5706 = vsub.f32 %v5036, %v5705
        %v5707 = vand.u32 %v5706, 4294901760
        %v5708 = vsub.f32 %v5706, %v5707
        %v5709 = vand.u32 %v5708, 4294901760
        %5710 = vmatpush1.msra.mxu0 %v5709
        %v5711 = vand.u32 %v5041, 4294901760
        %v5712 = vsub.f32 %v5041, %v5711
        %v5713 = vand.u32 %v5712, 4294901760
        %v5714 = vsub.f32 %v5712, %v5713
        %v5715 = vand.u32 %v5714, 4294901760
        %5716 = vmatprep.subr.mxu0 %v5715
        %v5717 = vand.u32 %v5040, 4294901760
        %v5718 = vsub.f32 %v5040, %v5717
        %v5719 = vand.u32 %v5718, 4294901760
        %v5720 = vsub.f32 %v5718, %v5719
        %v5721 = vand.u32 %v5720, 4294901760
        %5722 = vmatpush1.msra.mxu0 %v5721
        %v5723 = vand.u32 %v5045, 4294901760
        %v5724 = vsub.f32 %v5045, %v5723
        %v5725 = vand.u32 %v5724, 4294901760
        %v5726 = vsub.f32 %v5724, %v5725
        %v5727 = vand.u32 %v5726, 4294901760
        %5728 = vmatprep.subr.mxu0 %v5727
        %v5729 = vand.u32 %v5044, 4294901760
        %v5730 = vsub.f32 %v5044, %v5729
        %v5731 = vand.u32 %v5730, 4294901760
        %v5732 = vsub.f32 %v5730, %v5731
        %v5733 = vand.u32 %v5732, 4294901760
        %5734 = vmatpush1.msra.mxu0 %v5733
        %5735 = vmatprep.subr.mxu0 0.0
        %5736 = vmatpush1.msra.mxu0 0.0
        %5737 = vmatprep.subr.mxu0 0.0
        %5738 = vmatpush1.msra.mxu0 0.0
        %5739 = vmatprep.subr.mxu0 0.0
        %5740 = vmatpush1.msra.mxu0 0.0
        %5741 = vmatprep.subr.mxu0 0.0
        %5742 = vmatpush1.msra.mxu0 0.0
        %5743 = vmatprep.subr.mxu0 0.0
        %5744 = vmatpush1.msra.mxu0 0.0
        %5745 = vmatprep.subr.mxu0 0.0
        %5746 = vmatpush1.msra.mxu0 0.0
        %5747 = vmatprep.subr.mxu0 0.0
        %5748 = vmatpush1.msra.mxu0 0.0
        %5749 = vmatprep.subr.mxu0 0.0
        %5750 = vmatpush1.msra.mxu0 0.0
        %5751 = vmatprep.subr.mxu0 0.0
        %5752 = vmatpush1.msra.mxu0 0.0
        %5753 = vmatprep.subr.mxu0 0.0
        %5754 = vmatpush1.msra.mxu0 0.0
        %5755 = vmatprep.subr.mxu0 0.0
        %5756 = vmatpush1.msra.mxu0 0.0
        %5757 = vmatprep.subr.mxu0 0.0
        %5758 = vmatpush1.msra.mxu0 0.0
        %5759 = vmatprep.subr.mxu0 0.0
        %5760 = vmatpush1.msra.mxu0 0.0
        %5761 = vmatprep.subr.mxu0 0.0
        %5762 = vmatpush1.msra.mxu0 0.0
        %5763 = vmatprep.subr.mxu0 0.0
        %5764 = vmatpush1.msra.mxu0 0.0
        %5765 = vmatprep.subr.mxu0 0.0
        %5766 = vmatpush1.msra.mxu0 0.0
        %5767 = vmatprep.subr.mxu0 0.0
        %5768 = vmatpush1.msra.mxu0 0.0
        %5769 = vmatprep.subr.mxu0 0.0
        %5770 = vmatpush1.msra.mxu0 0.0
        %5771 = vmatprep.subr.mxu0 0.0
        %5772 = vmatpush1.msra.mxu0 0.0
        %5773 = vmatprep.subr.mxu0 0.0
        %5774 = vmatpush1.msra.mxu0 0.0
        %5775 = vmatprep.subr.mxu0 0.0
        %5776 = vmatpush1.msra.mxu0 0.0
        %5777 = vmatprep.subr.mxu0 0.0
        %5778 = vmatpush1.msra.mxu0 0.0
        %5779 = vmatprep.subr.mxu0 0.0
        %5780 = vmatpush1.msra.mxu0 0.0
        %5781 = vmatprep.subr.mxu0 0.0
        %5782 = vmatpush1.msra.mxu0 0.0
        %5783 = vmatprep.subr.mxu0 0.0
        %5784 = vmatpush1.msra.mxu0 0.0
        %5785 = vmatprep.subr.mxu0 0.0
        %5786 = vmatpush1.msra.mxu0 0.0
        %5787 = vmatprep.subr.mxu0 0.0
        %5788 = vmatpush1.msra.mxu0 0.0
        %5789 = vmatprep.subr.mxu0 0.0
        %5790 = vmatpush1.msra.mxu0 0.0
        %5791 = vmatprep.mubr.f32.mxu0 0.0
        %v5792 = vand.u32 %v5058, 4294901760
        %5793 = vmatmul.mubr.f32.gmra.mrb[0].mxu0 %v5792
        %v5794 = vpop.f32.mrb[0].mxu0
        %v5795 = vadd.f32 %v5683, %v5794
        %v5796 = vpop.f32.mrb[0].mxu0
        %v5797 = vadd.f32 %v5685, %v5796
        %5798 = vdwg.mxu0
        %v5799 = vand.u32 %v5033, 4294901760
        %v5800 = vsub.f32 %v5033, %v5799
        %5801 = vmatprep.subr.mxu0 %v5800
        %v5802 = vand.u32 %v5032, 4294901760
        %v5803 = vsub.f32 %v5032, %v5802
        %5804 = vmatpush1.msra.mxu0 %v5803
        %v5805 = vand.u32 %v5037, 4294901760
        %v5806 = vsub.f32 %v5037, %v5805
        %5807 = vmatprep.subr.mxu0 %v5806
        %v5808 = vand.u32 %v5036, 4294901760
        %v5809 = vsub.f32 %v5036, %v5808
        %5810 = vmatpush1.msra.mxu0 %v5809
        %v5811 = vand.u32 %v5041, 4294901760
        %v5812 = vsub.f32 %v5041, %v5811
        %5813 = vmatprep.subr.mxu0 %v5812
        %v5814 = vand.u32 %v5040, 4294901760
        %v5815 = vsub.f32 %v5040, %v5814
        %5816 = vmatpush1.msra.mxu0 %v5815
        %v5817 = vand.u32 %v5045, 4294901760
        %v5818 = vsub.f32 %v5045, %v5817
        %5819 = vmatprep.subr.mxu0 %v5818
        %v5820 = vand.u32 %v5044, 4294901760
        %v5821 = vsub.f32 %v5044, %v5820
        %5822 = vmatpush1.msra.mxu0 %v5821
        %5823 = vmatprep.subr.mxu0 0.0
        %5824 = vmatpush1.msra.mxu0 0.0
        %5825 = vmatprep.subr.mxu0 0.0
        %5826 = vmatpush1.msra.mxu0 0.0
        %5827 = vmatprep.subr.mxu0 0.0
        %5828 = vmatpush1.msra.mxu0 0.0
        %5829 = vmatprep.subr.mxu0 0.0
        %5830 = vmatpush1.msra.mxu0 0.0
        %5831 = vmatprep.subr.mxu0 0.0
        %5832 = vmatpush1.msra.mxu0 0.0
        %5833 = vmatprep.subr.mxu0 0.0
        %5834 = vmatpush1.msra.mxu0 0.0
        %5835 = vmatprep.subr.mxu0 0.0
        %5836 = vmatpush1.msra.mxu0 0.0
        %5837 = vmatprep.subr.mxu0 0.0
        %5838 = vmatpush1.msra.mxu0 0.0
        %5839 = vmatprep.subr.mxu0 0.0
        %5840 = vmatpush1.msra.mxu0 0.0
        %5841 = vmatprep.subr.mxu0 0.0
        %5842 = vmatpush1.msra.mxu0 0.0
        %5843 = vmatprep.subr.mxu0 0.0
        %5844 = vmatpush1.msra.mxu0 0.0
        %5845 = vmatprep.subr.mxu0 0.0
        %5846 = vmatpush1.msra.mxu0 0.0
        %5847 = vmatprep.subr.mxu0 0.0
        %5848 = vmatpush1.msra.mxu0 0.0
        %5849 = vmatprep.subr.mxu0 0.0
        %5850 = vmatpush1.msra.mxu0 0.0
        %5851 = vmatprep.subr.mxu0 0.0
        %5852 = vmatpush1.msra.mxu0 0.0
        %5853 = vmatprep.subr.mxu0 0.0
        %5854 = vmatpush1.msra.mxu0 0.0
        %5855 = vmatprep.subr.mxu0 0.0
        %5856 = vmatpush1.msra.mxu0 0.0
        %5857 = vmatprep.subr.mxu0 0.0
        %5858 = vmatpush1.msra.mxu0 0.0
        %5859 = vmatprep.subr.mxu0 0.0
        %5860 = vmatpush1.msra.mxu0 0.0
        %5861 = vmatprep.subr.mxu0 0.0
        %5862 = vmatpush1.msra.mxu0 0.0
        %5863 = vmatprep.subr.mxu0 0.0
        %5864 = vmatpush1.msra.mxu0 0.0
        %5865 = vmatprep.subr.mxu0 0.0
        %5866 = vmatpush1.msra.mxu0 0.0
        %5867 = vmatprep.subr.mxu0 0.0
        %5868 = vmatpush1.msra.mxu0 0.0
        %5869 = vmatprep.subr.mxu0 0.0
        %5870 = vmatpush1.msra.mxu0 0.0
        %5871 = vmatprep.subr.mxu0 0.0
        %5872 = vmatpush1.msra.mxu0 0.0
        %5873 = vmatprep.subr.mxu0 0.0
        %5874 = vmatpush1.msra.mxu0 0.0
        %5875 = vmatprep.subr.mxu0 0.0
        %5876 = vmatpush1.msra.mxu0 0.0
        %5877 = vmatprep.subr.mxu0 0.0
        %5878 = vmatpush1.msra.mxu0 0.0
        %5879 = vmatprep.mubr.f32.mxu0 0.0
        %v5880 = vand.u32 %v5058, 4294901760
        %v5881 = vsub.f32 %v5058, %v5880
        %5882 = vmatmul.mubr.f32.gmra.mrb[0].mxu0 %v5881
        %v5883 = vpop.f32.mrb[0].mxu0
        %v5884 = vadd.f32 %v5795, %v5883
        %v5885 = vpop.f32.mrb[0].mxu0
        %v5886 = vadd.f32 %v5797, %v5885
        %5887 = vdwg.mxu0
        %v5888 = vand.u32 %v5033, 4294901760
        %5889 = vmatprep.subr.mxu0 %v5888
        %v5890 = vand.u32 %v5032, 4294901760
        %5891 = vmatpush1.msra.mxu0 %v5890
        %v5892 = vand.u32 %v5037, 4294901760
        %5893 = vmatprep.subr.mxu0 %v5892
        %v5894 = vand.u32 %v5036, 4294901760
        %5895 = vmatpush1.msra.mxu0 %v5894
        %v5896 = vand.u32 %v5041, 4294901760
        %5897 = vmatprep.subr.mxu0 %v5896
        %v5898 = vand.u32 %v5040, 4294901760
        %5899 = vmatpush1.msra.mxu0 %v5898
        %v5900 = vand.u32 %v5045, 4294901760
        %5901 = vmatprep.subr.mxu0 %v5900
        %v5902 = vand.u32 %v5044, 4294901760
        %5903 = vmatpush1.msra.mxu0 %v5902
        %5904 = vmatprep.subr.mxu0 0.0
        %5905 = vmatpush1.msra.mxu0 0.0
        %5906 = vmatprep.subr.mxu0 0.0
        %5907 = vmatpush1.msra.mxu0 0.0
        %5908 = vmatprep.subr.mxu0 0.0
        %5909 = vmatpush1.msra.mxu0 0.0
        %5910 = vmatprep.subr.mxu0 0.0
        %5911 = vmatpush1.msra.mxu0 0.0
        %5912 = vmatprep.subr.mxu0 0.0
        %5913 = vmatpush1.msra.mxu0 0.0
        %5914 = vmatprep.subr.mxu0 0.0
        %5915 = vmatpush1.msra.mxu0 0.0
        %5916 = vmatprep.subr.mxu0 0.0
        %5917 = vmatpush1.msra.mxu0 0.0
        %5918 = vmatprep.subr.mxu0 0.0
        %5919 = vmatpush1.msra.mxu0 0.0
        %5920 = vmatprep.subr.mxu0 0.0
        %5921 = vmatpush1.msra.mxu0 0.0
        %5922 = vmatprep.subr.mxu0 0.0
        %5923 = vmatpush1.msra.mxu0 0.0
        %5924 = vmatprep.subr.mxu0 0.0
        %5925 = vmatpush1.msra.mxu0 0.0
        %5926 = vmatprep.subr.mxu0 0.0
        %5927 = vmatpush1.msra.mxu0 0.0
        %5928 = vmatprep.subr.mxu0 0.0
        %5929 = vmatpush1.msra.mxu0 0.0
        %5930 = vmatprep.subr.mxu0 0.0
        %5931 = vmatpush1.msra.mxu0 0.0
        %5932 = vmatprep.subr.mxu0 0.0
        %5933 = vmatpush1.msra.mxu0 0.0
        %5934 = vmatprep.subr.mxu0 0.0
        %5935 = vmatpush1.msra.mxu0 0.0
        %5936 = vmatprep.subr.mxu0 0.0
        %5937 = vmatpush1.msra.mxu0 0.0
        %5938 = vmatprep.subr.mxu0 0.0
        %5939 = vmatpush1.msra.mxu0 0.0
        %5940 = vmatprep.subr.mxu0 0.0
        %5941 = vmatpush1.msra.mxu0 0.0
        %5942 = vmatprep.subr.mxu0 0.0
        %5943 = vmatpush1.msra.mxu0 0.0
        %5944 = vmatprep.subr.mxu0 0.0
        %5945 = vmatpush1.msra.mxu0 0.0
        %5946 = vmatprep.subr.mxu0 0.0
        %5947 = vmatpush1.msra.mxu0 0.0
        %5948 = vmatprep.subr.mxu0 0.0
        %5949 = vmatpush1.msra.mxu0 0.0
        %5950 = vmatprep.subr.mxu0 0.0
        %5951 = vmatpush1.msra.mxu0 0.0
        %5952 = vmatprep.subr.mxu0 0.0
        %5953 = vmatpush1.msra.mxu0 0.0
        %5954 = vmatprep.subr.mxu0 0.0
        %5955 = vmatpush1.msra.mxu0 0.0
        %5956 = vmatprep.subr.mxu0 0.0
        %5957 = vmatpush1.msra.mxu0 0.0
        %5958 = vmatprep.subr.mxu0 0.0
        %5959 = vmatpush1.msra.mxu0 0.0
        %5960 = vmatprep.mubr.f32.mxu0 0.0
        %v5961 = vand.u32 %v5058, 4294901760
        %v5962 = vsub.f32 %v5058, %v5961
        %v5963 = vand.u32 %v5962, 4294901760
        %5964 = vmatmul.mubr.f32.gmra.mrb[0].mxu0 %v5963
        %v5965 = vpop.f32.mrb[0].mxu0
        %v5966 = vadd.f32 %v5884, %v5965
        %v5967 = vpop.f32.mrb[0].mxu0
        %v5968 = vadd.f32 %v5886, %v5967
        %5969 = vdwg.mxu0
        %v5970 = vand.u32 %v5033, 4294901760
        %v5971 = vsub.f32 %v5033, %v5970
        %v5972 = vand.u32 %v5971, 4294901760
        %5973 = vmatprep.subr.mxu0 %v5972
        %v5974 = vand.u32 %v5032, 4294901760
        %v5975 = vsub.f32 %v5032, %v5974
        %v5976 = vand.u32 %v5975, 4294901760
        %5977 = vmatpush1.msra.mxu0 %v5976
        %v5978 = vand.u32 %v5037, 4294901760
        %v5979 = vsub.f32 %v5037, %v5978
        %v5980 = vand.u32 %v5979, 4294901760
        %5981 = vmatprep.subr.mxu0 %v5980
        %v5982 = vand.u32 %v5036, 4294901760
        %v5983 = vsub.f32 %v5036, %v5982
        %v5984 = vand.u32 %v5983, 4294901760
        %5985 = vmatpush1.msra.mxu0 %v5984
        %v5986 = vand.u32 %v5041, 4294901760
        %v5987 = vsub.f32 %v5041, %v5986
        %v5988 = vand.u32 %v5987, 4294901760
        %5989 = vmatprep.subr.mxu0 %v5988
        %v5990 = vand.u32 %v5040, 4294901760
        %v5991 = vsub.f32 %v5040, %v5990
        %v5992 = vand.u32 %v5991, 4294901760
        %5993 = vmatpush1.msra.mxu0 %v5992
        %v5994 = vand.u32 %v5045, 4294901760
        %v5995 = vsub.f32 %v5045, %v5994
        %v5996 = vand.u32 %v5995, 4294901760
        %5997 = vmatprep.subr.mxu0 %v5996
        %v5998 = vand.u32 %v5044, 4294901760
        %v5999 = vsub.f32 %v5044, %v5998
        %v6000 = vand.u32 %v5999, 4294901760
        %6001 = vmatpush1.msra.mxu0 %v6000
        %6002 = vmatprep.subr.mxu0 0.0
        %6003 = vmatpush1.msra.mxu0 0.0
        %6004 = vmatprep.subr.mxu0 0.0
        %6005 = vmatpush1.msra.mxu0 0.0
        %6006 = vmatprep.subr.mxu0 0.0
        %6007 = vmatpush1.msra.mxu0 0.0
        %6008 = vmatprep.subr.mxu0 0.0
        %6009 = vmatpush1.msra.mxu0 0.0
        %6010 = vmatprep.subr.mxu0 0.0
        %6011 = vmatpush1.msra.mxu0 0.0
        %6012 = vmatprep.subr.mxu0 0.0
        %6013 = vmatpush1.msra.mxu0 0.0
        %6014 = vmatprep.subr.mxu0 0.0
        %6015 = vmatpush1.msra.mxu0 0.0
        %6016 = vmatprep.subr.mxu0 0.0
        %6017 = vmatpush1.msra.mxu0 0.0
        %6018 = vmatprep.subr.mxu0 0.0
        %6019 = vmatpush1.msra.mxu0 0.0
        %6020 = vmatprep.subr.mxu0 0.0
        %6021 = vmatpush1.msra.mxu0 0.0
        %6022 = vmatprep.subr.mxu0 0.0
        %6023 = vmatpush1.msra.mxu0 0.0
        %6024 = vmatprep.subr.mxu0 0.0
        %6025 = vmatpush1.msra.mxu0 0.0
        %6026 = vmatprep.subr.mxu0 0.0
        %6027 = vmatpush1.msra.mxu0 0.0
        %6028 = vmatprep.subr.mxu0 0.0
        %6029 = vmatpush1.msra.mxu0 0.0
        %6030 = vmatprep.subr.mxu0 0.0
        %6031 = vmatpush1.msra.mxu0 0.0
        %6032 = vmatprep.subr.mxu0 0.0
        %6033 = vmatpush1.msra.mxu0 0.0
        %6034 = vmatprep.subr.mxu0 0.0
        %6035 = vmatpush1.msra.mxu0 0.0
        %6036 = vmatprep.subr.mxu0 0.0
        %6037 = vmatpush1.msra.mxu0 0.0
        %6038 = vmatprep.subr.mxu0 0.0
        %6039 = vmatpush1.msra.mxu0 0.0
        %6040 = vmatprep.subr.mxu0 0.0
        %6041 = vmatpush1.msra.mxu0 0.0
        %6042 = vmatprep.subr.mxu0 0.0
        %6043 = vmatpush1.msra.mxu0 0.0
        %6044 = vmatprep.subr.mxu0 0.0
        %6045 = vmatpush1.msra.mxu0 0.0
        %6046 = vmatprep.subr.mxu0 0.0
        %6047 = vmatpush1.msra.mxu0 0.0
        %6048 = vmatprep.subr.mxu0 0.0
        %6049 = vmatpush1.msra.mxu0 0.0
        %6050 = vmatprep.subr.mxu0 0.0
        %6051 = vmatpush1.msra.mxu0 0.0
        %6052 = vmatprep.subr.mxu0 0.0
        %6053 = vmatpush1.msra.mxu0 0.0
        %6054 = vmatprep.subr.mxu0 0.0
        %6055 = vmatpush1.msra.mxu0 0.0
        %6056 = vmatprep.subr.mxu0 0.0
        %6057 = vmatpush1.msra.mxu0 0.0
        %6058 = vmatprep.mubr.f32.mxu0 0.0
        %v6059 = vand.u32 %v5058, 4294901760
        %6060 = vmatmul.mubr.f32.gmra.mrb[0].mxu0 %v6059
        %v6061 = vpop.f32.mrb[0].mxu0
        %v6062 = vadd.f32 %v5966, %v6061
        %v6063 = vpop.f32.mrb[0].mxu0
        %v6064 = vadd.f32 %v5968, %v6063
        %6065 = vdwg.mxu0
        %v6066 = vand.u32 %v5033, 4294901760
        %6067 = vmatprep.subr.mxu0 %v6066
        %v6068 = vand.u32 %v5032, 4294901760
        %6069 = vmatpush1.msra.mxu0 %v6068
        %v6070 = vand.u32 %v5037, 4294901760
        %6071 = vmatprep.subr.mxu0 %v6070
        %v6072 = vand.u32 %v5036, 4294901760
        %6073 = vmatpush1.msra.mxu0 %v6072
        %v6074 = vand.u32 %v5041, 4294901760
        %6075 = vmatprep.subr.mxu0 %v6074
        %v6076 = vand.u32 %v5040, 4294901760
        %6077 = vmatpush1.msra.mxu0 %v6076
        %v6078 = vand.u32 %v5045, 4294901760
        %6079 = vmatprep.subr.mxu0 %v6078
        %v6080 = vand.u32 %v5044, 4294901760
        %6081 = vmatpush1.msra.mxu0 %v6080
        %6082 = vmatprep.subr.mxu0 0.0
        %6083 = vmatpush1.msra.mxu0 0.0
        %6084 = vmatprep.subr.mxu0 0.0
        %6085 = vmatpush1.msra.mxu0 0.0
        %6086 = vmatprep.subr.mxu0 0.0
        %6087 = vmatpush1.msra.mxu0 0.0
        %6088 = vmatprep.subr.mxu0 0.0
        %6089 = vmatpush1.msra.mxu0 0.0
        %6090 = vmatprep.subr.mxu0 0.0
        %6091 = vmatpush1.msra.mxu0 0.0
        %6092 = vmatprep.subr.mxu0 0.0
        %6093 = vmatpush1.msra.mxu0 0.0
        %6094 = vmatprep.subr.mxu0 0.0
        %6095 = vmatpush1.msra.mxu0 0.0
        %6096 = vmatprep.subr.mxu0 0.0
        %6097 = vmatpush1.msra.mxu0 0.0
        %6098 = vmatprep.subr.mxu0 0.0
        %6099 = vmatpush1.msra.mxu0 0.0
        %6100 = vmatprep.subr.mxu0 0.0
        %6101 = vmatpush1.msra.mxu0 0.0
        %6102 = vmatprep.subr.mxu0 0.0
        %6103 = vmatpush1.msra.mxu0 0.0
        %6104 = vmatprep.subr.mxu0 0.0
        %6105 = vmatpush1.msra.mxu0 0.0
        %6106 = vmatprep.subr.mxu0 0.0
        %6107 = vmatpush1.msra.mxu0 0.0
        %6108 = vmatprep.subr.mxu0 0.0
        %6109 = vmatpush1.msra.mxu0 0.0
        %6110 = vmatprep.subr.mxu0 0.0
        %6111 = vmatpush1.msra.mxu0 0.0
        %6112 = vmatprep.subr.mxu0 0.0
        %6113 = vmatpush1.msra.mxu0 0.0
        %6114 = vmatprep.subr.mxu0 0.0
        %6115 = vmatpush1.msra.mxu0 0.0
        %6116 = vmatprep.subr.mxu0 0.0
        %6117 = vmatpush1.msra.mxu0 0.0
        %6118 = vmatprep.subr.mxu0 0.0
        %6119 = vmatpush1.msra.mxu0 0.0
        %6120 = vmatprep.subr.mxu0 0.0
        %6121 = vmatpush1.msra.mxu0 0.0
        %6122 = vmatprep.subr.mxu0 0.0
        %6123 = vmatpush1.msra.mxu0 0.0
        %6124 = vmatprep.subr.mxu0 0.0
        %6125 = vmatpush1.msra.mxu0 0.0
        %6126 = vmatprep.subr.mxu0 0.0
        %6127 = vmatpush1.msra.mxu0 0.0
        %6128 = vmatprep.subr.mxu0 0.0
        %6129 = vmatpush1.msra.mxu0 0.0
        %6130 = vmatprep.subr.mxu0 0.0
        %6131 = vmatpush1.msra.mxu0 0.0
        %6132 = vmatprep.subr.mxu0 0.0
        %6133 = vmatpush1.msra.mxu0 0.0
        %6134 = vmatprep.subr.mxu0 0.0
        %6135 = vmatpush1.msra.mxu0 0.0
        %6136 = vmatprep.subr.mxu0 0.0
        %6137 = vmatpush1.msra.mxu0 0.0
        %6138 = vmatprep.mubr.f32.mxu0 0.0
        %v6139 = vand.u32 %v5058, 4294901760
        %6140 = vmatmul.mubr.f32.gmra.mrb[0].mxu0 %v6139
        %v6141 = vpop.f32.mrb[0].mxu0
        %v6142 = vadd.f32 %v6062, %v6141
        %v6143 = vpop.f32.mrb[0].mxu0
        %v6144 = vadd.f32 %v6064, %v6143
        %6145 = vdwg.mxu0
        %v6150 = vcombine.low %v5599, %v5601
        %v6151 = vcombine.low %v6142, %v6144
        %v6153 = vunpack.c.l.s4 1966171168
        %v6154 = vunpack.c.0.s8 %v6153
        %v6155 = vlaneseq
        %v6156 = vshrl.u32 %v6155, 7
        %v6157 = vsub.s32 %v6154, %v6156
        %v6158 = vrot.slane %v6150, %v6157
        %v6160 = vunpack.c.l.s4 1966171168
        %v6161 = vunpack.c.0.s8 %v6160
        %v6162 = vlaneseq
        %v6163 = vshrl.u32 %v6162, 7
        %v6164 = vsub.s32 %v6161, %v6163
        %v6165 = vrot.slane %v6151, %v6164
        %v6166 = vcombine.low %v6158, %v6165
        %v6168 = vunpack.c.l.s4 1966171168
        %v6169 = vunpack.c.0.s8 %v6168
        %v6170 = vlaneseq
        %v6171 = vshrl.u32 %v6170, 7
        %v6172 = vsub.s32 %v6169, %v6171
        %v6173 = vrot.slane %v6166, %v6172
        %v6175 = vlaneseq
        %vm6176 = vcmp.ge.s32.totalorder %v6175, 0
        %vm6177 = vcmp.lt.s32.totalorder %v6175, 512
        %vm6178 = vmand %vm6176, %vm6177
        %6179 = vst.msk [vmem:[%s462] sm:$0xf] %vm6178, %v6173
        %s6180 = sand.u32 %s325, 1
        %s6181 = scalar_lea.sflag [#allocation4], %s6180
        %s6182 = sand.u32 %s325, 1
        %s6183 = smul.addr %s6182, 4
        %s6184 = scalar_lea.vmem [#allocation3], %s6183
        // Predicated region
        $region73: #{tpu_custom_call.1} parent=71 // pred_check
          %p6185 = pneg %p335
        $region74: #{tpu_custom_call.1} parent=71 // pred_check_branch
          %6187 = sbr.rel (%p6185) target = $region76
        $region75: #{tpu_custom_call.1} parent=71 // pred_region
          %s6188 = smul.u32 4, %s29
          %s6190 = ssub.s32 64, 64
          %6191 = vsyncadd %s6181, %s6190
          %s6192 = smul.addr %s6188, 16
          %s6193 = scalar_lea.hbm %s13, %s6192
          %s6195 = sshll.u32 %s6184, 4
          %s6196 = int_to_ptr.vmem [resolvable:$true] %s6195
          %6198 = dma.vmem_to_hbm [thread:$0]  %s6196, 64, %s6193, %s6181
        $region76: #{tpu_custom_call.1} parent=71 // pred_fallthru
          _
      $region72: #{tpu_custom_call.1} parent=5 // pred_fallthru
        _
      %p6199 = scmp.le.s32.totalorder 2, %s24
      // Predicated region
      $region77: #{tpu_custom_call.1} parent=5 // pred_check
        %p6200 = pneg %p6199
      $region78: #{tpu_custom_call.1} parent=5 // pred_check_branch
        %6202 = sbr.rel (%p6200) target = $region80
      $region79: #{tpu_custom_call.1} parent=5 // pred_region
        %s6203 = ssub.s32 %s24, 2
        // Predicated region
        $region81: #{tpu_custom_call.1} parent=79 // pred_check
          %p6204 = pneg %p341
        $region82: #{tpu_custom_call.1} parent=79 // pred_check_branch
          %6206 = sbr.rel (%p6204) target = $region84
        $region83: #{tpu_custom_call.1} parent=79 // pred_region
          %s6207 = sand.u32 %s326, 1
          %s6208 = scalar_lea.sflag [#allocation4], %s6207
          %s6209 = sand.u32 %s326, 1
          %s6210 = smul.addr %s6209, 4
          %s6211 = scalar_lea.vmem [#allocation3], %s6210
          %6212 = dma.done %s6208, 64
        $region84: #{tpu_custom_call.1} parent=79 // pred_fallthru
          _
      $region80: #{tpu_custom_call.1} parent=5 // pred_fallthru
        _
    $region6: #{tpu_custom_call.1} parent=1 // loop_footer
      %s28 = sadd.s32 1, %s24
    $region7: #{tpu_custom_call.1} parent=1 // loop_footer_branch
      %23 = sbr.rel target = $region3
    $region8: #{tpu_custom_call.1} parent=1 // loop_exit
      _
    %6213 = vsyncpa [#allocation4], 1
    %s6214 = scalar_lea.sflag [#allocation4], 1
    %6215 = vsyncpa %s6214, 1

</llo_original>
